<compile_context>
chip_gen: v7x
topology: tpu7x:2x2x1
jax: 0.10.0
libtpu: 0.0.40
codegen_flags: <defaults>
</compile_context>

<pallas_src>
import functools

import jax
import jax.numpy as jnp
from jax.experimental import pallas as pl
from jax.experimental.pallas import tpu as pltpu

# Logical (PyTorch) hidden widths and lane-padded (multiple-of-128) widths.
_H1, _H2, _H3 = 720, 360, 128
_H1_PAD, _H2_PAD, _H3_PAD = 768, 384, 128


def _round_up(n, m):
    return (n + m - 1) // m * m


def _cdiv(a, b):
    return (a + b - 1) // b


def mlp_kernel(x_ref,
               w1_ref, b1_ref,
               w2_ref, b2_ref,
               w3_ref, b3_ref,
               w4_ref, b4_ref,
               o_ref):
    """One batch tile of the 4-layer MLP.

    Layer 1 uses f32 operands (K = n_states is tiny, so it is nearly free and
    avoids rounding the raw input); layers 2-4 use bf16 weights/activations on
    the MXU with f32 accumulation.  Bias-add + ReLU stay f32 on the VPU (safe
    on v5e, which has no bf16 VALU).  Output tile stored bf16 (lane-dense).
    """
    h = jnp.dot(x_ref[...], w1_ref[...], preferred_element_type=jnp.float32)
    h = jnp.maximum(h + b1_ref[...], 0.0).astype(jnp.bfloat16)

    h = jnp.dot(h, w2_ref[...], preferred_element_type=jnp.float32)
    h = jnp.maximum(h + b2_ref[...], 0.0).astype(jnp.bfloat16)

    h = jnp.dot(h, w3_ref[...], preferred_element_type=jnp.float32)
    h = jnp.maximum(h + b3_ref[...], 0.0).astype(jnp.bfloat16)

    out = jnp.dot(h, w4_ref[...], preferred_element_type=jnp.float32) + b4_ref[...]
    o_ref[...] = out.astype(o_ref.dtype)


def prepare_params(params):
    """One-time weight prep: zero-pad hidden dims to 128-multiples, cast layers
    2-4 weights to bf16 (layer-1 weights and all biases stay f32).

    Call ONCE at model setup and reuse the result for every forward call --
    keeping this out of the per-call path removes redundant pad/cast HBM
    traffic.  Zero-padding is semantics-preserving: padded units have weight 0
    and bias 0, so relu(0) = 0 and padded rows of the next weight matrix are
    also 0.
    """
    n_states = params["w1"].shape[0]
    n_actions = params["w4"].shape[1]
    na_pad = _round_up(max(n_actions, 128), 128)

    def pad_to(a, shape):
        return jnp.pad(a, [(0, s - d) for d, s in zip(a.shape, shape)])

    w1 = pad_to(params["w1"], (n_states, _H1_PAD)).astype(jnp.float32)
    b1 = pad_to(params["b1"], (1, _H1_PAD)).astype(jnp.float32)
    w2 = pad_to(params["w2"], (_H1_PAD, _H2_PAD)).astype(jnp.bfloat16)
    b2 = pad_to(params["b2"], (1, _H2_PAD)).astype(jnp.float32)
    w3 = pad_to(params["w3"], (_H2_PAD, _H3_PAD)).astype(jnp.bfloat16)
    b3 = pad_to(params["b3"], (1, _H3_PAD)).astype(jnp.float32)
    w4 = pad_to(params["w4"], (_H3_PAD, na_pad)).astype(jnp.bfloat16)
    b4 = pad_to(params["b4"], (1, na_pad)).astype(jnp.float32)
    prepared = (w1, b1, w2, b2, w3, b3, w4, b4)
    return prepared, n_actions


@functools.partial(jax.jit,
                   static_argnames=("n_actions", "block_batch", "core_parallel"))
def net_forward(x, prepared, n_actions, block_batch=None, core_parallel=False):
    """x: (batch, n_states) f32.  prepared: output of prepare_params (called once)."""
    w1, b1, w2, b2, w3, b3, w4, b4 = prepared
    na_pad = w4.shape[1]
    batch, n_states = x.shape

    if block_batch is None:
        # Two batch blocks by default (one per v7x TensorCore), tile rows a
        # multiple of 16 (bf16 sublane packing), capped at 1024 rows so all
        # intermediates + double-buffered I/O stay ~10 MB: under v5e's 16 MiB
        # scoped-VMEM default and far under v7x's 64 MiB physical VMEM.
        tb = max(16, min(1024, _round_up(_cdiv(batch, 2), 16)))
    else:
        tb = block_batch

    batch_pad = _round_up(batch, tb)
    if batch_pad != batch:
        x = jnp.pad(x, ((0, batch_pad - batch), (0, 0)))
    num_blocks = batch_pad // tb

    weight_args = (w1, b1, w2, b2, w3, b3, w4, b4)
    # Full-array blocks with a constant index_map -> fetched once, VMEM-resident
    # across all grid steps.
    weight_specs = [pl.BlockSpec(w.shape, lambda i: (0, 0)) for w in weight_args]

    flops = 2 * batch * (n_states * _H1 + _H1 * _H2 + _H2 * _H3 + _H3 * n_actions)
    bytes_accessed = (sum(int(w.size) * w.dtype.itemsize for w in weight_args)
                      + int(x.size) * x.dtype.itemsize
                      + batch_pad * na_pad * 2)  # bf16 output

    sem = pltpu.CORE_PARALLEL if core_parallel else pltpu.PARALLEL
    # Only raise the scoped-VMEM limit when an unusually large tile is forced.
    vmem_limit = 48 * 1024 * 1024 if tb > 1024 else None

    out_padded = pl.pallas_call(
        mlp_kernel,
        out_shape=jax.ShapeDtypeStruct((batch_pad, na_pad), jnp.bfloat16),
        grid_spec=pltpu.PrefetchScalarGridSpec(
            num_scalar_prefetch=0,
            grid=(num_blocks,),
            in_specs=[pl.BlockSpec((tb, n_states), lambda i: (i, 0))] + weight_specs,
            out_specs=pl.BlockSpec((tb, na_pad), lambda i: (i, 0)),
        ),
        compiler_params=pltpu.CompilerParams(
            dimension_semantics=(sem,),
            vmem_limit_bytes=vmem_limit),
        cost_estimate=pl.CostEstimate(
            flops=flops, transcendentals=0, bytes_accessed=bytes_accessed),
    )(x, *weight_args)

    # Lane-dense bf16 kernel output -> slice padded batch / padded action
    # columns and restore f32 for the consumer.
    return out_padded[:batch, :n_actions].astype(jnp.float32)


def init_params(key, n_states, n_actions):
    """Deterministic init matching the PyTorch module: weights ~ N(0, 0.1),
    bias = 0.1.  Weights generated directly in (in, out) layout (== weight.T)."""
    dims = [(n_states, _H1), (_H1, _H2), (_H2, _H3), (_H3, n_actions)]
    params = {}
    for i, (din, dout) in enumerate(dims, start=1):
        key, wk = jax.random.split(key)
        params[f"w{i}"] = (0.1 * jax.random.normal(wk, (din, dout))).astype(jnp.float32)
        params[f"b{i}"] = jnp.full((1, dout), 0.1, dtype=jnp.float32)
    return params


def net_forward_ref(x, params):
    """Plain-JAX f32 reference for correctness checking."""
    h = jnp.maximum(x @ params["w1"] + params["b1"], 0.0)
    h = jnp.maximum(h @ params["w2"] + params["b2"], 0.0)
    h = jnp.maximum(h @ params["w3"] + params["b3"], 0.0)
    return h @ params["w4"] + params["b4"]


if __name__ == "__main__":
    n_states = 32
    n_actions = 8
    batch = 512  # default tiling -> TB=256, grid=(2,): one block per v7x core

    key = jax.random.PRNGKey(0)
    key, xk = jax.random.split(key)
    x = jax.random.normal(xk, (batch, n_states), dtype=jnp.float32)

    params = init_params(key, n_states, n_actions)

    # One-time weight prep (padding + bf16 cast) hoisted out of the hot path.
    prepared, n_act = prepare_params(params)
    prepared = jax.block_until_ready(prepared)

    out = net_forward(x, prepared, n_act)
    out = jax.block_until_ready(out)

    ref = net_forward_ref(x, params)
    assert out.shape == (batch, n_actions)
    # bf16 matmul operands (layers 2-4) + bf16 output store -> loose tolerance.
    assert jnp.allclose(out, ref, atol=5e-2, rtol=5e-2), (
        float(jnp.max(jnp.abs(out - ref))))

    print("KERNEL_OK")
</pallas_src>

<mosaic_0001>
module attributes {stable_mosaic.version = 11 : i64} {
  func.func @mlp_kernel(%arg0: i32, %arg1: memref<256x32xf32, #tpu.memory_space<vmem>>, %arg2: memref<32x768xf32, #tpu.memory_space<vmem>>, %arg3: memref<1x768xf32, #tpu.memory_space<vmem>>, %arg4: memref<768x384xbf16, #tpu.memory_space<vmem>>, %arg5: memref<1x384xf32, #tpu.memory_space<vmem>>, %arg6: memref<384x128xbf16, #tpu.memory_space<vmem>>, %arg7: memref<1x128xf32, #tpu.memory_space<vmem>>, %arg8: memref<128x128xbf16, #tpu.memory_space<vmem>>, %arg9: memref<1x128xf32, #tpu.memory_space<vmem>>, %arg10: memref<256x128xbf16, #tpu.memory_space<vmem>>) attributes {dimension_semantics = [#tpu.dimension_semantics<parallel>], iteration_bounds = array<i64: 2>, scalar_prefetch = 0 : i64, scratch_operands = 0 : i64, tpu.core_type = #tpu.core_type<tc>, window_params = [{transform_indices = @transform_0, window_bounds = array<i64: 256, 32>}, {pipeline_mode = #tpu.pipeline_mode<synchronous>, transform_indices = @transform_1, window_bounds = array<i64: 32, 768>}, {pipeline_mode = #tpu.pipeline_mode<synchronous>, transform_indices = @transform_2, window_bounds = array<i64: 1, 768>}, {pipeline_mode = #tpu.pipeline_mode<synchronous>, transform_indices = @transform_3, window_bounds = array<i64: 768, 384>}, {pipeline_mode = #tpu.pipeline_mode<synchronous>, transform_indices = @transform_4, window_bounds = array<i64: 1, 384>}, {pipeline_mode = #tpu.pipeline_mode<synchronous>, transform_indices = @transform_5, window_bounds = array<i64: 384, 128>}, {pipeline_mode = #tpu.pipeline_mode<synchronous>, transform_indices = @transform_6, window_bounds = array<i64: 1, 128>}, {pipeline_mode = #tpu.pipeline_mode<synchronous>, transform_indices = @transform_7, window_bounds = array<i64: 128, 128>}, {pipeline_mode = #tpu.pipeline_mode<synchronous>, transform_indices = @transform_8, window_bounds = array<i64: 1, 128>}, {transform_indices = @transform_9, window_bounds = array<i64: 256, 128>}]} {
    %c0 = arith.constant 0 : index
    %c0_0 = arith.constant 0 : index
    %0 = vector.load %arg1[%c0, %c0_0] : memref<256x32xf32, #tpu.memory_space<vmem>>, vector<256x32xf32>
    %c0_1 = arith.constant 0 : index
    %c0_2 = arith.constant 0 : index
    %1 = vector.load %arg2[%c0_1, %c0_2] : memref<32x768xf32, #tpu.memory_space<vmem>>, vector<32x768xf32>
    %cst = arith.constant dense<0.000000e+00> : vector<256x768xf32>
    %2 = tpu.matmul %0, %1, %cst {dimension_numbers = #tpu.dot_dimension_numbers<[1], [0], [0], [1], [0, 0, 1, 1], [], []>} : vector<256x32xf32>, vector<32x768xf32>, vector<256x768xf32> -> vector<256x768xf32>
    %c0_3 = arith.constant 0 : index
    %c0_4 = arith.constant 0 : index
    %3 = vector.load %arg3[%c0_3, %c0_4] : memref<1x768xf32, #tpu.memory_space<vmem>>, vector<1x768xf32>
    %4 = vector.broadcast %3 : vector<1x768xf32> to vector<256x768xf32>
    %5 = arith.addf %2, %4 : vector<256x768xf32>
    %cst_5 = arith.constant 0.000000e+00 : f32
    %6 = vector.broadcast %cst_5 : f32 to vector<256x768xf32>
    %7 = arith.maximumf %5, %6 : vector<256x768xf32>
    %8 = arith.truncf %7 : vector<256x768xf32> to vector<256x768xbf16>
    %c0_6 = arith.constant 0 : index
    %c0_7 = arith.constant 0 : index
    %9 = vector.load %arg4[%c0_6, %c0_7] : memref<768x384xbf16, #tpu.memory_space<vmem>>, vector<768x384xbf16>
    %cst_8 = arith.constant dense<0.000000e+00> : vector<256x384xf32>
    %10 = tpu.matmul %8, %9, %cst_8 {dimension_numbers = #tpu.dot_dimension_numbers<[1], [0], [0], [1], [0, 0, 1, 1], [], []>} : vector<256x768xbf16>, vector<768x384xbf16>, vector<256x384xf32> -> vector<256x384xf32>
    %c0_9 = arith.constant 0 : index
    %c0_10 = arith.constant 0 : index
    %11 = vector.load %arg5[%c0_9, %c0_10] : memref<1x384xf32, #tpu.memory_space<vmem>>, vector<1x384xf32>
    %12 = vector.broadcast %11 : vector<1x384xf32> to vector<256x384xf32>
    %13 = arith.addf %10, %12 : vector<256x384xf32>
    %cst_11 = arith.constant 0.000000e+00 : f32
    %14 = vector.broadcast %cst_11 : f32 to vector<256x384xf32>
    %15 = arith.maximumf %13, %14 : vector<256x384xf32>
    %16 = arith.truncf %15 : vector<256x384xf32> to vector<256x384xbf16>
    %c0_12 = arith.constant 0 : index
    %c0_13 = arith.constant 0 : index
    %17 = vector.load %arg6[%c0_12, %c0_13] : memref<384x128xbf16, #tpu.memory_space<vmem>>, vector<384x128xbf16>
    %cst_14 = arith.constant dense<0.000000e+00> : vector<256x128xf32>
    %18 = tpu.matmul %16, %17, %cst_14 {dimension_numbers = #tpu.dot_dimension_numbers<[1], [0], [0], [1], [0, 0, 1, 1], [], []>} : vector<256x384xbf16>, vector<384x128xbf16>, vector<256x128xf32> -> vector<256x128xf32>
    %c0_15 = arith.constant 0 : index
    %c0_16 = arith.constant 0 : index
    %19 = vector.load %arg7[%c0_15, %c0_16] : memref<1x128xf32, #tpu.memory_space<vmem>>, vector<1x128xf32>
    %20 = vector.broadcast %19 : vector<1x128xf32> to vector<256x128xf32>
    %21 = arith.addf %18, %20 : vector<256x128xf32>
    %cst_17 = arith.constant 0.000000e+00 : f32
    %22 = vector.broadcast %cst_17 : f32 to vector<256x128xf32>
    %23 = arith.maximumf %21, %22 : vector<256x128xf32>
    %24 = arith.truncf %23 : vector<256x128xf32> to vector<256x128xbf16>
    %c0_18 = arith.constant 0 : index
    %c0_19 = arith.constant 0 : index
    %25 = vector.load %arg8[%c0_18, %c0_19] : memref<128x128xbf16, #tpu.memory_space<vmem>>, vector<128x128xbf16>
    %cst_20 = arith.constant dense<0.000000e+00> : vector<256x128xf32>
    %26 = tpu.matmul %24, %25, %cst_20 {dimension_numbers = #tpu.dot_dimension_numbers<[1], [0], [0], [1], [0, 0, 1, 1], [], []>} : vector<256x128xbf16>, vector<128x128xbf16>, vector<256x128xf32> -> vector<256x128xf32>
    %c0_21 = arith.constant 0 : index
    %c0_22 = arith.constant 0 : index
    %27 = vector.load %arg9[%c0_21, %c0_22] : memref<1x128xf32, #tpu.memory_space<vmem>>, vector<1x128xf32>
    %28 = vector.broadcast %27 : vector<1x128xf32> to vector<256x128xf32>
    %29 = arith.addf %26, %28 : vector<256x128xf32>
    %30 = arith.truncf %29 : vector<256x128xf32> to vector<256x128xbf16>
    %c0_23 = arith.constant 0 : index
    %c0_24 = arith.constant 0 : index
    %31 = vector.load %arg10[%c0_23, %c0_24] : memref<256x128xbf16, #tpu.memory_space<vmem>>, vector<256x128xbf16>
    tpu.vector_store %arg10[%c0_23, %c0_24], %30 {strides = array<i32>} : memref<256x128xbf16, #tpu.memory_space<vmem>>, vector<256x128xbf16>,
    return
  }
  func.func @transform_0(%arg0: i32) -> (i32, i32) {
    %c0_i32 = arith.constant 0 : i32
    %c0_i32_0 = arith.constant 0 : i32
    return %arg0, %c0_i32 : i32, i32
  }
  func.func @transform_1(%arg0: i32) -> (i32, i32) {
    %c0_i32 = arith.constant 0 : i32
    %c0_i32_0 = arith.constant 0 : i32
    %c0_i32_1 = arith.constant 0 : i32
    return %c0_i32, %c0_i32_0 : i32, i32
  }
  func.func @transform_2(%arg0: i32) -> (i32, i32) {
    %c0_i32 = arith.constant 0 : i32
    %c0_i32_0 = arith.constant 0 : i32
    %c0_i32_1 = arith.constant 0 : i32
    return %c0_i32, %c0_i32_0 : i32, i32
  }
  func.func @transform_3(%arg0: i32) -> (i32, i32) {
    %c0_i32 = arith.constant 0 : i32
    %c0_i32_0 = arith.constant 0 : i32
    %c0_i32_1 = arith.constant 0 : i32
    return %c0_i32, %c0_i32_0 : i32, i32
  }
  func.func @transform_4(%arg0: i32) -> (i32, i32) {
    %c0_i32 = arith.constant 0 : i32
    %c0_i32_0 = arith.constant 0 : i32
    %c0_i32_1 = arith.constant 0 : i32
    return %c0_i32, %c0_i32_0 : i32, i32
  }
  func.func @transform_5(%arg0: i32) -> (i32, i32) {
    %c0_i32 = arith.constant 0 : i32
    %c0_i32_0 = arith.constant 0 : i32
    %c0_i32_1 = arith.constant 0 : i32
    return %c0_i32, %c0_i32_0 : i32, i32
  }
  func.func @transform_6(%arg0: i32) -> (i32, i32) {
    %c0_i32 = arith.constant 0 : i32
    %c0_i32_0 = arith.constant 0 : i32
    %c0_i32_1 = arith.constant 0 : i32
    return %c0_i32, %c0_i32_0 : i32, i32
  }
  func.func @transform_7(%arg0: i32) -> (i32, i32) {
    %c0_i32 = arith.constant 0 : i32
    %c0_i32_0 = arith.constant 0 : i32
    %c0_i32_1 = arith.constant 0 : i32
    return %c0_i32, %c0_i32_0 : i32, i32
  }
  func.func @transform_8(%arg0: i32) -> (i32, i32) {
    %c0_i32 = arith.constant 0 : i32
    %c0_i32_0 = arith.constant 0 : i32
    %c0_i32_1 = arith.constant 0 : i32
    return %c0_i32, %c0_i32_0 : i32, i32
  }
  func.func @transform_9(%arg0: i32) -> (i32, i32) {
    %c0_i32 = arith.constant 0 : i32
    %c0_i32_0 = arith.constant 0 : i32
    return %arg0, %c0_i32 : i32, i32
  }
}

</mosaic_0001>

<llo_original>
// kernel: net_forward.1
$region0: #{net_forward.1}
  #allocation0 [shape = 'u32[]', space=smem, size = 0x4, offset = 0x4, fixed_abs, tag = 'smem constant byte address 0x4 - core index']
  #allocation1 [shape = 'u32[144,128]{1,0:T(1,128)}', space=vmem, size = 0x12000, scoped, tag = 'internal scratch']
  %s0 = inlined_call_operand.vmem [shape: f32[512,32], index: 0, kind: input, shape index: {}]
  %s1 = inlined_call_operand.vmem [shape: f32[32,768], index: 1, kind: input, shape index: {}]
  %s2 = inlined_call_operand.vmem [shape: f32[1,768], index: 2, kind: input, shape index: {}]
  %s3 = inlined_call_operand.hbm [shape: bf16[768,384], index: 3, kind: input, shape index: {}]
  %s4 = inlined_call_operand.vmem [shape: f32[1,384], index: 4, kind: input, shape index: {}]
  %s5 = inlined_call_operand.vmem [shape: bf16[384,128], index: 5, kind: input, shape index: {}]
  %s6 = inlined_call_operand.vmem [shape: f32[1,128], index: 6, kind: input, shape index: {}]
  %s7 = inlined_call_operand.vmem [shape: bf16[128,128], index: 7, kind: input, shape index: {}]
  %s8 = inlined_call_operand.vmem [shape: f32[1,128], index: 8, kind: input, shape index: {}]
  %s9 = inlined_call_operand.vmem [shape: bf16[512,128], index: 9, kind: output, shape index: {}]
  %s10 = sld [smem:[#allocation0]]
  $region73: #{net_forward.1} parent=0
    _
  %s12 = ssub.s32 1, %s10
  %s13 = scalar_select 0, %s12, %s10
  $region1: #{net_forward.1} parent=0
    #allocation2 [shape = 'u8[589824]{0}', space=vmem, size = 0x90000, scoped, tag = 'input window, operand 3, single buffered']
    #allocation3 [shape = 's32[2]{0}', space=sflag, size = 0x8, scoped, tag = 'scoped memory for net_forward.1']
    %14 = vsyncpa [#allocation3], 0
    loop: start=0, step=1, limit=4
    $region2: #{net_forward.1} parent=1 // loop_pre_header
      _
    $region3: #{net_forward.1} parent=1 // loop_header
      %s16 = sphi 0, %s20
      %p17 = scmp.ge.s32.totalorder %s16, 4
      %s26 = sphi 0, %s28
      %s29 = sphi 0, %s26
      %s30 = sphi 0, %s29
      %s46 = sphi 0, %s30
      %s50 = sphi 0, %s50
      %s52 = sphi 0, %s50
      %s53 = sphi 0, %s52
      %s67 = sphi 0, %s53
      %s71 = sphi 0, %s71
      %s73 = sphi 0, %s71
      %s74 = sphi 0, %s73
      %s88 = sphi 0, %s74
      %s92 = sphi 0, %s92
      %s94 = sphi 0, %s92
      %s95 = sphi 0, %s94
      %s109 = sphi 0, %s95
      %s113 = sphi 0, %s113
      %s115 = sphi 0, %s113
      %s116 = sphi 0, %s115
      %s130 = sphi 0, %s116
      %s134 = sphi 0, %s134
      %s136 = sphi 0, %s134
      %s137 = sphi 0, %s136
      %s151 = sphi 0, %s137
      %s155 = sphi 0, %s155
      %s157 = sphi 0, %s155
      %s158 = sphi 0, %s157
      %s172 = sphi 0, %s158
      %s176 = sphi 0, %s176
      %s178 = sphi 0, %s176
      %s179 = sphi 0, %s178
      %s193 = sphi 0, %s179
      %s197 = sphi 0, %s197
      %s199 = sphi 0, %s197
      %s200 = sphi 0, %s199
      %s214 = sphi 0, %s200
      %s220 = sphi 0, %s222
      %s223 = sphi 0, %s220
      %s224 = sphi 0, %s223
      %s240 = sphi 0, %s224
    $region4: #{net_forward.1} parent=1 // loop_header_branch
      %19 = sbr.rel (%p17) target = $region8
    $region5: #{net_forward.1} parent=1 // loop_body
      %s21 = ssub.s32 %s16, 1
      %s22 = ssub.s32 %s16, 2
      %s23 = sadd.s32 %s16, 1
      %s24 = ssub.s32 %s16, %s23
      %p25 = scmp.eq.s32.totalorder %s24, 0
      %s27 = sadd.s32 %s26, 1
      %s28 = scalar_select %p25, %s26, %s27
      %p31 = pneg %p25
      %p32 = scmp.eq.s32.totalorder %s16, 1
      %p33 = por %p31, %p32
      %p34 = scmp.ne.s32.totalorder %s26, %s29
      %p35 = scmp.eq.s32.totalorder %s16, 0
      %p36 = por %p34, %p35
      %p37 = scmp.ne.s32.totalorder %s26, %s29
      %p38 = scmp.eq.s32.totalorder %s21, 1
      %p39 = por %p37, %p38
      %p40 = scmp.ne.s32.totalorder %s29, %s30
      %p41 = scmp.eq.s32.totalorder %s21, 0
      %p42 = por %p40, %p41
      %p43 = scmp.ne.s32.totalorder %s29, %s30
      %p44 = scmp.eq.s32.totalorder %s22, 1
      %p45 = por %p43, %p44
      %p47 = scmp.ne.s32.totalorder %s30, %s46
      %p48 = scmp.eq.s32.totalorder %s22, 0
      %p49 = por %p47, %p48
      %s51 = sadd.s32 %s50, 1
      %p54 = scmp.eq.s32.totalorder %s16, 1
      %p55 = scmp.ne.s32.totalorder %s50, %s52
      %p56 = scmp.eq.s32.totalorder %s16, 0
      %p57 = por %p55, %p56
      %p58 = scmp.ne.s32.totalorder %s50, %s52
      %p59 = scmp.eq.s32.totalorder %s21, 1
      %p60 = por %p58, %p59
      %p61 = scmp.ne.s32.totalorder %s52, %s53
      %p62 = scmp.eq.s32.totalorder %s21, 0
      %p63 = por %p61, %p62
      %p64 = scmp.ne.s32.totalorder %s52, %s53
      %p65 = scmp.eq.s32.totalorder %s22, 1
      %p66 = por %p64, %p65
      %p68 = scmp.ne.s32.totalorder %s53, %s67
      %p69 = scmp.eq.s32.totalorder %s22, 0
      %p70 = por %p68, %p69
      %s72 = sadd.s32 %s71, 1
      %p75 = scmp.eq.s32.totalorder %s16, 1
      %p76 = scmp.ne.s32.totalorder %s71, %s73
      %p77 = scmp.eq.s32.totalorder %s16, 0
      %p78 = por %p76, %p77
      %p79 = scmp.ne.s32.totalorder %s71, %s73
      %p80 = scmp.eq.s32.totalorder %s21, 1
      %p81 = por %p79, %p80
      %p82 = scmp.ne.s32.totalorder %s73, %s74
      %p83 = scmp.eq.s32.totalorder %s21, 0
      %p84 = por %p82, %p83
      %p85 = scmp.ne.s32.totalorder %s73, %s74
      %p86 = scmp.eq.s32.totalorder %s22, 1
      %p87 = por %p85, %p86
      %p89 = scmp.ne.s32.totalorder %s74, %s88
      %p90 = scmp.eq.s32.totalorder %s22, 0
      %p91 = por %p89, %p90
      %s93 = sadd.s32 %s92, 1
      %p96 = scmp.eq.s32.totalorder %s16, 1
      %p97 = scmp.ne.s32.totalorder %s92, %s94
      %p98 = scmp.eq.s32.totalorder %s16, 0
      %p99 = por %p97, %p98
      %p100 = scmp.ne.s32.totalorder %s92, %s94
      %p101 = scmp.eq.s32.totalorder %s21, 1
      %p102 = por %p100, %p101
      %p103 = scmp.ne.s32.totalorder %s94, %s95
      %p104 = scmp.eq.s32.totalorder %s21, 0
      %p105 = por %p103, %p104
      %p106 = scmp.ne.s32.totalorder %s94, %s95
      %p107 = scmp.eq.s32.totalorder %s22, 1
      %p108 = por %p106, %p107
      %p110 = scmp.ne.s32.totalorder %s95, %s109
      %p111 = scmp.eq.s32.totalorder %s22, 0
      %p112 = por %p110, %p111
      %s114 = sadd.s32 %s113, 1
      %p117 = scmp.eq.s32.totalorder %s16, 1
      %p118 = scmp.ne.s32.totalorder %s113, %s115
      %p119 = scmp.eq.s32.totalorder %s16, 0
      %p120 = por %p118, %p119
      %p121 = scmp.ne.s32.totalorder %s113, %s115
      %p122 = scmp.eq.s32.totalorder %s21, 1
      %p123 = por %p121, %p122
      %p124 = scmp.ne.s32.totalorder %s115, %s116
      %p125 = scmp.eq.s32.totalorder %s21, 0
      %p126 = por %p124, %p125
      %p127 = scmp.ne.s32.totalorder %s115, %s116
      %p128 = scmp.eq.s32.totalorder %s22, 1
      %p129 = por %p127, %p128
      %p131 = scmp.ne.s32.totalorder %s116, %s130
      %p132 = scmp.eq.s32.totalorder %s22, 0
      %p133 = por %p131, %p132
      %s135 = sadd.s32 %s134, 1
      %p138 = scmp.eq.s32.totalorder %s16, 1
      %p139 = scmp.ne.s32.totalorder %s134, %s136
      %p140 = scmp.eq.s32.totalorder %s16, 0
      %p141 = por %p139, %p140
      %p142 = scmp.ne.s32.totalorder %s134, %s136
      %p143 = scmp.eq.s32.totalorder %s21, 1
      %p144 = por %p142, %p143
      %p145 = scmp.ne.s32.totalorder %s136, %s137
      %p146 = scmp.eq.s32.totalorder %s21, 0
      %p147 = por %p145, %p146
      %p148 = scmp.ne.s32.totalorder %s136, %s137
      %p149 = scmp.eq.s32.totalorder %s22, 1
      %p150 = por %p148, %p149
      %p152 = scmp.ne.s32.totalorder %s137, %s151
      %p153 = scmp.eq.s32.totalorder %s22, 0
      %p154 = por %p152, %p153
      %s156 = sadd.s32 %s155, 1
      %p159 = scmp.eq.s32.totalorder %s16, 1
      %p160 = scmp.ne.s32.totalorder %s155, %s157
      %p161 = scmp.eq.s32.totalorder %s16, 0
      %p162 = por %p160, %p161
      %p163 = scmp.ne.s32.totalorder %s155, %s157
      %p164 = scmp.eq.s32.totalorder %s21, 1
      %p165 = por %p163, %p164
      %p166 = scmp.ne.s32.totalorder %s157, %s158
      %p167 = scmp.eq.s32.totalorder %s21, 0
      %p168 = por %p166, %p167
      %p169 = scmp.ne.s32.totalorder %s157, %s158
      %p170 = scmp.eq.s32.totalorder %s22, 1
      %p171 = por %p169, %p170
      %p173 = scmp.ne.s32.totalorder %s158, %s172
      %p174 = scmp.eq.s32.totalorder %s22, 0
      %p175 = por %p173, %p174
      %s177 = sadd.s32 %s176, 1
      %p180 = scmp.eq.s32.totalorder %s16, 1
      %p181 = scmp.ne.s32.totalorder %s176, %s178
      %p182 = scmp.eq.s32.totalorder %s16, 0
      %p183 = por %p181, %p182
      %p184 = scmp.ne.s32.totalorder %s176, %s178
      %p185 = scmp.eq.s32.totalorder %s21, 1
      %p186 = por %p184, %p185
      %p187 = scmp.ne.s32.totalorder %s178, %s179
      %p188 = scmp.eq.s32.totalorder %s21, 0
      %p189 = por %p187, %p188
      %p190 = scmp.ne.s32.totalorder %s178, %s179
      %p191 = scmp.eq.s32.totalorder %s22, 1
      %p192 = por %p190, %p191
      %p194 = scmp.ne.s32.totalorder %s179, %s193
      %p195 = scmp.eq.s32.totalorder %s22, 0
      %p196 = por %p194, %p195
      %s198 = sadd.s32 %s197, 1
      %p201 = scmp.eq.s32.totalorder %s16, 1
      %p202 = scmp.ne.s32.totalorder %s197, %s199
      %p203 = scmp.eq.s32.totalorder %s16, 0
      %p204 = por %p202, %p203
      %p205 = scmp.ne.s32.totalorder %s197, %s199
      %p206 = scmp.eq.s32.totalorder %s21, 1
      %p207 = por %p205, %p206
      %p208 = scmp.ne.s32.totalorder %s199, %s200
      %p209 = scmp.eq.s32.totalorder %s21, 0
      %p210 = por %p208, %p209
      %p211 = scmp.ne.s32.totalorder %s199, %s200
      %p212 = scmp.eq.s32.totalorder %s22, 1
      %p213 = por %p211, %p212
      %p215 = scmp.ne.s32.totalorder %s200, %s214
      %p216 = scmp.eq.s32.totalorder %s22, 0
      %p217 = por %p215, %p216
      %s218 = ssub.s32 %s16, %s23
      %p219 = scmp.eq.s32.totalorder %s218, 0
      %s221 = sadd.s32 %s220, 1
      %s222 = scalar_select %p219, %s220, %s221
      %p225 = pneg %p219
      %p226 = scmp.eq.s32.totalorder %s16, 1
      %p227 = por %p225, %p226
      %p228 = scmp.ne.s32.totalorder %s220, %s223
      %p229 = scmp.eq.s32.totalorder %s16, 0
      %p230 = por %p228, %p229
      %p231 = scmp.ne.s32.totalorder %s220, %s223
      %p232 = scmp.eq.s32.totalorder %s21, 1
      %p233 = por %p231, %p232
      %p234 = scmp.ne.s32.totalorder %s223, %s224
      %p235 = scmp.eq.s32.totalorder %s21, 0
      %p236 = por %p234, %p235
      %p237 = scmp.ne.s32.totalorder %s223, %s224
      %p238 = scmp.eq.s32.totalorder %s22, 1
      %p239 = por %p237, %p238
      %p241 = scmp.ne.s32.totalorder %s224, %s240
      %p242 = scmp.eq.s32.totalorder %s22, 0
      %p243 = por %p241, %p242
      %p244 = scmp.le.s32.totalorder 1, %s16
      %p245 = scmp.lt.s32.totalorder %s16, 3
      %p246 = pnand %p244, %p245
      %p247 = pneg %p246
      // Predicated region
      $region9: #{net_forward.1} parent=5 // pred_check
        _
      $region10: #{net_forward.1} parent=5 // pred_check_branch
        %249 = sbr.rel (%p246) target = $region12
      $region11: #{net_forward.1} parent=5 // pred_region
        %s250 = ssub.s32 %s16, 1
        // Predicated region
        $region13: #{net_forward.1} parent=11 // pred_check
          %p251 = pneg %p63
        $region14: #{net_forward.1} parent=11 // pred_check_branch
          %253 = sbr.rel (%p251) target = $region16
        $region15: #{net_forward.1} parent=11 // pred_region
          _
        $region16: #{net_forward.1} parent=11 // pred_fallthru
          _
        // Predicated region
        $region17: #{net_forward.1} parent=11 // pred_check
          %p254 = pneg %p84
        $region18: #{net_forward.1} parent=11 // pred_check_branch
          %256 = sbr.rel (%p254) target = $region20
        $region19: #{net_forward.1} parent=11 // pred_region
          _
        $region20: #{net_forward.1} parent=11 // pred_fallthru
          _
        // Predicated region
        $region21: #{net_forward.1} parent=11 // pred_check
          %p257 = pneg %p105
        $region22: #{net_forward.1} parent=11 // pred_check_branch
          %259 = sbr.rel (%p257) target = $region24
        $region23: #{net_forward.1} parent=11 // pred_region
          %s261 = ssub.s32 18432, 18432
          %262 = vsyncadd [#allocation3], %s261
          %s263 = sshll.u32 [#allocation2], 4
          %s264 = int_to_ptr.vmem [resolvable:$true] %s263
          %269 = dma.hbm_to_vmem [thread:$0]  %s3, 18432, %s264, [#allocation3], 192, 192, 12
        $region24: #{net_forward.1} parent=11 // pred_fallthru
          _
        // Predicated region
        $region25: #{net_forward.1} parent=11 // pred_check
          %p270 = pneg %p126
        $region26: #{net_forward.1} parent=11 // pred_check_branch
          %272 = sbr.rel (%p270) target = $region28
        $region27: #{net_forward.1} parent=11 // pred_region
          _
        $region28: #{net_forward.1} parent=11 // pred_fallthru
          _
        // Predicated region
        $region29: #{net_forward.1} parent=11 // pred_check
          %p273 = pneg %p147
        $region30: #{net_forward.1} parent=11 // pred_check_branch
          %275 = sbr.rel (%p273) target = $region32
        $region31: #{net_forward.1} parent=11 // pred_region
          _
        $region32: #{net_forward.1} parent=11 // pred_fallthru
          _
        // Predicated region
        $region33: #{net_forward.1} parent=11 // pred_check
          %p276 = pneg %p168
        $region34: #{net_forward.1} parent=11 // pred_check_branch
          %278 = sbr.rel (%p276) target = $region36
        $region35: #{net_forward.1} parent=11 // pred_region
          _
        $region36: #{net_forward.1} parent=11 // pred_fallthru
          _
        // Predicated region
        $region37: #{net_forward.1} parent=11 // pred_check
          %p279 = pneg %p189
        $region38: #{net_forward.1} parent=11 // pred_check_branch
          %281 = sbr.rel (%p279) target = $region40
        $region39: #{net_forward.1} parent=11 // pred_region
          _
        $region40: #{net_forward.1} parent=11 // pred_fallthru
          _
        // Predicated region
        $region41: #{net_forward.1} parent=11 // pred_check
          %p282 = pneg %p210
        $region42: #{net_forward.1} parent=11 // pred_check_branch
          %284 = sbr.rel (%p282) target = $region44
        $region43: #{net_forward.1} parent=11 // pred_region
          _
        $region44: #{net_forward.1} parent=11 // pred_fallthru
          _
      $region12: #{net_forward.1} parent=5 // pred_fallthru
        _
      %p285 = scmp.lt.s32.totalorder %s16, 2
      // Predicated region
      $region45: #{net_forward.1} parent=5 // pred_check
        %p286 = pneg %p285
      $region46: #{net_forward.1} parent=5 // pred_check_branch
        %288 = sbr.rel (%p286) target = $region48
      $region47: #{net_forward.1} parent=5 // pred_region
        // Predicated region
        $region49: #{net_forward.1} parent=47 // pred_check
          %p289 = pneg %p36
        $region50: #{net_forward.1} parent=47 // pred_check_branch
          %291 = sbr.rel (%p289) target = $region52
        $region51: #{net_forward.1} parent=47 // pred_region
          %s292 = smul.u32 32, %s16
          %p293 = scmp.lt.s32.totalorder %s292, 63
          %s294 = scalar_select %p293, %s292, 63
          %s295 = smul.addr %s294, 8
          %s296 = scalar_lea.vmem %s0, %s295
          %s297 = smul.u32 32, %s16
        $region52: #{net_forward.1} parent=47 // pred_fallthru
          _
      $region48: #{net_forward.1} parent=5 // pred_fallthru
        _
      %p298 = scmp.le.s32.totalorder 1, %s16
      %p299 = scmp.lt.s32.totalorder %s16, 3
      %p300 = pnand %p298, %p299
      %p301 = pneg %p300
      // Predicated region
      $region53: #{net_forward.1} parent=5 // pred_check
        _
      $region54: #{net_forward.1} parent=5 // pred_check_branch
        %303 = sbr.rel (%p300) target = $region56
      $region55: #{net_forward.1} parent=5 // pred_region
        %s304 = ssub.s32 %s16, 1
        // Predicated region
        $region57: #{net_forward.1} parent=55 // pred_check
          %p305 = pneg %p105
        $region58: #{net_forward.1} parent=55 // pred_check_branch
          %307 = sbr.rel (%p305) target = $region60
        $region59: #{net_forward.1} parent=55 // pred_region
          %308 = dma.done [#allocation3], 18432
        $region60: #{net_forward.1} parent=55 // pred_fallthru
          _
        %s309 = smul.u32 32, %s21
        %p310 = scmp.lt.s32.totalorder %s309, 63
        %s311 = scalar_select %p310, %s309, 63
        %s312 = smul.addr %s311, 8
        %s313 = scalar_lea.vmem %s0, %s312
        %p314 = pneg %p42
        %p315 = pneg %p39
        %p316 = pneg %p63
        %p317 = pneg %p60
        %p318 = pneg %p84
        %p319 = pneg %p81
        %p320 = pneg %p105
        %p321 = pneg %p102
        %p322 = pneg %p126
        %p323 = pneg %p123
        %p324 = pneg %p147
        %p325 = pneg %p144
        %p326 = pneg %p168
        %p327 = pneg %p165
        %p328 = pneg %p189
        %p329 = pneg %p186
        %p330 = pneg %p210
        %p331 = pneg %p207
        %p332 = pneg %p236
        %p333 = pneg %p233
        %s334 = smul.u32 32, %s21
        %p335 = scmp.lt.s32.totalorder %s334, 63
        %s336 = scalar_select %p335, %s334, 63
        %s337 = smul.addr %s336, 4
        %s338 = scalar_lea.vmem %s9, %s337
        %s339 = smul.u32 32, %s21
        %p340 = scmp.lt.s32.totalorder %s339, 63
        %s341 = scalar_select %p340, %s339, 63
        %s342 = smul.addr %s341, 8
        %s343 = scalar_lea.vmem %s0, %s342
        %s344 = smul.u32 32, %s21
        %s345 = smul.u32 32, %s21
        %p346 = scmp.lt.s32.totalorder %s345, 63
        %s347 = scalar_select %p346, %s345, 63
        %s348 = smul.addr %s347, 4
        %s349 = scalar_lea.vmem %s9, %s348
        %s350 = smul.u32 32, %s21
        %v352 = vld [vmem:[%s343] sm:$0xff]
        %v353 = vld [vmem:[%s343 + $0x8] sm:$0xff]
        %v354 = vld [vmem:[%s343 + $0x10] sm:$0xff]
        %v355 = vld [vmem:[%s343 + $0x18] sm:$0xff]
        %v356 = vld [vmem:[%s343 + $0x20] sm:$0xff]
        %v357 = vld [vmem:[%s343 + $0x28] sm:$0xff]
        %v358 = vld [vmem:[%s343 + $0x30] sm:$0xff]
        %v359 = vld [vmem:[%s343 + $0x38] sm:$0xff]
        %v360 = vld [vmem:[%s343 + $0x40] sm:$0xff]
        %v361 = vld [vmem:[%s343 + $0x48] sm:$0xff]
        %v362 = vld [vmem:[%s343 + $0x50] sm:$0xff]
        %v363 = vld [vmem:[%s343 + $0x58] sm:$0xff]
        %v364 = vld [vmem:[%s343 + $0x60] sm:$0xff]
        %v365 = vld [vmem:[%s343 + $0x68] sm:$0xff]
        %v366 = vld [vmem:[%s343 + $0x70] sm:$0xff]
        %v367 = vld [vmem:[%s343 + $0x78] sm:$0xff]
        %v368 = vld [vmem:[%s343 + $0x80] sm:$0xff]
        %v369 = vld [vmem:[%s343 + $0x88] sm:$0xff]
        %v370 = vld [vmem:[%s343 + $0x90] sm:$0xff]
        %v371 = vld [vmem:[%s343 + $0x98] sm:$0xff]
        %v372 = vld [vmem:[%s343 + $0xa0] sm:$0xff]
        %v373 = vld [vmem:[%s343 + $0xa8] sm:$0xff]
        %v374 = vld [vmem:[%s343 + $0xb0] sm:$0xff]
        %v375 = vld [vmem:[%s343 + $0xb8] sm:$0xff]
        %v376 = vld [vmem:[%s343 + $0xc0] sm:$0xff]
        %v377 = vld [vmem:[%s343 + $0xc8] sm:$0xff]
        %v378 = vld [vmem:[%s343 + $0xd0] sm:$0xff]
        %v379 = vld [vmem:[%s343 + $0xd8] sm:$0xff]
        %v380 = vld [vmem:[%s343 + $0xe0] sm:$0xff]
        %v381 = vld [vmem:[%s343 + $0xe8] sm:$0xff]
        %v382 = vld [vmem:[%s343 + $0xf0] sm:$0xff]
        %v383 = vld [vmem:[%s343 + $0xf8] sm:$0xff]
        %v384 = vld [vmem:[%s1] sm:$0xff]
        %v385 = vld [vmem:[%s1 + $0x8] sm:$0xff]
        %v386 = vld [vmem:[%s1 + $0x10] sm:$0xff]
        %v387 = vld [vmem:[%s1 + $0x18] sm:$0xff]
        %v388 = vld [vmem:[%s1 + $0x20] sm:$0xff]
        %v389 = vld [vmem:[%s1 + $0x28] sm:$0xff]
        %v390 = vld [vmem:[%s1 + $0x30] sm:$0xff]
        %v391 = vld [vmem:[%s1 + $0x38] sm:$0xff]
        %v392 = vld [vmem:[%s1 + $0x40] sm:$0xff]
        %v393 = vld [vmem:[%s1 + $0x48] sm:$0xff]
        %v394 = vld [vmem:[%s1 + $0x50] sm:$0xff]
        %v395 = vld [vmem:[%s1 + $0x58] sm:$0xff]
        %v396 = vld [vmem:[%s1 + $0x60] sm:$0xff]
        %v397 = vld [vmem:[%s1 + $0x68] sm:$0xff]
        %v398 = vld [vmem:[%s1 + $0x70] sm:$0xff]
        %v399 = vld [vmem:[%s1 + $0x78] sm:$0xff]
        %v400 = vld [vmem:[%s1 + $0x80] sm:$0xff]
        %v401 = vld [vmem:[%s1 + $0x88] sm:$0xff]
        %v402 = vld [vmem:[%s1 + $0x90] sm:$0xff]
        %v403 = vld [vmem:[%s1 + $0x98] sm:$0xff]
        %v404 = vld [vmem:[%s1 + $0xa0] sm:$0xff]
        %v405 = vld [vmem:[%s1 + $0xa8] sm:$0xff]
        %v406 = vld [vmem:[%s1 + $0xb0] sm:$0xff]
        %v407 = vld [vmem:[%s1 + $0xb8] sm:$0xff]
        %v408 = vld [vmem:[%s2] sm:$0x3f]
        %v410 = vlaneseq
        %v411 = vshrl.u32 %v410, 7
        %v412 = vsub.s32 0, %v411
        %v413 = vrot.slane %v408, %v412
        %v414 = vlaneseq
        %v415 = vshrl.u32 %v414, 7
        %v416 = vsub.s32 1, %v415
        %v417 = vrot.slane %v408, %v416
        %v418 = vlaneseq
        %v419 = vshrl.u32 %v418, 7
        %v420 = vsub.s32 2, %v419
        %v421 = vrot.slane %v408, %v420
        %v422 = vlaneseq
        %v423 = vshrl.u32 %v422, 7
        %v424 = vsub.s32 3, %v423
        %v425 = vrot.slane %v408, %v424
        %v426 = vlaneseq
        %v427 = vshrl.u32 %v426, 7
        %v428 = vsub.s32 4, %v427
        %v429 = vrot.slane %v408, %v428
        %v430 = vlaneseq
        %v431 = vshrl.u32 %v430, 7
        %v432 = vsub.s32 5, %v431
        %v433 = vrot.slane %v408, %v432
        %vm440 = vcmask 261120
        %v442 = vsel %vm440, %v352, 0
        %v445 = vsel %vm440, %v353, 0
        %v448 = vsel %vm440, %v354, 0
        %v451 = vsel %vm440, %v355, 0
        %v454 = vsel %vm440, %v356, 0
        %v457 = vsel %vm440, %v357, 0
        %v460 = vsel %vm440, %v358, 0
        %v463 = vsel %vm440, %v359, 0
        %v466 = vsel %vm440, %v360, 0
        %v469 = vsel %vm440, %v361, 0
        %v472 = vsel %vm440, %v362, 0
        %v475 = vsel %vm440, %v363, 0
        %v478 = vsel %vm440, %v364, 0
        %v481 = vsel %vm440, %v365, 0
        %v484 = vsel %vm440, %v366, 0
        %v487 = vsel %vm440, %v367, 0
        %v490 = vsel %vm440, %v368, 0
        %v493 = vsel %vm440, %v369, 0
        %v496 = vsel %vm440, %v370, 0
        %v499 = vsel %vm440, %v371, 0
        %v502 = vsel %vm440, %v372, 0
        %v505 = vsel %vm440, %v373, 0
        %v508 = vsel %vm440, %v374, 0
        %v511 = vsel %vm440, %v375, 0
        %v514 = vsel %vm440, %v376, 0
        %v517 = vsel %vm440, %v377, 0
        %v520 = vsel %vm440, %v378, 0
        %v523 = vsel %vm440, %v379, 0
        %v526 = vsel %vm440, %v380, 0
        %v529 = vsel %vm440, %v381, 0
        %v532 = vsel %vm440, %v382, 0
        %v535 = vsel %vm440, %v383, 0
        %537 = vmatprep.subr.mxu0 %v385
        %538 = vmatpush1.msra.mxu0 %v384
        %539 = vmatprep.subr.mxu0 %v391
        %540 = vmatpush1.msra.mxu0 %v390
        %541 = vmatprep.subr.mxu0 %v397
        %542 = vmatpush1.msra.mxu0 %v396
        %543 = vmatprep.subr.mxu0 %v403
        %544 = vmatpush1.msra.mxu0 %v402
        %545 = vmatprep.subr.mxu0 0.0
        %546 = vmatpush1.msra.mxu0 0.0
        %547 = vmatprep.subr.mxu0 0.0
        %548 = vmatpush1.msra.mxu0 0.0
        %549 = vmatprep.subr.mxu0 0.0
        %550 = vmatpush1.msra.mxu0 0.0
        %551 = vmatprep.subr.mxu0 0.0
        %552 = vmatpush1.msra.mxu0 0.0
        %553 = vmatprep.subr.mxu0 0.0
        %554 = vmatpush1.msra.mxu0 0.0
        %555 = vmatprep.subr.mxu0 0.0
        %556 = vmatpush1.msra.mxu0 0.0
        %557 = vmatprep.subr.mxu0 0.0
        %558 = vmatpush1.msra.mxu0 0.0
        %559 = vmatprep.subr.mxu0 0.0
        %560 = vmatpush1.msra.mxu0 0.0
        %561 = vmatprep.subr.mxu0 0.0
        %562 = vmatpush1.msra.mxu0 0.0
        %563 = vmatprep.subr.mxu0 0.0
        %564 = vmatpush1.msra.mxu0 0.0
        %565 = vmatprep.subr.mxu0 0.0
        %566 = vmatpush1.msra.mxu0 0.0
        %567 = vmatprep.subr.mxu0 0.0
        %568 = vmatpush1.msra.mxu0 0.0
        %569 = vmatprep.subr.mxu0 0.0
        %570 = vmatpush1.msra.mxu0 0.0
        %571 = vmatprep.subr.mxu0 0.0
        %572 = vmatpush1.msra.mxu0 0.0
        %573 = vmatprep.subr.mxu0 0.0
        %574 = vmatpush1.msra.mxu0 0.0
        %575 = vmatprep.subr.mxu0 0.0
        %576 = vmatpush1.msra.mxu0 0.0
        %577 = vmatprep.subr.mxu0 0.0
        %578 = vmatpush1.msra.mxu0 0.0
        %579 = vmatprep.subr.mxu0 0.0
        %580 = vmatpush1.msra.mxu0 0.0
        %581 = vmatprep.subr.mxu0 0.0
        %582 = vmatpush1.msra.mxu0 0.0
        %583 = vmatprep.subr.mxu0 0.0
        %584 = vmatpush1.msra.mxu0 0.0
        %585 = vmatprep.subr.mxu0 0.0
        %586 = vmatpush1.msra.mxu0 0.0
        %587 = vmatprep.subr.mxu0 0.0
        %588 = vmatpush1.msra.mxu0 0.0
        %589 = vmatprep.subr.mxu0 0.0
        %590 = vmatpush1.msra.mxu0 0.0
        %591 = vmatprep.subr.mxu0 0.0
        %592 = vmatpush1.msra.mxu0 0.0
        %593 = vmatprep.subr.mxu0 0.0
        %594 = vmatpush1.msra.mxu0 0.0
        %595 = vmatprep.subr.mxu0 0.0
        %596 = vmatpush1.msra.mxu0 0.0
        %597 = vmatprep.subr.mxu0 0.0
        %598 = vmatpush1.msra.mxu0 0.0
        %599 = vmatprep.subr.mxu0 0.0
        %600 = vmatpush1.msra.mxu0 0.0
        %601 = vmatprep.mubr.f32.mxu0 0.0
        %602 = vmatmul.mubr.f32.gmra.mrb[0].mxu0 %v442
        %v603 = vpop.f32.mrb[0].mxu0
        %v604 = vadd.f32 %v413, %v603
        %v605 = vpop.f32.mrb[0].mxu0
        %v606 = vadd.f32 %v417, %v605
        %607 = vmatprep.mubr.f32.mxu0 0.0
        %608 = vmatmul.mubr.f32.gmra.mrb[0].mxu0 %v445
        %v609 = vpop.f32.mrb[0].mxu0
        %v610 = vadd.f32 %v413, %v609
        %v611 = vpop.f32.mrb[0].mxu0
        %v612 = vadd.f32 %v417, %v611
        %613 = vmatprep.mubr.f32.mxu0 0.0
        %614 = vmatmul.mubr.f32.gmra.mrb[0].mxu0 %v448
        %v615 = vpop.f32.mrb[0].mxu0
        %v616 = vadd.f32 %v413, %v615
        %v617 = vpop.f32.mrb[0].mxu0
        %v618 = vadd.f32 %v417, %v617
        %619 = vmatprep.mubr.f32.mxu0 0.0
        %620 = vmatmul.mubr.f32.gmra.mrb[0].mxu0 %v451
        %v621 = vpop.f32.mrb[0].mxu0
        %v622 = vadd.f32 %v413, %v621
        %v623 = vpop.f32.mrb[0].mxu0
        %v624 = vadd.f32 %v417, %v623
        %625 = vmatprep.mubr.f32.mxu0 0.0
        %626 = vmatmul.mubr.f32.gmra.mrb[0].mxu0 %v454
        %v627 = vpop.f32.mrb[0].mxu0
        %v628 = vadd.f32 %v413, %v627
        %v629 = vpop.f32.mrb[0].mxu0
        %v630 = vadd.f32 %v417, %v629
        %631 = vmatprep.mubr.f32.mxu0 0.0
        %632 = vmatmul.mubr.f32.gmra.mrb[0].mxu0 %v457
        %v633 = vpop.f32.mrb[0].mxu0
        %v634 = vadd.f32 %v413, %v633
        %v635 = vpop.f32.mrb[0].mxu0
        %v636 = vadd.f32 %v417, %v635
        %637 = vmatprep.mubr.f32.mxu0 0.0
        %638 = vmatmul.mubr.f32.gmra.mrb[0].mxu0 %v460
        %v639 = vpop.f32.mrb[0].mxu0
        %v640 = vadd.f32 %v413, %v639
        %v641 = vpop.f32.mrb[0].mxu0
        %v642 = vadd.f32 %v417, %v641
        %643 = vmatprep.mubr.f32.mxu0 0.0
        %644 = vmatmul.mubr.f32.gmra.mrb[0].mxu0 %v463
        %v645 = vpop.f32.mrb[0].mxu0
        %v646 = vadd.f32 %v413, %v645
        %v647 = vpop.f32.mrb[0].mxu0
        %v648 = vadd.f32 %v417, %v647
        %649 = vmatprep.mubr.f32.mxu0 0.0
        %650 = vmatmul.mubr.f32.gmra.mrb[0].mxu0 %v466
        %v651 = vpop.f32.mrb[0].mxu0
        %v652 = vadd.f32 %v413, %v651
        %v653 = vpop.f32.mrb[0].mxu0
        %v654 = vadd.f32 %v417, %v653
        %655 = vmatprep.mubr.f32.mxu0 0.0
        %656 = vmatmul.mubr.f32.gmra.mrb[0].mxu0 %v469
        %v657 = vpop.f32.mrb[0].mxu0
        %v658 = vadd.f32 %v413, %v657
        %v659 = vpop.f32.mrb[0].mxu0
        %v660 = vadd.f32 %v417, %v659
        %661 = vmatprep.mubr.f32.mxu0 0.0
        %662 = vmatmul.mubr.f32.gmra.mrb[0].mxu0 %v472
        %v663 = vpop.f32.mrb[0].mxu0
        %v664 = vadd.f32 %v413, %v663
        %v665 = vpop.f32.mrb[0].mxu0
        %v666 = vadd.f32 %v417, %v665
        %667 = vmatprep.mubr.f32.mxu0 0.0
        %668 = vmatmul.mubr.f32.gmra.mrb[0].mxu0 %v475
        %v669 = vpop.f32.mrb[0].mxu0
        %v670 = vadd.f32 %v413, %v669
        %v671 = vpop.f32.mrb[0].mxu0
        %v672 = vadd.f32 %v417, %v671
        %673 = vmatprep.mubr.f32.mxu0 0.0
        %674 = vmatmul.mubr.f32.gmra.mrb[0].mxu0 %v478
        %v675 = vpop.f32.mrb[0].mxu0
        %v676 = vadd.f32 %v413, %v675
        %v677 = vpop.f32.mrb[0].mxu0
        %v678 = vadd.f32 %v417, %v677
        %679 = vmatprep.mubr.f32.mxu0 0.0
        %680 = vmatmul.mubr.f32.gmra.mrb[0].mxu0 %v481
        %v681 = vpop.f32.mrb[0].mxu0
        %v682 = vadd.f32 %v413, %v681
        %v683 = vpop.f32.mrb[0].mxu0
        %v684 = vadd.f32 %v417, %v683
        %685 = vmatprep.mubr.f32.mxu0 0.0
        %686 = vmatmul.mubr.f32.gmra.mrb[0].mxu0 %v484
        %v687 = vpop.f32.mrb[0].mxu0
        %v688 = vadd.f32 %v413, %v687
        %v689 = vpop.f32.mrb[0].mxu0
        %v690 = vadd.f32 %v417, %v689
        %691 = vmatprep.mubr.f32.mxu0 0.0
        %692 = vmatmul.mubr.f32.gmra.mrb[0].mxu0 %v487
        %v693 = vpop.f32.mrb[0].mxu0
        %v694 = vadd.f32 %v413, %v693
        %v695 = vpop.f32.mrb[0].mxu0
        %v696 = vadd.f32 %v417, %v695
        %697 = vmatprep.mubr.f32.mxu0 0.0
        %698 = vmatmul.mubr.f32.gmra.mrb[0].mxu0 %v490
        %v699 = vpop.f32.mrb[0].mxu0
        %v700 = vadd.f32 %v413, %v699
        %v701 = vpop.f32.mrb[0].mxu0
        %v702 = vadd.f32 %v417, %v701
        %703 = vmatprep.mubr.f32.mxu0 0.0
        %704 = vmatmul.mubr.f32.gmra.mrb[0].mxu0 %v493
        %v705 = vpop.f32.mrb[0].mxu0
        %v706 = vadd.f32 %v413, %v705
        %v707 = vpop.f32.mrb[0].mxu0
        %v708 = vadd.f32 %v417, %v707
        %709 = vmatprep.mubr.f32.mxu0 0.0
        %710 = vmatmul.mubr.f32.gmra.mrb[0].mxu0 %v496
        %v711 = vpop.f32.mrb[0].mxu0
        %v712 = vadd.f32 %v413, %v711
        %v713 = vpop.f32.mrb[0].mxu0
        %v714 = vadd.f32 %v417, %v713
        %715 = vmatprep.mubr.f32.mxu0 0.0
        %716 = vmatmul.mubr.f32.gmra.mrb[0].mxu0 %v499
        %v717 = vpop.f32.mrb[0].mxu0
        %v718 = vadd.f32 %v413, %v717
        %v719 = vpop.f32.mrb[0].mxu0
        %v720 = vadd.f32 %v417, %v719
        %721 = vmatprep.mubr.f32.mxu0 0.0
        %722 = vmatmul.mubr.f32.gmra.mrb[0].mxu0 %v502
        %v723 = vpop.f32.mrb[0].mxu0
        %v724 = vadd.f32 %v413, %v723
        %v725 = vpop.f32.mrb[0].mxu0
        %v726 = vadd.f32 %v417, %v725
        %727 = vmatprep.mubr.f32.mxu0 0.0
        %728 = vmatmul.mubr.f32.gmra.mrb[0].mxu0 %v505
        %v729 = vpop.f32.mrb[0].mxu0
        %v730 = vadd.f32 %v413, %v729
        %v731 = vpop.f32.mrb[0].mxu0
        %v732 = vadd.f32 %v417, %v731
        %733 = vmatprep.mubr.f32.mxu0 0.0
        %734 = vmatmul.mubr.f32.gmra.mrb[0].mxu0 %v508
        %v735 = vpop.f32.mrb[0].mxu0
        %v736 = vadd.f32 %v413, %v735
        %v737 = vpop.f32.mrb[0].mxu0
        %v738 = vadd.f32 %v417, %v737
        %739 = vmatprep.mubr.f32.mxu0 0.0
        %740 = vmatmul.mubr.f32.gmra.mrb[0].mxu0 %v511
        %v741 = vpop.f32.mrb[0].mxu0
        %v742 = vadd.f32 %v413, %v741
        %v743 = vpop.f32.mrb[0].mxu0
        %v744 = vadd.f32 %v417, %v743
        %745 = vmatprep.mubr.f32.mxu0 0.0
        %746 = vmatmul.mubr.f32.gmra.mrb[0].mxu0 %v514
        %v747 = vpop.f32.mrb[0].mxu0
        %v748 = vadd.f32 %v413, %v747
        %v749 = vpop.f32.mrb[0].mxu0
        %v750 = vadd.f32 %v417, %v749
        %751 = vmatprep.mubr.f32.mxu0 0.0
        %752 = vmatmul.mubr.f32.gmra.mrb[0].mxu0 %v517
        %v753 = vpop.f32.mrb[0].mxu0
        %v754 = vadd.f32 %v413, %v753
        %v755 = vpop.f32.mrb[0].mxu0
        %v756 = vadd.f32 %v417, %v755
        %757 = vmatprep.mubr.f32.mxu0 0.0
        %758 = vmatmul.mubr.f32.gmra.mrb[0].mxu0 %v520
        %v759 = vpop.f32.mrb[0].mxu0
        %v760 = vadd.f32 %v413, %v759
        %v761 = vpop.f32.mrb[0].mxu0
        %v762 = vadd.f32 %v417, %v761
        %763 = vmatprep.mubr.f32.mxu0 0.0
        %764 = vmatmul.mubr.f32.gmra.mrb[0].mxu0 %v523
        %v765 = vpop.f32.mrb[0].mxu0
        %v766 = vadd.f32 %v413, %v765
        %v767 = vpop.f32.mrb[0].mxu0
        %v768 = vadd.f32 %v417, %v767
        %769 = vmatprep.mubr.f32.mxu0 0.0
        %770 = vmatmul.mubr.f32.gmra.mrb[0].mxu0 %v526
        %v771 = vpop.f32.mrb[0].mxu0
        %v772 = vadd.f32 %v413, %v771
        %v773 = vpop.f32.mrb[0].mxu0
        %v774 = vadd.f32 %v417, %v773
        %775 = vmatprep.mubr.f32.mxu0 0.0
        %776 = vmatmul.mubr.f32.gmra.mrb[0].mxu0 %v529
        %v777 = vpop.f32.mrb[0].mxu0
        %v778 = vadd.f32 %v413, %v777
        %v779 = vpop.f32.mrb[0].mxu0
        %v780 = vadd.f32 %v417, %v779
        %781 = vmatprep.mubr.f32.mxu0 0.0
        %782 = vmatmul.mubr.f32.gmra.mrb[0].mxu0 %v532
        %v783 = vpop.f32.mrb[0].mxu0
        %v784 = vadd.f32 %v413, %v783
        %v785 = vpop.f32.mrb[0].mxu0
        %v786 = vadd.f32 %v417, %v785
        %787 = vmatprep.mubr.f32.mxu0 0.0
        %788 = vmatmul.mubr.f32.gmra.mrb[0].mxu0 %v535
        %v789 = vpop.f32.mrb[0].mxu0
        %v790 = vadd.f32 %v413, %v789
        %v791 = vpop.f32.mrb[0].mxu0
        %v792 = vadd.f32 %v417, %v791
        %793 = vdwg.mxu0
        %794 = vmatprep.subr.mxu0 %v387
        %795 = vmatpush1.msra.mxu0 %v386
        %796 = vmatprep.subr.mxu0 %v393
        %797 = vmatpush1.msra.mxu0 %v392
        %798 = vmatprep.subr.mxu0 %v399
        %799 = vmatpush1.msra.mxu0 %v398
        %800 = vmatprep.subr.mxu0 %v405
        %801 = vmatpush1.msra.mxu0 %v404
        %802 = vmatprep.subr.mxu0 0.0
        %803 = vmatpush1.msra.mxu0 0.0
        %804 = vmatprep.subr.mxu0 0.0
        %805 = vmatpush1.msra.mxu0 0.0
        %806 = vmatprep.subr.mxu0 0.0
        %807 = vmatpush1.msra.mxu0 0.0
        %808 = vmatprep.subr.mxu0 0.0
        %809 = vmatpush1.msra.mxu0 0.0
        %810 = vmatprep.subr.mxu0 0.0
        %811 = vmatpush1.msra.mxu0 0.0
        %812 = vmatprep.subr.mxu0 0.0
        %813 = vmatpush1.msra.mxu0 0.0
        %814 = vmatprep.subr.mxu0 0.0
        %815 = vmatpush1.msra.mxu0 0.0
        %816 = vmatprep.subr.mxu0 0.0
        %817 = vmatpush1.msra.mxu0 0.0
        %818 = vmatprep.subr.mxu0 0.0
        %819 = vmatpush1.msra.mxu0 0.0
        %820 = vmatprep.subr.mxu0 0.0
        %821 = vmatpush1.msra.mxu0 0.0
        %822 = vmatprep.subr.mxu0 0.0
        %823 = vmatpush1.msra.mxu0 0.0
        %824 = vmatprep.subr.mxu0 0.0
        %825 = vmatpush1.msra.mxu0 0.0
        %826 = vmatprep.subr.mxu0 0.0
        %827 = vmatpush1.msra.mxu0 0.0
        %828 = vmatprep.subr.mxu0 0.0
        %829 = vmatpush1.msra.mxu0 0.0
        %830 = vmatprep.subr.mxu0 0.0
        %831 = vmatpush1.msra.mxu0 0.0
        %832 = vmatprep.subr.mxu0 0.0
        %833 = vmatpush1.msra.mxu0 0.0
        %834 = vmatprep.subr.mxu0 0.0
        %835 = vmatpush1.msra.mxu0 0.0
        %836 = vmatprep.subr.mxu0 0.0
        %837 = vmatpush1.msra.mxu0 0.0
        %838 = vmatprep.subr.mxu0 0.0
        %839 = vmatpush1.msra.mxu0 0.0
        %840 = vmatprep.subr.mxu0 0.0
        %841 = vmatpush1.msra.mxu0 0.0
        %842 = vmatprep.subr.mxu0 0.0
        %843 = vmatpush1.msra.mxu0 0.0
        %844 = vmatprep.subr.mxu0 0.0
        %845 = vmatpush1.msra.mxu0 0.0
        %846 = vmatprep.subr.mxu0 0.0
        %847 = vmatpush1.msra.mxu0 0.0
        %848 = vmatprep.subr.mxu0 0.0
        %849 = vmatpush1.msra.mxu0 0.0
        %850 = vmatprep.subr.mxu0 0.0
        %851 = vmatpush1.msra.mxu0 0.0
        %852 = vmatprep.subr.mxu0 0.0
        %853 = vmatpush1.msra.mxu0 0.0
        %854 = vmatprep.subr.mxu0 0.0
        %855 = vmatpush1.msra.mxu0 0.0
        %856 = vmatprep.subr.mxu0 0.0
        %857 = vmatpush1.msra.mxu0 0.0
        %858 = vmatprep.mubr.f32.mxu0 0.0
        %859 = vmatmul.mubr.f32.gmra.mrb[0].mxu0 %v442
        %v860 = vpop.f32.mrb[0].mxu0
        %v861 = vadd.f32 %v421, %v860
        %v862 = vpop.f32.mrb[0].mxu0
        %v863 = vadd.f32 %v425, %v862
        %864 = vmatprep.mubr.f32.mxu0 0.0
        %865 = vmatmul.mubr.f32.gmra.mrb[0].mxu0 %v445
        %v866 = vpop.f32.mrb[0].mxu0
        %v867 = vadd.f32 %v421, %v866
        %v868 = vpop.f32.mrb[0].mxu0
        %v869 = vadd.f32 %v425, %v868
        %870 = vmatprep.mubr.f32.mxu0 0.0
        %871 = vmatmul.mubr.f32.gmra.mrb[0].mxu0 %v448
        %v872 = vpop.f32.mrb[0].mxu0
        %v873 = vadd.f32 %v421, %v872
        %v874 = vpop.f32.mrb[0].mxu0
        %v875 = vadd.f32 %v425, %v874
        %876 = vmatprep.mubr.f32.mxu0 0.0
        %877 = vmatmul.mubr.f32.gmra.mrb[0].mxu0 %v451
        %v878 = vpop.f32.mrb[0].mxu0
        %v879 = vadd.f32 %v421, %v878
        %v880 = vpop.f32.mrb[0].mxu0
        %v881 = vadd.f32 %v425, %v880
        %882 = vmatprep.mubr.f32.mxu0 0.0
        %883 = vmatmul.mubr.f32.gmra.mrb[0].mxu0 %v454
        %v884 = vpop.f32.mrb[0].mxu0
        %v885 = vadd.f32 %v421, %v884
        %v886 = vpop.f32.mrb[0].mxu0
        %v887 = vadd.f32 %v425, %v886
        %888 = vmatprep.mubr.f32.mxu0 0.0
        %889 = vmatmul.mubr.f32.gmra.mrb[0].mxu0 %v457
        %v890 = vpop.f32.mrb[0].mxu0
        %v891 = vadd.f32 %v421, %v890
        %v892 = vpop.f32.mrb[0].mxu0
        %v893 = vadd.f32 %v425, %v892
        %894 = vmatprep.mubr.f32.mxu0 0.0
        %895 = vmatmul.mubr.f32.gmra.mrb[0].mxu0 %v460
        %v896 = vpop.f32.mrb[0].mxu0
        %v897 = vadd.f32 %v421, %v896
        %v898 = vpop.f32.mrb[0].mxu0
        %v899 = vadd.f32 %v425, %v898
        %900 = vmatprep.mubr.f32.mxu0 0.0
        %901 = vmatmul.mubr.f32.gmra.mrb[0].mxu0 %v463
        %v902 = vpop.f32.mrb[0].mxu0
        %v903 = vadd.f32 %v421, %v902
        %v904 = vpop.f32.mrb[0].mxu0
        %v905 = vadd.f32 %v425, %v904
        %906 = vmatprep.mubr.f32.mxu0 0.0
        %907 = vmatmul.mubr.f32.gmra.mrb[0].mxu0 %v466
        %v908 = vpop.f32.mrb[0].mxu0
        %v909 = vadd.f32 %v421, %v908
        %v910 = vpop.f32.mrb[0].mxu0
        %v911 = vadd.f32 %v425, %v910
        %912 = vmatprep.mubr.f32.mxu0 0.0
        %913 = vmatmul.mubr.f32.gmra.mrb[0].mxu0 %v469
        %v914 = vpop.f32.mrb[0].mxu0
        %v915 = vadd.f32 %v421, %v914
        %v916 = vpop.f32.mrb[0].mxu0
        %v917 = vadd.f32 %v425, %v916
        %918 = vmatprep.mubr.f32.mxu0 0.0
        %919 = vmatmul.mubr.f32.gmra.mrb[0].mxu0 %v472
        %v920 = vpop.f32.mrb[0].mxu0
        %v921 = vadd.f32 %v421, %v920
        %v922 = vpop.f32.mrb[0].mxu0
        %v923 = vadd.f32 %v425, %v922
        %924 = vmatprep.mubr.f32.mxu0 0.0
        %925 = vmatmul.mubr.f32.gmra.mrb[0].mxu0 %v475
        %v926 = vpop.f32.mrb[0].mxu0
        %v927 = vadd.f32 %v421, %v926
        %v928 = vpop.f32.mrb[0].mxu0
        %v929 = vadd.f32 %v425, %v928
        %930 = vmatprep.mubr.f32.mxu0 0.0
        %931 = vmatmul.mubr.f32.gmra.mrb[0].mxu0 %v478
        %v932 = vpop.f32.mrb[0].mxu0
        %v933 = vadd.f32 %v421, %v932
        %v934 = vpop.f32.mrb[0].mxu0
        %v935 = vadd.f32 %v425, %v934
        %936 = vmatprep.mubr.f32.mxu0 0.0
        %937 = vmatmul.mubr.f32.gmra.mrb[0].mxu0 %v481
        %v938 = vpop.f32.mrb[0].mxu0
        %v939 = vadd.f32 %v421, %v938
        %v940 = vpop.f32.mrb[0].mxu0
        %v941 = vadd.f32 %v425, %v940
        %942 = vmatprep.mubr.f32.mxu0 0.0
        %943 = vmatmul.mubr.f32.gmra.mrb[0].mxu0 %v484
        %v944 = vpop.f32.mrb[0].mxu0
        %v945 = vadd.f32 %v421, %v944
        %v946 = vpop.f32.mrb[0].mxu0
        %v947 = vadd.f32 %v425, %v946
        %948 = vmatprep.mubr.f32.mxu0 0.0
        %949 = vmatmul.mubr.f32.gmra.mrb[0].mxu0 %v487
        %v950 = vpop.f32.mrb[0].mxu0
        %v951 = vadd.f32 %v421, %v950
        %v952 = vpop.f32.mrb[0].mxu0
        %v953 = vadd.f32 %v425, %v952
        %954 = vmatprep.mubr.f32.mxu0 0.0
        %955 = vmatmul.mubr.f32.gmra.mrb[0].mxu0 %v490
        %v956 = vpop.f32.mrb[0].mxu0
        %v957 = vadd.f32 %v421, %v956
        %v958 = vpop.f32.mrb[0].mxu0
        %v959 = vadd.f32 %v425, %v958
        %960 = vmatprep.mubr.f32.mxu0 0.0
        %961 = vmatmul.mubr.f32.gmra.mrb[0].mxu0 %v493
        %v962 = vpop.f32.mrb[0].mxu0
        %v963 = vadd.f32 %v421, %v962
        %v964 = vpop.f32.mrb[0].mxu0
        %v965 = vadd.f32 %v425, %v964
        %966 = vmatprep.mubr.f32.mxu0 0.0
        %967 = vmatmul.mubr.f32.gmra.mrb[0].mxu0 %v496
        %v968 = vpop.f32.mrb[0].mxu0
        %v969 = vadd.f32 %v421, %v968
        %v970 = vpop.f32.mrb[0].mxu0
        %v971 = vadd.f32 %v425, %v970
        %972 = vmatprep.mubr.f32.mxu0 0.0
        %973 = vmatmul.mubr.f32.gmra.mrb[0].mxu0 %v499
        %v974 = vpop.f32.mrb[0].mxu0
        %v975 = vadd.f32 %v421, %v974
        %v976 = vpop.f32.mrb[0].mxu0
        %v977 = vadd.f32 %v425, %v976
        %978 = vmatprep.mubr.f32.mxu0 0.0
        %979 = vmatmul.mubr.f32.gmra.mrb[0].mxu0 %v502
        %v980 = vpop.f32.mrb[0].mxu0
        %v981 = vadd.f32 %v421, %v980
        %v982 = vpop.f32.mrb[0].mxu0
        %v983 = vadd.f32 %v425, %v982
        %984 = vmatprep.mubr.f32.mxu0 0.0
        %985 = vmatmul.mubr.f32.gmra.mrb[0].mxu0 %v505
        %v986 = vpop.f32.mrb[0].mxu0
        %v987 = vadd.f32 %v421, %v986
        %v988 = vpop.f32.mrb[0].mxu0
        %v989 = vadd.f32 %v425, %v988
        %990 = vmatprep.mubr.f32.mxu0 0.0
        %991 = vmatmul.mubr.f32.gmra.mrb[0].mxu0 %v508
        %v992 = vpop.f32.mrb[0].mxu0
        %v993 = vadd.f32 %v421, %v992
        %v994 = vpop.f32.mrb[0].mxu0
        %v995 = vadd.f32 %v425, %v994
        %996 = vmatprep.mubr.f32.mxu0 0.0
        %997 = vmatmul.mubr.f32.gmra.mrb[0].mxu0 %v511
        %v998 = vpop.f32.mrb[0].mxu0
        %v999 = vadd.f32 %v421, %v998
        %v1000 = vpop.f32.mrb[0].mxu0
        %v1001 = vadd.f32 %v425, %v1000
        %1002 = vmatprep.mubr.f32.mxu0 0.0
        %1003 = vmatmul.mubr.f32.gmra.mrb[0].mxu0 %v514
        %v1004 = vpop.f32.mrb[0].mxu0
        %v1005 = vadd.f32 %v421, %v1004
        %v1006 = vpop.f32.mrb[0].mxu0
        %v1007 = vadd.f32 %v425, %v1006
        %1008 = vmatprep.mubr.f32.mxu0 0.0
        %1009 = vmatmul.mubr.f32.gmra.mrb[0].mxu0 %v517
        %v1010 = vpop.f32.mrb[0].mxu0
        %v1011 = vadd.f32 %v421, %v1010
        %v1012 = vpop.f32.mrb[0].mxu0
        %v1013 = vadd.f32 %v425, %v1012
        %1014 = vmatprep.mubr.f32.mxu0 0.0
        %1015 = vmatmul.mubr.f32.gmra.mrb[0].mxu0 %v520
        %v1016 = vpop.f32.mrb[0].mxu0
        %v1017 = vadd.f32 %v421, %v1016
        %v1018 = vpop.f32.mrb[0].mxu0
        %v1019 = vadd.f32 %v425, %v1018
        %1020 = vmatprep.mubr.f32.mxu0 0.0
        %1021 = vmatmul.mubr.f32.gmra.mrb[0].mxu0 %v523
        %v1022 = vpop.f32.mrb[0].mxu0
        %v1023 = vadd.f32 %v421, %v1022
        %v1024 = vpop.f32.mrb[0].mxu0
        %v1025 = vadd.f32 %v425, %v1024
        %1026 = vmatprep.mubr.f32.mxu0 0.0
        %1027 = vmatmul.mubr.f32.gmra.mrb[0].mxu0 %v526
        %v1028 = vpop.f32.mrb[0].mxu0
        %v1029 = vadd.f32 %v421, %v1028
        %v1030 = vpop.f32.mrb[0].mxu0
        %v1031 = vadd.f32 %v425, %v1030
        %1032 = vmatprep.mubr.f32.mxu0 0.0
        %1033 = vmatmul.mubr.f32.gmra.mrb[0].mxu0 %v529
        %v1034 = vpop.f32.mrb[0].mxu0
        %v1035 = vadd.f32 %v421, %v1034
        %v1036 = vpop.f32.mrb[0].mxu0
        %v1037 = vadd.f32 %v425, %v1036
        %1038 = vmatprep.mubr.f32.mxu0 0.0
        %1039 = vmatmul.mubr.f32.gmra.mrb[0].mxu0 %v532
        %v1040 = vpop.f32.mrb[0].mxu0
        %v1041 = vadd.f32 %v421, %v1040
        %v1042 = vpop.f32.mrb[0].mxu0
        %v1043 = vadd.f32 %v425, %v1042
        %1044 = vmatprep.mubr.f32.mxu0 0.0
        %1045 = vmatmul.mubr.f32.gmra.mrb[0].mxu0 %v535
        %v1046 = vpop.f32.mrb[0].mxu0
        %v1047 = vadd.f32 %v421, %v1046
        %v1048 = vpop.f32.mrb[0].mxu0
        %v1049 = vadd.f32 %v425, %v1048
        %1050 = vdwg.mxu0
        %1051 = vmatprep.subr.mxu0 %v389
        %1052 = vmatpush1.msra.mxu0 %v388
        %1053 = vmatprep.subr.mxu0 %v395
        %1054 = vmatpush1.msra.mxu0 %v394
        %1055 = vmatprep.subr.mxu0 %v401
        %1056 = vmatpush1.msra.mxu0 %v400
        %1057 = vmatprep.subr.mxu0 %v407
        %1058 = vmatpush1.msra.mxu0 %v406
        %1059 = vmatprep.subr.mxu0 0.0
        %1060 = vmatpush1.msra.mxu0 0.0
        %1061 = vmatprep.subr.mxu0 0.0
        %1062 = vmatpush1.msra.mxu0 0.0
        %1063 = vmatprep.subr.mxu0 0.0
        %1064 = vmatpush1.msra.mxu0 0.0
        %1065 = vmatprep.subr.mxu0 0.0
        %1066 = vmatpush1.msra.mxu0 0.0
        %1067 = vmatprep.subr.mxu0 0.0
        %1068 = vmatpush1.msra.mxu0 0.0
        %1069 = vmatprep.subr.mxu0 0.0
        %1070 = vmatpush1.msra.mxu0 0.0
        %1071 = vmatprep.subr.mxu0 0.0
        %1072 = vmatpush1.msra.mxu0 0.0
        %1073 = vmatprep.subr.mxu0 0.0
        %1074 = vmatpush1.msra.mxu0 0.0
        %1075 = vmatprep.subr.mxu0 0.0
        %1076 = vmatpush1.msra.mxu0 0.0
        %1077 = vmatprep.subr.mxu0 0.0
        %1078 = vmatpush1.msra.mxu0 0.0
        %1079 = vmatprep.subr.mxu0 0.0
        %1080 = vmatpush1.msra.mxu0 0.0
        %1081 = vmatprep.subr.mxu0 0.0
        %1082 = vmatpush1.msra.mxu0 0.0
        %1083 = vmatprep.subr.mxu0 0.0
        %1084 = vmatpush1.msra.mxu0 0.0
        %1085 = vmatprep.subr.mxu0 0.0
        %1086 = vmatpush1.msra.mxu0 0.0
        %1087 = vmatprep.subr.mxu0 0.0
        %1088 = vmatpush1.msra.mxu0 0.0
        %1089 = vmatprep.subr.mxu0 0.0
        %1090 = vmatpush1.msra.mxu0 0.0
        %1091 = vmatprep.subr.mxu0 0.0
        %1092 = vmatpush1.msra.mxu0 0.0
        %1093 = vmatprep.subr.mxu0 0.0
        %1094 = vmatpush1.msra.mxu0 0.0
        %1095 = vmatprep.subr.mxu0 0.0
        %1096 = vmatpush1.msra.mxu0 0.0
        %1097 = vmatprep.subr.mxu0 0.0
        %1098 = vmatpush1.msra.mxu0 0.0
        %1099 = vmatprep.subr.mxu0 0.0
        %1100 = vmatpush1.msra.mxu0 0.0
        %1101 = vmatprep.subr.mxu0 0.0
        %1102 = vmatpush1.msra.mxu0 0.0
        %1103 = vmatprep.subr.mxu0 0.0
        %1104 = vmatpush1.msra.mxu0 0.0
        %1105 = vmatprep.subr.mxu0 0.0
        %1106 = vmatpush1.msra.mxu0 0.0
        %1107 = vmatprep.subr.mxu0 0.0
        %1108 = vmatpush1.msra.mxu0 0.0
        %1109 = vmatprep.subr.mxu0 0.0
        %1110 = vmatpush1.msra.mxu0 0.0
        %1111 = vmatprep.subr.mxu0 0.0
        %1112 = vmatpush1.msra.mxu0 0.0
        %1113 = vmatprep.subr.mxu0 0.0
        %1114 = vmatpush1.msra.mxu0 0.0
        %1115 = vmatprep.mubr.f32.mxu0 0.0
        %1116 = vmatmul.mubr.f32.gmra.mrb[0].mxu0 %v442
        %v1117 = vpop.f32.mrb[0].mxu0
        %v1118 = vadd.f32 %v429, %v1117
        %v1119 = vpop.f32.mrb[0].mxu0
        %v1120 = vadd.f32 %v433, %v1119
        %1121 = vmatprep.mubr.f32.mxu0 0.0
        %1122 = vmatmul.mubr.f32.gmra.mrb[0].mxu0 %v445
        %v1123 = vpop.f32.mrb[0].mxu0
        %v1124 = vadd.f32 %v429, %v1123
        %v1125 = vpop.f32.mrb[0].mxu0
        %v1126 = vadd.f32 %v433, %v1125
        %1127 = vmatprep.mubr.f32.mxu0 0.0
        %1128 = vmatmul.mubr.f32.gmra.mrb[0].mxu0 %v448
        %v1129 = vpop.f32.mrb[0].mxu0
        %v1130 = vadd.f32 %v429, %v1129
        %v1131 = vpop.f32.mrb[0].mxu0
        %v1132 = vadd.f32 %v433, %v1131
        %1133 = vmatprep.mubr.f32.mxu0 0.0
        %1134 = vmatmul.mubr.f32.gmra.mrb[0].mxu0 %v451
        %v1135 = vpop.f32.mrb[0].mxu0
        %v1136 = vadd.f32 %v429, %v1135
        %v1137 = vpop.f32.mrb[0].mxu0
        %v1138 = vadd.f32 %v433, %v1137
        %1139 = vmatprep.mubr.f32.mxu0 0.0
        %1140 = vmatmul.mubr.f32.gmra.mrb[0].mxu0 %v454
        %v1141 = vpop.f32.mrb[0].mxu0
        %v1142 = vadd.f32 %v429, %v1141
        %v1143 = vpop.f32.mrb[0].mxu0
        %v1144 = vadd.f32 %v433, %v1143
        %1145 = vmatprep.mubr.f32.mxu0 0.0
        %1146 = vmatmul.mubr.f32.gmra.mrb[0].mxu0 %v457
        %v1147 = vpop.f32.mrb[0].mxu0
        %v1148 = vadd.f32 %v429, %v1147
        %v1149 = vpop.f32.mrb[0].mxu0
        %v1150 = vadd.f32 %v433, %v1149
        %1151 = vmatprep.mubr.f32.mxu0 0.0
        %1152 = vmatmul.mubr.f32.gmra.mrb[0].mxu0 %v460
        %v1153 = vpop.f32.mrb[0].mxu0
        %v1154 = vadd.f32 %v429, %v1153
        %v1155 = vpop.f32.mrb[0].mxu0
        %v1156 = vadd.f32 %v433, %v1155
        %1157 = vmatprep.mubr.f32.mxu0 0.0
        %1158 = vmatmul.mubr.f32.gmra.mrb[0].mxu0 %v463
        %v1159 = vpop.f32.mrb[0].mxu0
        %v1160 = vadd.f32 %v429, %v1159
        %v1161 = vpop.f32.mrb[0].mxu0
        %v1162 = vadd.f32 %v433, %v1161
        %1163 = vmatprep.mubr.f32.mxu0 0.0
        %1164 = vmatmul.mubr.f32.gmra.mrb[0].mxu0 %v466
        %v1165 = vpop.f32.mrb[0].mxu0
        %v1166 = vadd.f32 %v429, %v1165
        %v1167 = vpop.f32.mrb[0].mxu0
        %v1168 = vadd.f32 %v433, %v1167
        %1169 = vmatprep.mubr.f32.mxu0 0.0
        %1170 = vmatmul.mubr.f32.gmra.mrb[0].mxu0 %v469
        %v1171 = vpop.f32.mrb[0].mxu0
        %v1172 = vadd.f32 %v429, %v1171
        %v1173 = vpop.f32.mrb[0].mxu0
        %v1174 = vadd.f32 %v433, %v1173
        %1175 = vmatprep.mubr.f32.mxu0 0.0
        %1176 = vmatmul.mubr.f32.gmra.mrb[0].mxu0 %v472
        %v1177 = vpop.f32.mrb[0].mxu0
        %v1178 = vadd.f32 %v429, %v1177
        %v1179 = vpop.f32.mrb[0].mxu0
        %v1180 = vadd.f32 %v433, %v1179
        %1181 = vmatprep.mubr.f32.mxu0 0.0
        %1182 = vmatmul.mubr.f32.gmra.mrb[0].mxu0 %v475
        %v1183 = vpop.f32.mrb[0].mxu0
        %v1184 = vadd.f32 %v429, %v1183
        %v1185 = vpop.f32.mrb[0].mxu0
        %v1186 = vadd.f32 %v433, %v1185
        %1187 = vmatprep.mubr.f32.mxu0 0.0
        %1188 = vmatmul.mubr.f32.gmra.mrb[0].mxu0 %v478
        %v1189 = vpop.f32.mrb[0].mxu0
        %v1190 = vadd.f32 %v429, %v1189
        %v1191 = vpop.f32.mrb[0].mxu0
        %v1192 = vadd.f32 %v433, %v1191
        %1193 = vmatprep.mubr.f32.mxu0 0.0
        %1194 = vmatmul.mubr.f32.gmra.mrb[0].mxu0 %v481
        %v1195 = vpop.f32.mrb[0].mxu0
        %v1196 = vadd.f32 %v429, %v1195
        %v1197 = vpop.f32.mrb[0].mxu0
        %v1198 = vadd.f32 %v433, %v1197
        %1199 = vmatprep.mubr.f32.mxu0 0.0
        %1200 = vmatmul.mubr.f32.gmra.mrb[0].mxu0 %v484
        %v1201 = vpop.f32.mrb[0].mxu0
        %v1202 = vadd.f32 %v429, %v1201
        %v1203 = vpop.f32.mrb[0].mxu0
        %v1204 = vadd.f32 %v433, %v1203
        %1205 = vmatprep.mubr.f32.mxu0 0.0
        %1206 = vmatmul.mubr.f32.gmra.mrb[0].mxu0 %v487
        %v1207 = vpop.f32.mrb[0].mxu0
        %v1208 = vadd.f32 %v429, %v1207
        %v1209 = vpop.f32.mrb[0].mxu0
        %v1210 = vadd.f32 %v433, %v1209
        %1211 = vmatprep.mubr.f32.mxu0 0.0
        %1212 = vmatmul.mubr.f32.gmra.mrb[0].mxu0 %v490
        %v1213 = vpop.f32.mrb[0].mxu0
        %v1214 = vadd.f32 %v429, %v1213
        %v1215 = vpop.f32.mrb[0].mxu0
        %v1216 = vadd.f32 %v433, %v1215
        %1217 = vmatprep.mubr.f32.mxu0 0.0
        %1218 = vmatmul.mubr.f32.gmra.mrb[0].mxu0 %v493
        %v1219 = vpop.f32.mrb[0].mxu0
        %v1220 = vadd.f32 %v429, %v1219
        %v1221 = vpop.f32.mrb[0].mxu0
        %v1222 = vadd.f32 %v433, %v1221
        %1223 = vmatprep.mubr.f32.mxu0 0.0
        %1224 = vmatmul.mubr.f32.gmra.mrb[0].mxu0 %v496
        %v1225 = vpop.f32.mrb[0].mxu0
        %v1226 = vadd.f32 %v429, %v1225
        %v1227 = vpop.f32.mrb[0].mxu0
        %v1228 = vadd.f32 %v433, %v1227
        %1229 = vmatprep.mubr.f32.mxu0 0.0
        %1230 = vmatmul.mubr.f32.gmra.mrb[0].mxu0 %v499
        %v1231 = vpop.f32.mrb[0].mxu0
        %v1232 = vadd.f32 %v429, %v1231
        %v1233 = vpop.f32.mrb[0].mxu0
        %v1234 = vadd.f32 %v433, %v1233
        %1235 = vmatprep.mubr.f32.mxu0 0.0
        %1236 = vmatmul.mubr.f32.gmra.mrb[0].mxu0 %v502
        %v1237 = vpop.f32.mrb[0].mxu0
        %v1238 = vadd.f32 %v429, %v1237
        %v1239 = vpop.f32.mrb[0].mxu0
        %v1240 = vadd.f32 %v433, %v1239
        %1241 = vmatprep.mubr.f32.mxu0 0.0
        %1242 = vmatmul.mubr.f32.gmra.mrb[0].mxu0 %v505
        %v1243 = vpop.f32.mrb[0].mxu0
        %v1244 = vadd.f32 %v429, %v1243
        %v1245 = vpop.f32.mrb[0].mxu0
        %v1246 = vadd.f32 %v433, %v1245
        %1247 = vmatprep.mubr.f32.mxu0 0.0
        %1248 = vmatmul.mubr.f32.gmra.mrb[0].mxu0 %v508
        %v1249 = vpop.f32.mrb[0].mxu0
        %v1250 = vadd.f32 %v429, %v1249
        %v1251 = vpop.f32.mrb[0].mxu0
        %v1252 = vadd.f32 %v433, %v1251
        %1253 = vmatprep.mubr.f32.mxu0 0.0
        %1254 = vmatmul.mubr.f32.gmra.mrb[0].mxu0 %v511
        %v1255 = vpop.f32.mrb[0].mxu0
        %v1256 = vadd.f32 %v429, %v1255
        %v1257 = vpop.f32.mrb[0].mxu0
        %v1258 = vadd.f32 %v433, %v1257
        %1259 = vmatprep.mubr.f32.mxu0 0.0
        %1260 = vmatmul.mubr.f32.gmra.mrb[0].mxu0 %v514
        %v1261 = vpop.f32.mrb[0].mxu0
        %v1262 = vadd.f32 %v429, %v1261
        %v1263 = vpop.f32.mrb[0].mxu0
        %v1264 = vadd.f32 %v433, %v1263
        %1265 = vmatprep.mubr.f32.mxu0 0.0
        %1266 = vmatmul.mubr.f32.gmra.mrb[0].mxu0 %v517
        %v1267 = vpop.f32.mrb[0].mxu0
        %v1268 = vadd.f32 %v429, %v1267
        %v1269 = vpop.f32.mrb[0].mxu0
        %v1270 = vadd.f32 %v433, %v1269
        %1271 = vmatprep.mubr.f32.mxu0 0.0
        %1272 = vmatmul.mubr.f32.gmra.mrb[0].mxu0 %v520
        %v1273 = vpop.f32.mrb[0].mxu0
        %v1274 = vadd.f32 %v429, %v1273
        %v1275 = vpop.f32.mrb[0].mxu0
        %v1276 = vadd.f32 %v433, %v1275
        %1277 = vmatprep.mubr.f32.mxu0 0.0
        %1278 = vmatmul.mubr.f32.gmra.mrb[0].mxu0 %v523
        %v1279 = vpop.f32.mrb[0].mxu0
        %v1280 = vadd.f32 %v429, %v1279
        %v1281 = vpop.f32.mrb[0].mxu0
        %v1282 = vadd.f32 %v433, %v1281
        %1283 = vmatprep.mubr.f32.mxu0 0.0
        %1284 = vmatmul.mubr.f32.gmra.mrb[0].mxu0 %v526
        %v1285 = vpop.f32.mrb[0].mxu0
        %v1286 = vadd.f32 %v429, %v1285
        %v1287 = vpop.f32.mrb[0].mxu0
        %v1288 = vadd.f32 %v433, %v1287
        %1289 = vmatprep.mubr.f32.mxu0 0.0
        %1290 = vmatmul.mubr.f32.gmra.mrb[0].mxu0 %v529
        %v1291 = vpop.f32.mrb[0].mxu0
        %v1292 = vadd.f32 %v429, %v1291
        %v1293 = vpop.f32.mrb[0].mxu0
        %v1294 = vadd.f32 %v433, %v1293
        %1295 = vmatprep.mubr.f32.mxu0 0.0
        %1296 = vmatmul.mubr.f32.gmra.mrb[0].mxu0 %v532
        %v1297 = vpop.f32.mrb[0].mxu0
        %v1298 = vadd.f32 %v429, %v1297
        %v1299 = vpop.f32.mrb[0].mxu0
        %v1300 = vadd.f32 %v433, %v1299
        %1301 = vmatprep.mubr.f32.mxu0 0.0
        %1302 = vmatmul.mubr.f32.gmra.mrb[0].mxu0 %v535
        %v1303 = vpop.f32.mrb[0].mxu0
        %v1304 = vadd.f32 %v429, %v1303
        %v1305 = vpop.f32.mrb[0].mxu0
        %v1306 = vadd.f32 %v433, %v1305
        %1307 = vdwg.mxu0
        %v1308 = vmax.f32 %v604, 0.0
        %v1309 = vmax.f32 %v606, 0.0
        %v1310 = vmax.f32 %v861, 0.0
        %v1311 = vmax.f32 %v863, 0.0
        %v1312 = vmax.f32 %v1118, 0.0
        %v1313 = vmax.f32 %v1120, 0.0
        %v1314 = vmax.f32 %v610, 0.0
        %v1315 = vmax.f32 %v612, 0.0
        %v1316 = vmax.f32 %v867, 0.0
        %v1317 = vmax.f32 %v869, 0.0
        %v1318 = vmax.f32 %v1124, 0.0
        %v1319 = vmax.f32 %v1126, 0.0
        %v1320 = vmax.f32 %v616, 0.0
        %v1321 = vmax.f32 %v618, 0.0
        %v1322 = vmax.f32 %v873, 0.0
        %v1323 = vmax.f32 %v875, 0.0
        %v1324 = vmax.f32 %v1130, 0.0
        %v1325 = vmax.f32 %v1132, 0.0
        %v1326 = vmax.f32 %v622, 0.0
        %v1327 = vmax.f32 %v624, 0.0
        %v1328 = vmax.f32 %v879, 0.0
        %v1329 = vmax.f32 %v881, 0.0
        %v1330 = vmax.f32 %v1136, 0.0
        %v1331 = vmax.f32 %v1138, 0.0
        %v1332 = vmax.f32 %v628, 0.0
        %v1333 = vmax.f32 %v630, 0.0
        %v1334 = vmax.f32 %v885, 0.0
        %v1335 = vmax.f32 %v887, 0.0
        %v1336 = vmax.f32 %v1142, 0.0
        %v1337 = vmax.f32 %v1144, 0.0
        %v1338 = vmax.f32 %v634, 0.0
        %v1339 = vmax.f32 %v636, 0.0
        %v1340 = vmax.f32 %v891, 0.0
        %v1341 = vmax.f32 %v893, 0.0
        %v1342 = vmax.f32 %v1148, 0.0
        %v1343 = vmax.f32 %v1150, 0.0
        %v1344 = vmax.f32 %v640, 0.0
        %v1345 = vmax.f32 %v642, 0.0
        %v1346 = vmax.f32 %v897, 0.0
        %v1347 = vmax.f32 %v899, 0.0
        %v1348 = vmax.f32 %v1154, 0.0
        %v1349 = vmax.f32 %v1156, 0.0
        %v1350 = vmax.f32 %v646, 0.0
        %v1351 = vmax.f32 %v648, 0.0
        %v1352 = vmax.f32 %v903, 0.0
        %v1353 = vmax.f32 %v905, 0.0
        %v1354 = vmax.f32 %v1160, 0.0
        %v1355 = vmax.f32 %v1162, 0.0
        %v1356 = vmax.f32 %v652, 0.0
        %v1357 = vmax.f32 %v654, 0.0
        %v1358 = vmax.f32 %v909, 0.0
        %v1359 = vmax.f32 %v911, 0.0
        %v1360 = vmax.f32 %v1166, 0.0
        %v1361 = vmax.f32 %v1168, 0.0
        %v1362 = vmax.f32 %v658, 0.0
        %v1363 = vmax.f32 %v660, 0.0
        %v1364 = vmax.f32 %v915, 0.0
        %v1365 = vmax.f32 %v917, 0.0
        %v1366 = vmax.f32 %v1172, 0.0
        %v1367 = vmax.f32 %v1174, 0.0
        %v1368 = vmax.f32 %v664, 0.0
        %v1369 = vmax.f32 %v666, 0.0
        %v1370 = vmax.f32 %v921, 0.0
        %v1371 = vmax.f32 %v923, 0.0
        %v1372 = vmax.f32 %v1178, 0.0
        %v1373 = vmax.f32 %v1180, 0.0
        %v1374 = vmax.f32 %v670, 0.0
        %v1375 = vmax.f32 %v672, 0.0
        %v1376 = vmax.f32 %v927, 0.0
        %v1377 = vmax.f32 %v929, 0.0
        %v1378 = vmax.f32 %v1184, 0.0
        %v1379 = vmax.f32 %v1186, 0.0
        %v1380 = vmax.f32 %v676, 0.0
        %v1381 = vmax.f32 %v678, 0.0
        %v1382 = vmax.f32 %v933, 0.0
        %v1383 = vmax.f32 %v935, 0.0
        %v1384 = vmax.f32 %v1190, 0.0
        %v1385 = vmax.f32 %v1192, 0.0
        %v1386 = vmax.f32 %v682, 0.0
        %v1387 = vmax.f32 %v684, 0.0
        %v1388 = vmax.f32 %v939, 0.0
        %v1389 = vmax.f32 %v941, 0.0
        %v1390 = vmax.f32 %v1196, 0.0
        %v1391 = vmax.f32 %v1198, 0.0
        %v1392 = vmax.f32 %v688, 0.0
        %v1393 = vmax.f32 %v690, 0.0
        %v1394 = vmax.f32 %v945, 0.0
        %v1395 = vmax.f32 %v947, 0.0
        %v1396 = vmax.f32 %v1202, 0.0
        %v1397 = vmax.f32 %v1204, 0.0
        %v1398 = vmax.f32 %v694, 0.0
        %v1399 = vmax.f32 %v696, 0.0
        %v1400 = vmax.f32 %v951, 0.0
        %v1401 = vmax.f32 %v953, 0.0
        %v1402 = vmax.f32 %v1208, 0.0
        %v1403 = vmax.f32 %v1210, 0.0
        %v1404 = vmax.f32 %v700, 0.0
        %v1405 = vmax.f32 %v702, 0.0
        %v1406 = vmax.f32 %v957, 0.0
        %v1407 = vmax.f32 %v959, 0.0
        %v1408 = vmax.f32 %v1214, 0.0
        %v1409 = vmax.f32 %v1216, 0.0
        %v1410 = vmax.f32 %v706, 0.0
        %v1411 = vmax.f32 %v708, 0.0
        %v1412 = vmax.f32 %v963, 0.0
        %v1413 = vmax.f32 %v965, 0.0
        %v1414 = vmax.f32 %v1220, 0.0
        %v1415 = vmax.f32 %v1222, 0.0
        %v1416 = vmax.f32 %v712, 0.0
        %v1417 = vmax.f32 %v714, 0.0
        %v1418 = vmax.f32 %v969, 0.0
        %v1419 = vmax.f32 %v971, 0.0
        %v1420 = vmax.f32 %v1226, 0.0
        %v1421 = vmax.f32 %v1228, 0.0
        %v1422 = vmax.f32 %v718, 0.0
        %v1423 = vmax.f32 %v720, 0.0
        %v1424 = vmax.f32 %v975, 0.0
        %v1425 = vmax.f32 %v977, 0.0
        %v1426 = vmax.f32 %v1232, 0.0
        %v1427 = vmax.f32 %v1234, 0.0
        %v1428 = vmax.f32 %v724, 0.0
        %v1429 = vmax.f32 %v726, 0.0
        %v1430 = vmax.f32 %v981, 0.0
        %v1431 = vmax.f32 %v983, 0.0
        %v1432 = vmax.f32 %v1238, 0.0
        %v1433 = vmax.f32 %v1240, 0.0
        %v1434 = vmax.f32 %v730, 0.0
        %v1435 = vmax.f32 %v732, 0.0
        %v1436 = vmax.f32 %v987, 0.0
        %v1437 = vmax.f32 %v989, 0.0
        %v1438 = vmax.f32 %v1244, 0.0
        %v1439 = vmax.f32 %v1246, 0.0
        %v1440 = vmax.f32 %v736, 0.0
        %v1441 = vmax.f32 %v738, 0.0
        %v1442 = vmax.f32 %v993, 0.0
        %v1443 = vmax.f32 %v995, 0.0
        %v1444 = vmax.f32 %v1250, 0.0
        %v1445 = vmax.f32 %v1252, 0.0
        %v1446 = vmax.f32 %v742, 0.0
        %v1447 = vmax.f32 %v744, 0.0
        %v1448 = vmax.f32 %v999, 0.0
        %v1449 = vmax.f32 %v1001, 0.0
        %v1450 = vmax.f32 %v1256, 0.0
        %v1451 = vmax.f32 %v1258, 0.0
        %v1452 = vmax.f32 %v748, 0.0
        %v1453 = vmax.f32 %v750, 0.0
        %v1454 = vmax.f32 %v1005, 0.0
        %v1455 = vmax.f32 %v1007, 0.0
        %v1456 = vmax.f32 %v1262, 0.0
        %v1457 = vmax.f32 %v1264, 0.0
        %v1458 = vmax.f32 %v754, 0.0
        %v1459 = vmax.f32 %v756, 0.0
        %v1460 = vmax.f32 %v1011, 0.0
        %v1461 = vmax.f32 %v1013, 0.0
        %v1462 = vmax.f32 %v1268, 0.0
        %v1463 = vmax.f32 %v1270, 0.0
        %v1464 = vmax.f32 %v760, 0.0
        %v1465 = vmax.f32 %v762, 0.0
        %v1466 = vmax.f32 %v1017, 0.0
        %v1467 = vmax.f32 %v1019, 0.0
        %v1468 = vmax.f32 %v1274, 0.0
        %v1469 = vmax.f32 %v1276, 0.0
        %v1470 = vmax.f32 %v766, 0.0
        %v1471 = vmax.f32 %v768, 0.0
        %v1472 = vmax.f32 %v1023, 0.0
        %v1473 = vmax.f32 %v1025, 0.0
        %v1474 = vmax.f32 %v1280, 0.0
        %v1475 = vmax.f32 %v1282, 0.0
        %v1476 = vmax.f32 %v772, 0.0
        %v1477 = vmax.f32 %v774, 0.0
        %v1478 = vmax.f32 %v1029, 0.0
        %v1479 = vmax.f32 %v1031, 0.0
        %v1480 = vmax.f32 %v1286, 0.0
        %v1481 = vmax.f32 %v1288, 0.0
        %v1482 = vmax.f32 %v778, 0.0
        %v1483 = vmax.f32 %v780, 0.0
        %v1484 = vmax.f32 %v1035, 0.0
        %v1485 = vmax.f32 %v1037, 0.0
        %v1486 = vmax.f32 %v1292, 0.0
        %v1487 = vmax.f32 %v1294, 0.0
        %v1488 = vmax.f32 %v784, 0.0
        %v1489 = vmax.f32 %v786, 0.0
        %v1490 = vmax.f32 %v1041, 0.0
        %v1491 = vmax.f32 %v1043, 0.0
        %v1492 = vmax.f32 %v1298, 0.0
        %v1493 = vmax.f32 %v1300, 0.0
        %v1494 = vmax.f32 %v790, 0.0
        %v1495 = vmax.f32 %v792, 0.0
        %v1496 = vmax.f32 %v1047, 0.0
        %v1497 = vmax.f32 %v1049, 0.0
        %v1498 = vmax.f32 %v1304, 0.0
        %v1499 = vmax.f32 %v1306, 0.0
        %v1500 = vpack.c.bf16 %v1314, %v1308
        %v1501 = vpack.c.bf16 %v1315, %v1309
        %v1502 = vpack.c.bf16 %v1316, %v1310
        %v1503 = vpack.c.bf16 %v1317, %v1311
        %v1504 = vpack.c.bf16 %v1318, %v1312
        %v1505 = vpack.c.bf16 %v1319, %v1313
        %v1506 = vpack.c.bf16 %v1326, %v1320
        %v1507 = vpack.c.bf16 %v1327, %v1321
        %v1508 = vpack.c.bf16 %v1328, %v1322
        %v1509 = vpack.c.bf16 %v1329, %v1323
        %v1510 = vpack.c.bf16 %v1330, %v1324
        %v1511 = vpack.c.bf16 %v1331, %v1325
        %v1512 = vpack.c.bf16 %v1338, %v1332
        %v1513 = vpack.c.bf16 %v1339, %v1333
        %v1514 = vpack.c.bf16 %v1340, %v1334
        %v1515 = vpack.c.bf16 %v1341, %v1335
        %v1516 = vpack.c.bf16 %v1342, %v1336
        %v1517 = vpack.c.bf16 %v1343, %v1337
        %v1518 = vpack.c.bf16 %v1350, %v1344
        %v1519 = vpack.c.bf16 %v1351, %v1345
        %v1520 = vpack.c.bf16 %v1352, %v1346
        %v1521 = vpack.c.bf16 %v1353, %v1347
        %v1522 = vpack.c.bf16 %v1354, %v1348
        %v1523 = vpack.c.bf16 %v1355, %v1349
        %v1524 = vpack.c.bf16 %v1362, %v1356
        %v1525 = vpack.c.bf16 %v1363, %v1357
        %v1526 = vpack.c.bf16 %v1364, %v1358
        %v1527 = vpack.c.bf16 %v1365, %v1359
        %v1528 = vpack.c.bf16 %v1366, %v1360
        %v1529 = vpack.c.bf16 %v1367, %v1361
        %v1530 = vpack.c.bf16 %v1374, %v1368
        %v1531 = vpack.c.bf16 %v1375, %v1369
        %v1532 = vpack.c.bf16 %v1376, %v1370
        %v1533 = vpack.c.bf16 %v1377, %v1371
        %v1534 = vpack.c.bf16 %v1378, %v1372
        %v1535 = vpack.c.bf16 %v1379, %v1373
        %v1536 = vpack.c.bf16 %v1386, %v1380
        %v1537 = vpack.c.bf16 %v1387, %v1381
        %v1538 = vpack.c.bf16 %v1388, %v1382
        %v1539 = vpack.c.bf16 %v1389, %v1383
        %v1540 = vpack.c.bf16 %v1390, %v1384
        %v1541 = vpack.c.bf16 %v1391, %v1385
        %v1542 = vpack.c.bf16 %v1398, %v1392
        %v1543 = vpack.c.bf16 %v1399, %v1393
        %v1544 = vpack.c.bf16 %v1400, %v1394
        %v1545 = vpack.c.bf16 %v1401, %v1395
        %v1546 = vpack.c.bf16 %v1402, %v1396
        %v1547 = vpack.c.bf16 %v1403, %v1397
        %v1548 = vpack.c.bf16 %v1410, %v1404
        %v1549 = vpack.c.bf16 %v1411, %v1405
        %v1550 = vpack.c.bf16 %v1412, %v1406
        %v1551 = vpack.c.bf16 %v1413, %v1407
        %v1552 = vpack.c.bf16 %v1414, %v1408
        %v1553 = vpack.c.bf16 %v1415, %v1409
        %v1554 = vpack.c.bf16 %v1422, %v1416
        %v1555 = vpack.c.bf16 %v1423, %v1417
        %v1556 = vpack.c.bf16 %v1424, %v1418
        %v1557 = vpack.c.bf16 %v1425, %v1419
        %v1558 = vpack.c.bf16 %v1426, %v1420
        %v1559 = vpack.c.bf16 %v1427, %v1421
        %v1560 = vpack.c.bf16 %v1434, %v1428
        %v1561 = vpack.c.bf16 %v1435, %v1429
        %v1562 = vpack.c.bf16 %v1436, %v1430
        %v1563 = vpack.c.bf16 %v1437, %v1431
        %v1564 = vpack.c.bf16 %v1438, %v1432
        %v1565 = vpack.c.bf16 %v1439, %v1433
        %v1566 = vpack.c.bf16 %v1446, %v1440
        %v1567 = vpack.c.bf16 %v1447, %v1441
        %v1568 = vpack.c.bf16 %v1448, %v1442
        %v1569 = vpack.c.bf16 %v1449, %v1443
        %v1570 = vpack.c.bf16 %v1450, %v1444
        %v1571 = vpack.c.bf16 %v1451, %v1445
        %v1572 = vpack.c.bf16 %v1458, %v1452
        %v1573 = vpack.c.bf16 %v1459, %v1453
        %v1574 = vpack.c.bf16 %v1460, %v1454
        %v1575 = vpack.c.bf16 %v1461, %v1455
        %v1576 = vpack.c.bf16 %v1462, %v1456
        %v1577 = vpack.c.bf16 %v1463, %v1457
        %v1578 = vpack.c.bf16 %v1470, %v1464
        %v1579 = vpack.c.bf16 %v1471, %v1465
        %v1580 = vpack.c.bf16 %v1472, %v1466
        %v1581 = vpack.c.bf16 %v1473, %v1467
        %v1582 = vpack.c.bf16 %v1474, %v1468
        %v1583 = vpack.c.bf16 %v1475, %v1469
        %v1584 = vpack.c.bf16 %v1482, %v1476
        %v1585 = vpack.c.bf16 %v1483, %v1477
        %v1586 = vpack.c.bf16 %v1484, %v1478
        %v1587 = vpack.c.bf16 %v1485, %v1479
        %v1588 = vpack.c.bf16 %v1486, %v1480
        %v1589 = vpack.c.bf16 %v1487, %v1481
        %v1590 = vpack.c.bf16 %v1494, %v1488
        %v1591 = vpack.c.bf16 %v1495, %v1489
        %v1592 = vpack.c.bf16 %v1496, %v1490
        %v1593 = vpack.c.bf16 %v1497, %v1491
        %v1594 = vpack.c.bf16 %v1498, %v1492
        %v1595 = vpack.c.bf16 %v1499, %v1493
        %v1596 = vld [vmem:[#allocation2] sm:$0xff]
        %v1597 = vld [vmem:[#allocation2 + $0x8] sm:$0xf]
        %v1598 = vld [vmem:[#allocation2 + $0xc] sm:$0xff]
        %v1599 = vld [vmem:[#allocation2 + $0x14] sm:$0xf]
        %v1600 = vld [vmem:[#allocation2 + $0x18] sm:$0xff]
        %v1601 = vld [vmem:[#allocation2 + $0x20] sm:$0xf]
        %v1602 = vld [vmem:[#allocation2 + $0x24] sm:$0xff]
        %v1603 = vld [vmem:[#allocation2 + $0x2c] sm:$0xf]
        %v1604 = vld [vmem:[#allocation2 + $0x30] sm:$0xff]
        %v1605 = vld [vmem:[#allocation2 + $0x38] sm:$0xf]
        %v1606 = vld [vmem:[#allocation2 + $0x3c] sm:$0xff]
        %v1607 = vld [vmem:[#allocation2 + $0x44] sm:$0xf]
        %v1608 = vld [vmem:[#allocation2 + $0x48] sm:$0xff]
        %v1609 = vld [vmem:[#allocation2 + $0x50] sm:$0xf]
        %v1610 = vld [vmem:[#allocation2 + $0x54] sm:$0xff]
        %v1611 = vld [vmem:[#allocation2 + $0x5c] sm:$0xf]
        %v1612 = vld [vmem:[#allocation2 + $0x60] sm:$0xff]
        %v1613 = vld [vmem:[#allocation2 + $0x68] sm:$0xf]
        %v1614 = vld [vmem:[#allocation2 + $0x6c] sm:$0xff]
        %v1615 = vld [vmem:[#allocation2 + $0x74] sm:$0xf]
        %v1616 = vld [vmem:[#allocation2 + $0x78] sm:$0xff]
        %v1617 = vld [vmem:[#allocation2 + $0x80] sm:$0xf]
        %v1618 = vld [vmem:[#allocation2 + $0x84] sm:$0xff]
        %v1619 = vld [vmem:[#allocation2 + $0x8c] sm:$0xf]
        %v1620 = vld [vmem:[#allocation2 + $0x90] sm:$0xff]
        %v1621 = vld [vmem:[#allocation2 + $0x98] sm:$0xf]
        %v1622 = vld [vmem:[#allocation2 + $0x9c] sm:$0xff]
        %v1623 = vld [vmem:[#allocation2 + $0xa4] sm:$0xf]
        %v1624 = vld [vmem:[#allocation2 + $0xa8] sm:$0xff]
        %v1625 = vld [vmem:[#allocation2 + $0xb0] sm:$0xf]
        %v1626 = vld [vmem:[#allocation2 + $0xb4] sm:$0xff]
        %v1627 = vld [vmem:[#allocation2 + $0xbc] sm:$0xf]
        %v1628 = vld [vmem:[#allocation2 + $0xc0] sm:$0xff]
        %v1629 = vld [vmem:[#allocation2 + $0xc8] sm:$0xf]
        %v1630 = vld [vmem:[#allocation2 + $0xcc] sm:$0xff]
        %v1631 = vld [vmem:[#allocation2 + $0xd4] sm:$0xf]
        %v1632 = vld [vmem:[#allocation2 + $0xd8] sm:$0xff]
        %v1633 = vld [vmem:[#allocation2 + $0xe0] sm:$0xf]
        %v1634 = vld [vmem:[#allocation2 + $0xe4] sm:$0xff]
        %v1635 = vld [vmem:[#allocation2 + $0xec] sm:$0xf]
        %v1636 = vld [vmem:[#allocation2 + $0xf0] sm:$0xff]
        %v1637 = vld [vmem:[#allocation2 + $0xf8] sm:$0xf]
        %v1638 = vld [vmem:[#allocation2 + $0xfc] sm:$0xff]
        %v1639 = vld [vmem:[#allocation2 + $0x104] sm:$0xf]
        %v1640 = vld [vmem:[#allocation2 + $0x108] sm:$0xff]
        %v1641 = vld [vmem:[#allocation2 + $0x110] sm:$0xf]
        %v1642 = vld [vmem:[#allocation2 + $0x114] sm:$0xff]
        %v1643 = vld [vmem:[#allocation2 + $0x11c] sm:$0xf]
        %v1644 = vld [vmem:[#allocation2 + $0x120] sm:$0xff]
        %v1645 = vld [vmem:[#allocation2 + $0x128] sm:$0xf]
        %v1646 = vld [vmem:[#allocation2 + $0x12c] sm:$0xff]
        %v1647 = vld [vmem:[#allocation2 + $0x134] sm:$0xf]
        %v1648 = vld [vmem:[#allocation2 + $0x138] sm:$0xff]
        %v1649 = vld [vmem:[#allocation2 + $0x140] sm:$0xf]
        %v1650 = vld [vmem:[#allocation2 + $0x144] sm:$0xff]
        %v1651 = vld [vmem:[#allocation2 + $0x14c] sm:$0xf]
        %v1652 = vld [vmem:[#allocation2 + $0x150] sm:$0xff]
        %v1653 = vld [vmem:[#allocation2 + $0x158] sm:$0xf]
        %v1654 = vld [vmem:[#allocation2 + $0x15c] sm:$0xff]
        %v1655 = vld [vmem:[#allocation2 + $0x164] sm:$0xf]
        %v1656 = vld [vmem:[#allocation2 + $0x168] sm:$0xff]
        %v1657 = vld [vmem:[#allocation2 + $0x170] sm:$0xf]
        %v1658 = vld [vmem:[#allocation2 + $0x174] sm:$0xff]
        %v1659 = vld [vmem:[#allocation2 + $0x17c] sm:$0xf]
        %v1660 = vld [vmem:[#allocation2 + $0x180] sm:$0xff]
        %v1661 = vld [vmem:[#allocation2 + $0x188] sm:$0xf]
        %v1662 = vld [vmem:[#allocation2 + $0x18c] sm:$0xff]
        %v1663 = vld [vmem:[#allocation2 + $0x194] sm:$0xf]
        %v1664 = vld [vmem:[#allocation2 + $0x198] sm:$0xff]
        %v1665 = vld [vmem:[#allocation2 + $0x1a0] sm:$0xf]
        %v1666 = vld [vmem:[#allocation2 + $0x1a4] sm:$0xff]
        %v1667 = vld [vmem:[#allocation2 + $0x1ac] sm:$0xf]
        %v1668 = vld [vmem:[#allocation2 + $0x1b0] sm:$0xff]
        %v1669 = vld [vmem:[#allocation2 + $0x1b8] sm:$0xf]
        %v1670 = vld [vmem:[#allocation2 + $0x1bc] sm:$0xff]
        %v1671 = vld [vmem:[#allocation2 + $0x1c4] sm:$0xf]
        %v1672 = vld [vmem:[#allocation2 + $0x1c8] sm:$0xff]
        %v1673 = vld [vmem:[#allocation2 + $0x1d0] sm:$0xf]
        %v1674 = vld [vmem:[#allocation2 + $0x1d4] sm:$0xff]
        %v1675 = vld [vmem:[#allocation2 + $0x1dc] sm:$0xf]
        %v1676 = vld [vmem:[#allocation2 + $0x1e0] sm:$0xff]
        %v1677 = vld [vmem:[#allocation2 + $0x1e8] sm:$0xf]
        %v1678 = vld [vmem:[#allocation2 + $0x1ec] sm:$0xff]
        %v1679 = vld [vmem:[#allocation2 + $0x1f4] sm:$0xf]
        %v1680 = vld [vmem:[#allocation2 + $0x1f8] sm:$0xff]
        %v1681 = vld [vmem:[#allocation2 + $0x200] sm:$0xf]
        %v1682 = vld [vmem:[#allocation2 + $0x204] sm:$0xff]
        %v1683 = vld [vmem:[#allocation2 + $0x20c] sm:$0xf]
        %v1684 = vld [vmem:[#allocation2 + $0x210] sm:$0xff]
        %v1685 = vld [vmem:[#allocation2 + $0x218] sm:$0xf]
        %v1686 = vld [vmem:[#allocation2 + $0x21c] sm:$0xff]
        %v1687 = vld [vmem:[#allocation2 + $0x224] sm:$0xf]
        %v1688 = vld [vmem:[#allocation2 + $0x228] sm:$0xff]
        %v1689 = vld [vmem:[#allocation2 + $0x230] sm:$0xf]
        %v1690 = vld [vmem:[#allocation2 + $0x234] sm:$0xff]
        %v1691 = vld [vmem:[#allocation2 + $0x23c] sm:$0xf]
        %v1692 = vld [vmem:[#allocation2 + $0x240] sm:$0xff]
        %v1693 = vld [vmem:[#allocation2 + $0x248] sm:$0xf]
        %v1694 = vld [vmem:[#allocation2 + $0x24c] sm:$0xff]
        %v1695 = vld [vmem:[#allocation2 + $0x254] sm:$0xf]
        %v1696 = vld [vmem:[#allocation2 + $0x258] sm:$0xff]
        %v1697 = vld [vmem:[#allocation2 + $0x260] sm:$0xf]
        %v1698 = vld [vmem:[#allocation2 + $0x264] sm:$0xff]
        %v1699 = vld [vmem:[#allocation2 + $0x26c] sm:$0xf]
        %v1700 = vld [vmem:[#allocation2 + $0x270] sm:$0xff]
        %v1701 = vld [vmem:[#allocation2 + $0x278] sm:$0xf]
        %v1702 = vld [vmem:[#allocation2 + $0x27c] sm:$0xff]
        %v1703 = vld [vmem:[#allocation2 + $0x284] sm:$0xf]
        %v1704 = vld [vmem:[#allocation2 + $0x288] sm:$0xff]
        %v1705 = vld [vmem:[#allocation2 + $0x290] sm:$0xf]
        %v1706 = vld [vmem:[#allocation2 + $0x294] sm:$0xff]
        %v1707 = vld [vmem:[#allocation2 + $0x29c] sm:$0xf]
        %v1708 = vld [vmem:[#allocation2 + $0x2a0] sm:$0xff]
        %v1709 = vld [vmem:[#allocation2 + $0x2a8] sm:$0xf]
        %v1710 = vld [vmem:[#allocation2 + $0x2ac] sm:$0xff]
        %v1711 = vld [vmem:[#allocation2 + $0x2b4] sm:$0xf]
        %v1712 = vld [vmem:[#allocation2 + $0x2b8] sm:$0xff]
        %v1713 = vld [vmem:[#allocation2 + $0x2c0] sm:$0xf]
        %v1714 = vld [vmem:[#allocation2 + $0x2c4] sm:$0xff]
        %v1715 = vld [vmem:[#allocation2 + $0x2cc] sm:$0xf]
        %v1716 = vld [vmem:[#allocation2 + $0x2d0] sm:$0xff]
        %v1717 = vld [vmem:[#allocation2 + $0x2d8] sm:$0xf]
        %v1718 = vld [vmem:[#allocation2 + $0x2dc] sm:$0xff]
        %v1719 = vld [vmem:[#allocation2 + $0x2e4] sm:$0xf]
        %v1720 = vld [vmem:[#allocation2 + $0x2e8] sm:$0xff]
        %v1721 = vld [vmem:[#allocation2 + $0x2f0] sm:$0xf]
        %v1722 = vld [vmem:[#allocation2 + $0x2f4] sm:$0xff]
        %v1723 = vld [vmem:[#allocation2 + $0x2fc] sm:$0xf]
        %v1724 = vld [vmem:[#allocation2 + $0x300] sm:$0xff]
        %v1725 = vld [vmem:[#allocation2 + $0x308] sm:$0xf]
        %v1726 = vld [vmem:[#allocation2 + $0x30c] sm:$0xff]
        %v1727 = vld [vmem:[#allocation2 + $0x314] sm:$0xf]
        %v1728 = vld [vmem:[#allocation2 + $0x318] sm:$0xff]
        %v1729 = vld [vmem:[#allocation2 + $0x320] sm:$0xf]
        %v1730 = vld [vmem:[#allocation2 + $0x324] sm:$0xff]
        %v1731 = vld [vmem:[#allocation2 + $0x32c] sm:$0xf]
        %v1732 = vld [vmem:[#allocation2 + $0x330] sm:$0xff]
        %v1733 = vld [vmem:[#allocation2 + $0x338] sm:$0xf]
        %v1734 = vld [vmem:[#allocation2 + $0x33c] sm:$0xff]
        %v1735 = vld [vmem:[#allocation2 + $0x344] sm:$0xf]
        %v1736 = vld [vmem:[#allocation2 + $0x348] sm:$0xff]
        %v1737 = vld [vmem:[#allocation2 + $0x350] sm:$0xf]
        %v1738 = vld [vmem:[#allocation2 + $0x354] sm:$0xff]
        %v1739 = vld [vmem:[#allocation2 + $0x35c] sm:$0xf]
        %v1740 = vld [vmem:[#allocation2 + $0x360] sm:$0xff]
        %v1741 = vld [vmem:[#allocation2 + $0x368] sm:$0xf]
        %v1742 = vld [vmem:[#allocation2 + $0x36c] sm:$0xff]
        %v1743 = vld [vmem:[#allocation2 + $0x374] sm:$0xf]
        %v1744 = vld [vmem:[#allocation2 + $0x378] sm:$0xff]
        %v1745 = vld [vmem:[#allocation2 + $0x380] sm:$0xf]
        %v1746 = vld [vmem:[#allocation2 + $0x384] sm:$0xff]
        %v1747 = vld [vmem:[#allocation2 + $0x38c] sm:$0xf]
        %v1748 = vld [vmem:[#allocation2 + $0x390] sm:$0xff]
        %v1749 = vld [vmem:[#allocation2 + $0x398] sm:$0xf]
        %v1750 = vld [vmem:[#allocation2 + $0x39c] sm:$0xff]
        %v1751 = vld [vmem:[#allocation2 + $0x3a4] sm:$0xf]
        %v1752 = vld [vmem:[#allocation2 + $0x3a8] sm:$0xff]
        %v1753 = vld [vmem:[#allocation2 + $0x3b0] sm:$0xf]
        %v1754 = vld [vmem:[#allocation2 + $0x3b4] sm:$0xff]
        %v1755 = vld [vmem:[#allocation2 + $0x3bc] sm:$0xf]
        %v1756 = vld [vmem:[#allocation2 + $0x3c0] sm:$0xff]
        %v1757 = vld [vmem:[#allocation2 + $0x3c8] sm:$0xf]
        %v1758 = vld [vmem:[#allocation2 + $0x3cc] sm:$0xff]
        %v1759 = vld [vmem:[#allocation2 + $0x3d4] sm:$0xf]
        %v1760 = vld [vmem:[#allocation2 + $0x3d8] sm:$0xff]
        %v1761 = vld [vmem:[#allocation2 + $0x3e0] sm:$0xf]
        %v1762 = vld [vmem:[#allocation2 + $0x3e4] sm:$0xff]
        %v1763 = vld [vmem:[#allocation2 + $0x3ec] sm:$0xf]
        %v1764 = vld [vmem:[#allocation2 + $0x3f0] sm:$0xff]
        %v1765 = vld [vmem:[#allocation2 + $0x3f8] sm:$0xf]
        %v1766 = vld [vmem:[#allocation2 + $0x3fc] sm:$0xff]
        %v1767 = vld [vmem:[#allocation2 + $0x404] sm:$0xf]
        %v1768 = vld [vmem:[#allocation2 + $0x408] sm:$0xff]
        %v1769 = vld [vmem:[#allocation2 + $0x410] sm:$0xf]
        %v1770 = vld [vmem:[#allocation2 + $0x414] sm:$0xff]
        %v1771 = vld [vmem:[#allocation2 + $0x41c] sm:$0xf]
        %v1772 = vld [vmem:[#allocation2 + $0x420] sm:$0xff]
        %v1773 = vld [vmem:[#allocation2 + $0x428] sm:$0xf]
        %v1774 = vld [vmem:[#allocation2 + $0x42c] sm:$0xff]
        %v1775 = vld [vmem:[#allocation2 + $0x434] sm:$0xf]
        %v1776 = vld [vmem:[#allocation2 + $0x438] sm:$0xff]
        %v1777 = vld [vmem:[#allocation2 + $0x440] sm:$0xf]
        %v1778 = vld [vmem:[#allocation2 + $0x444] sm:$0xff]
        %v1779 = vld [vmem:[#allocation2 + $0x44c] sm:$0xf]
        %v1780 = vld [vmem:[#allocation2 + $0x450] sm:$0xff]
        %v1781 = vld [vmem:[#allocation2 + $0x458] sm:$0xf]
        %v1782 = vld [vmem:[#allocation2 + $0x45c] sm:$0xff]
        %v1783 = vld [vmem:[#allocation2 + $0x464] sm:$0xf]
        %v1784 = vld [vmem:[#allocation2 + $0x468] sm:$0xff]
        %v1785 = vld [vmem:[#allocation2 + $0x470] sm:$0xf]
        %v1786 = vld [vmem:[#allocation2 + $0x474] sm:$0xff]
        %v1787 = vld [vmem:[#allocation2 + $0x47c] sm:$0xf]
        %v1788 = vld [vmem:[%s4] sm:$0x7]
        %v1790 = vlaneseq
        %v1791 = vshrl.u32 %v1790, 7
        %v1792 = vsub.s32 0, %v1791
        %v1793 = vrot.slane %v1788, %v1792
        %v1794 = vlaneseq
        %v1795 = vshrl.u32 %v1794, 7
        %v1796 = vsub.s32 1, %v1795
        %v1797 = vrot.slane %v1788, %v1796
        %v1798 = vlaneseq
        %v1799 = vshrl.u32 %v1798, 7
        %v1800 = vsub.s32 2, %v1799
        %v1801 = vrot.slane %v1788, %v1800
        %v1997 = vunpack.c.l.b16 %v1596
        %v1998 = vunpack.c.h.b16 %v1596
        %v1999 = vunpack.c.l.b16 %v1597
        %v2000 = vunpack.c.l.b16 %v1598
        %v2001 = vunpack.c.h.b16 %v1598
        %v2002 = vunpack.c.l.b16 %v1599
        %v2003 = vunpack.c.l.b16 %v1600
        %v2004 = vunpack.c.h.b16 %v1600
        %v2005 = vunpack.c.l.b16 %v1601
        %v2006 = vunpack.c.l.b16 %v1602
        %v2007 = vunpack.c.h.b16 %v1602
        %v2008 = vunpack.c.l.b16 %v1603
        %v2009 = vunpack.c.l.b16 %v1604
        %v2010 = vunpack.c.h.b16 %v1604
        %v2011 = vunpack.c.l.b16 %v1605
        %v2012 = vunpack.c.l.b16 %v1606
        %v2013 = vunpack.c.h.b16 %v1606
        %v2014 = vunpack.c.l.b16 %v1607
        %v2015 = vunpack.c.l.b16 %v1608
        %v2016 = vunpack.c.h.b16 %v1608
        %v2017 = vunpack.c.l.b16 %v1609
        %v2018 = vunpack.c.l.b16 %v1610
        %v2019 = vunpack.c.h.b16 %v1610
        %v2020 = vunpack.c.l.b16 %v1611
        %v2021 = vunpack.c.l.b16 %v1612
        %v2022 = vunpack.c.h.b16 %v1612
        %v2023 = vunpack.c.l.b16 %v1613
        %v2024 = vunpack.c.l.b16 %v1614
        %v2025 = vunpack.c.h.b16 %v1614
        %v2026 = vunpack.c.l.b16 %v1615
        %v2027 = vunpack.c.l.b16 %v1616
        %v2028 = vunpack.c.h.b16 %v1616
        %v2029 = vunpack.c.l.b16 %v1617
        %v2030 = vunpack.c.l.b16 %v1618
        %v2031 = vunpack.c.h.b16 %v1618
        %v2032 = vunpack.c.l.b16 %v1619
        %v2033 = vunpack.c.l.b16 %v1620
        %v2034 = vunpack.c.h.b16 %v1620
        %v2035 = vunpack.c.l.b16 %v1621
        %v2036 = vunpack.c.l.b16 %v1622
        %v2037 = vunpack.c.h.b16 %v1622
        %v2038 = vunpack.c.l.b16 %v1623
        %v2039 = vunpack.c.l.b16 %v1624
        %v2040 = vunpack.c.h.b16 %v1624
        %v2041 = vunpack.c.l.b16 %v1625
        %v2042 = vunpack.c.l.b16 %v1626
        %v2043 = vunpack.c.h.b16 %v1626
        %v2044 = vunpack.c.l.b16 %v1627
        %v2045 = vunpack.c.l.b16 %v1628
        %v2046 = vunpack.c.h.b16 %v1628
        %v2047 = vunpack.c.l.b16 %v1629
        %v2048 = vunpack.c.l.b16 %v1630
        %v2049 = vunpack.c.h.b16 %v1630
        %v2050 = vunpack.c.l.b16 %v1631
        %v2051 = vunpack.c.l.b16 %v1632
        %v2052 = vunpack.c.h.b16 %v1632
        %v2053 = vunpack.c.l.b16 %v1633
        %v2054 = vunpack.c.l.b16 %v1634
        %v2055 = vunpack.c.h.b16 %v1634
        %v2056 = vunpack.c.l.b16 %v1635
        %v2057 = vunpack.c.l.b16 %v1636
        %v2058 = vunpack.c.h.b16 %v1636
        %v2059 = vunpack.c.l.b16 %v1637
        %v2060 = vunpack.c.l.b16 %v1638
        %v2061 = vunpack.c.h.b16 %v1638
        %v2062 = vunpack.c.l.b16 %v1639
        %v2063 = vunpack.c.l.b16 %v1640
        %v2064 = vunpack.c.h.b16 %v1640
        %v2065 = vunpack.c.l.b16 %v1641
        %v2066 = vunpack.c.l.b16 %v1642
        %v2067 = vunpack.c.h.b16 %v1642
        %v2068 = vunpack.c.l.b16 %v1643
        %v2069 = vunpack.c.l.b16 %v1644
        %v2070 = vunpack.c.h.b16 %v1644
        %v2071 = vunpack.c.l.b16 %v1645
        %v2072 = vunpack.c.l.b16 %v1646
        %v2073 = vunpack.c.h.b16 %v1646
        %v2074 = vunpack.c.l.b16 %v1647
        %v2075 = vunpack.c.l.b16 %v1648
        %v2076 = vunpack.c.h.b16 %v1648
        %v2077 = vunpack.c.l.b16 %v1649
        %v2078 = vunpack.c.l.b16 %v1650
        %v2079 = vunpack.c.h.b16 %v1650
        %v2080 = vunpack.c.l.b16 %v1651
        %v2081 = vunpack.c.l.b16 %v1652
        %v2082 = vunpack.c.h.b16 %v1652
        %v2083 = vunpack.c.l.b16 %v1653
        %v2084 = vunpack.c.l.b16 %v1654
        %v2085 = vunpack.c.h.b16 %v1654
        %v2086 = vunpack.c.l.b16 %v1655
        %v2087 = vunpack.c.l.b16 %v1656
        %v2088 = vunpack.c.h.b16 %v1656
        %v2089 = vunpack.c.l.b16 %v1657
        %v2090 = vunpack.c.l.b16 %v1658
        %v2091 = vunpack.c.h.b16 %v1658
        %v2092 = vunpack.c.l.b16 %v1659
        %v2093 = vunpack.c.l.b16 %v1660
        %v2094 = vunpack.c.h.b16 %v1660
        %v2095 = vunpack.c.l.b16 %v1661
        %v2096 = vunpack.c.l.b16 %v1662
        %v2097 = vunpack.c.h.b16 %v1662
        %v2098 = vunpack.c.l.b16 %v1663
        %v2099 = vunpack.c.l.b16 %v1664
        %v2100 = vunpack.c.h.b16 %v1664
        %v2101 = vunpack.c.l.b16 %v1665
        %v2102 = vunpack.c.l.b16 %v1666
        %v2103 = vunpack.c.h.b16 %v1666
        %v2104 = vunpack.c.l.b16 %v1667
        %v2105 = vunpack.c.l.b16 %v1668
        %v2106 = vunpack.c.h.b16 %v1668
        %v2107 = vunpack.c.l.b16 %v1669
        %v2108 = vunpack.c.l.b16 %v1670
        %v2109 = vunpack.c.h.b16 %v1670
        %v2110 = vunpack.c.l.b16 %v1671
        %v2111 = vunpack.c.l.b16 %v1672
        %v2112 = vunpack.c.h.b16 %v1672
        %v2113 = vunpack.c.l.b16 %v1673
        %v2114 = vunpack.c.l.b16 %v1674
        %v2115 = vunpack.c.h.b16 %v1674
        %v2116 = vunpack.c.l.b16 %v1675
        %v2117 = vunpack.c.l.b16 %v1676
        %v2118 = vunpack.c.h.b16 %v1676
        %v2119 = vunpack.c.l.b16 %v1677
        %v2120 = vunpack.c.l.b16 %v1678
        %v2121 = vunpack.c.h.b16 %v1678
        %v2122 = vunpack.c.l.b16 %v1679
        %v2123 = vunpack.c.l.b16 %v1680
        %v2124 = vunpack.c.h.b16 %v1680
        %v2125 = vunpack.c.l.b16 %v1681
        %v2126 = vunpack.c.l.b16 %v1682
        %v2127 = vunpack.c.h.b16 %v1682
        %v2128 = vunpack.c.l.b16 %v1683
        %v2129 = vunpack.c.l.b16 %v1684
        %v2130 = vunpack.c.h.b16 %v1684
        %v2131 = vunpack.c.l.b16 %v1685
        %v2132 = vunpack.c.l.b16 %v1686
        %v2133 = vunpack.c.h.b16 %v1686
        %v2134 = vunpack.c.l.b16 %v1687
        %v2135 = vunpack.c.l.b16 %v1688
        %v2136 = vunpack.c.h.b16 %v1688
        %v2137 = vunpack.c.l.b16 %v1689
        %v2138 = vunpack.c.l.b16 %v1690
        %v2139 = vunpack.c.h.b16 %v1690
        %v2140 = vunpack.c.l.b16 %v1691
        %v2141 = vunpack.c.l.b16 %v1692
        %v2142 = vunpack.c.h.b16 %v1692
        %v2143 = vunpack.c.l.b16 %v1693
        %v2144 = vunpack.c.l.b16 %v1694
        %v2145 = vunpack.c.h.b16 %v1694
        %v2146 = vunpack.c.l.b16 %v1695
        %v2147 = vunpack.c.l.b16 %v1696
        %v2148 = vunpack.c.h.b16 %v1696
        %v2149 = vunpack.c.l.b16 %v1697
        %v2150 = vunpack.c.l.b16 %v1698
        %v2151 = vunpack.c.h.b16 %v1698
        %v2152 = vunpack.c.l.b16 %v1699
        %v2153 = vunpack.c.l.b16 %v1700
        %v2154 = vunpack.c.h.b16 %v1700
        %v2155 = vunpack.c.l.b16 %v1701
        %v2156 = vunpack.c.l.b16 %v1702
        %v2157 = vunpack.c.h.b16 %v1702
        %v2158 = vunpack.c.l.b16 %v1703
        %v2159 = vunpack.c.l.b16 %v1704
        %v2160 = vunpack.c.h.b16 %v1704
        %v2161 = vunpack.c.l.b16 %v1705
        %v2162 = vunpack.c.l.b16 %v1706
        %v2163 = vunpack.c.h.b16 %v1706
        %v2164 = vunpack.c.l.b16 %v1707
        %v2165 = vunpack.c.l.b16 %v1708
        %v2166 = vunpack.c.h.b16 %v1708
        %v2167 = vunpack.c.l.b16 %v1709
        %v2168 = vunpack.c.l.b16 %v1710
        %v2169 = vunpack.c.h.b16 %v1710
        %v2170 = vunpack.c.l.b16 %v1711
        %v2171 = vunpack.c.l.b16 %v1712
        %v2172 = vunpack.c.h.b16 %v1712
        %v2173 = vunpack.c.l.b16 %v1713
        %v2174 = vunpack.c.l.b16 %v1714
        %v2175 = vunpack.c.h.b16 %v1714
        %v2176 = vunpack.c.l.b16 %v1715
        %v2177 = vunpack.c.l.b16 %v1716
        %v2178 = vunpack.c.h.b16 %v1716
        %v2179 = vunpack.c.l.b16 %v1717
        %v2180 = vunpack.c.l.b16 %v1718
        %v2181 = vunpack.c.h.b16 %v1718
        %v2182 = vunpack.c.l.b16 %v1719
        %v2183 = vunpack.c.l.b16 %v1720
        %v2184 = vunpack.c.h.b16 %v1720
        %v2185 = vunpack.c.l.b16 %v1721
        %v2186 = vunpack.c.l.b16 %v1722
        %v2187 = vunpack.c.h.b16 %v1722
        %v2188 = vunpack.c.l.b16 %v1723
        %v2189 = vunpack.c.l.b16 %v1724
        %v2190 = vunpack.c.h.b16 %v1724
        %v2191 = vunpack.c.l.b16 %v1725
        %v2192 = vunpack.c.l.b16 %v1726
        %v2193 = vunpack.c.h.b16 %v1726
        %v2194 = vunpack.c.l.b16 %v1727
        %v2195 = vunpack.c.l.b16 %v1728
        %v2196 = vunpack.c.h.b16 %v1728
        %v2197 = vunpack.c.l.b16 %v1729
        %v2198 = vunpack.c.l.b16 %v1730
        %v2199 = vunpack.c.h.b16 %v1730
        %v2200 = vunpack.c.l.b16 %v1731
        %v2201 = vunpack.c.l.b16 %v1732
        %v2202 = vunpack.c.h.b16 %v1732
        %v2203 = vunpack.c.l.b16 %v1733
        %v2204 = vunpack.c.l.b16 %v1734
        %v2205 = vunpack.c.h.b16 %v1734
        %v2206 = vunpack.c.l.b16 %v1735
        %v2207 = vunpack.c.l.b16 %v1736
        %v2208 = vunpack.c.h.b16 %v1736
        %v2209 = vunpack.c.l.b16 %v1737
        %v2210 = vunpack.c.l.b16 %v1738
        %v2211 = vunpack.c.h.b16 %v1738
        %v2212 = vunpack.c.l.b16 %v1739
        %v2213 = vunpack.c.l.b16 %v1740
        %v2214 = vunpack.c.h.b16 %v1740
        %v2215 = vunpack.c.l.b16 %v1741
        %v2216 = vunpack.c.l.b16 %v1742
        %v2217 = vunpack.c.h.b16 %v1742
        %v2218 = vunpack.c.l.b16 %v1743
        %v2219 = vunpack.c.l.b16 %v1744
        %v2220 = vunpack.c.h.b16 %v1744
        %v2221 = vunpack.c.l.b16 %v1745
        %v2222 = vunpack.c.l.b16 %v1746
        %v2223 = vunpack.c.h.b16 %v1746
        %v2224 = vunpack.c.l.b16 %v1747
        %v2225 = vunpack.c.l.b16 %v1748
        %v2226 = vunpack.c.h.b16 %v1748
        %v2227 = vunpack.c.l.b16 %v1749
        %v2228 = vunpack.c.l.b16 %v1750
        %v2229 = vunpack.c.h.b16 %v1750
        %v2230 = vunpack.c.l.b16 %v1751
        %v2231 = vunpack.c.l.b16 %v1752
        %v2232 = vunpack.c.h.b16 %v1752
        %v2233 = vunpack.c.l.b16 %v1753
        %v2234 = vunpack.c.l.b16 %v1754
        %v2235 = vunpack.c.h.b16 %v1754
        %v2236 = vunpack.c.l.b16 %v1755
        %v2237 = vunpack.c.l.b16 %v1756
        %v2238 = vunpack.c.h.b16 %v1756
        %v2239 = vunpack.c.l.b16 %v1757
        %v2240 = vunpack.c.l.b16 %v1758
        %v2241 = vunpack.c.h.b16 %v1758
        %v2242 = vunpack.c.l.b16 %v1759
        %v2243 = vunpack.c.l.b16 %v1760
        %v2244 = vunpack.c.h.b16 %v1760
        %v2245 = vunpack.c.l.b16 %v1761
        %v2246 = vunpack.c.l.b16 %v1762
        %v2247 = vunpack.c.h.b16 %v1762
        %v2248 = vunpack.c.l.b16 %v1763
        %v2249 = vunpack.c.l.b16 %v1764
        %v2250 = vunpack.c.h.b16 %v1764
        %v2251 = vunpack.c.l.b16 %v1765
        %v2252 = vunpack.c.l.b16 %v1766
        %v2253 = vunpack.c.h.b16 %v1766
        %v2254 = vunpack.c.l.b16 %v1767
        %v2255 = vunpack.c.l.b16 %v1768
        %v2256 = vunpack.c.h.b16 %v1768
        %v2257 = vunpack.c.l.b16 %v1769
        %v2258 = vunpack.c.l.b16 %v1770
        %v2259 = vunpack.c.h.b16 %v1770
        %v2260 = vunpack.c.l.b16 %v1771
        %v2261 = vunpack.c.l.b16 %v1772
        %v2262 = vunpack.c.h.b16 %v1772
        %v2263 = vunpack.c.l.b16 %v1773
        %v2264 = vunpack.c.l.b16 %v1774
        %v2265 = vunpack.c.h.b16 %v1774
        %v2266 = vunpack.c.l.b16 %v1775
        %v2267 = vunpack.c.l.b16 %v1776
        %v2268 = vunpack.c.h.b16 %v1776
        %v2269 = vunpack.c.l.b16 %v1777
        %v2270 = vunpack.c.l.b16 %v1778
        %v2271 = vunpack.c.h.b16 %v1778
        %v2272 = vunpack.c.l.b16 %v1779
        %v2273 = vunpack.c.l.b16 %v1780
        %v2274 = vunpack.c.h.b16 %v1780
        %v2275 = vunpack.c.l.b16 %v1781
        %v2276 = vunpack.c.l.b16 %v1782
        %v2277 = vunpack.c.h.b16 %v1782
        %v2278 = vunpack.c.l.b16 %v1783
        %v2279 = vunpack.c.l.b16 %v1784
        %v2280 = vunpack.c.h.b16 %v1784
        %v2281 = vunpack.c.l.b16 %v1785
        %v2282 = vunpack.c.l.b16 %v1786
        %v2283 = vunpack.c.h.b16 %v1786
        %v2284 = vunpack.c.l.b16 %v1787
        %v2285 = vpack.c.b16 %v2000, %v1997
        %v2286 = vpack.c.b16 %v2001, %v1998
        %v2287 = vpack.c.b16 %v2002, %v1999
        %v2288 = vpack.c.b16 %v2006, %v2003
        %v2289 = vpack.c.b16 %v2007, %v2004
        %v2290 = vpack.c.b16 %v2008, %v2005
        %v2291 = vpack.c.b16 %v2012, %v2009
        %v2292 = vpack.c.b16 %v2013, %v2010
        %v2293 = vpack.c.b16 %v2014, %v2011
        %v2294 = vpack.c.b16 %v2018, %v2015
        %v2295 = vpack.c.b16 %v2019, %v2016
        %v2296 = vpack.c.b16 %v2020, %v2017
        %v2297 = vpack.c.b16 %v2024, %v2021
        %v2298 = vpack.c.b16 %v2025, %v2022
        %v2299 = vpack.c.b16 %v2026, %v2023
        %v2300 = vpack.c.b16 %v2030, %v2027
        %v2301 = vpack.c.b16 %v2031, %v2028
        %v2302 = vpack.c.b16 %v2032, %v2029
        %v2303 = vpack.c.b16 %v2036, %v2033
        %v2304 = vpack.c.b16 %v2037, %v2034
        %v2305 = vpack.c.b16 %v2038, %v2035
        %v2306 = vpack.c.b16 %v2042, %v2039
        %v2307 = vpack.c.b16 %v2043, %v2040
        %v2308 = vpack.c.b16 %v2044, %v2041
        %v2309 = vpack.c.b16 %v2048, %v2045
        %v2310 = vpack.c.b16 %v2049, %v2046
        %v2311 = vpack.c.b16 %v2050, %v2047
        %v2312 = vpack.c.b16 %v2054, %v2051
        %v2313 = vpack.c.b16 %v2055, %v2052
        %v2314 = vpack.c.b16 %v2056, %v2053
        %v2315 = vpack.c.b16 %v2060, %v2057
        %v2316 = vpack.c.b16 %v2061, %v2058
        %v2317 = vpack.c.b16 %v2062, %v2059
        %v2318 = vpack.c.b16 %v2066, %v2063
        %v2319 = vpack.c.b16 %v2067, %v2064
        %v2320 = vpack.c.b16 %v2068, %v2065
        %v2321 = vpack.c.b16 %v2072, %v2069
        %v2322 = vpack.c.b16 %v2073, %v2070
        %v2323 = vpack.c.b16 %v2074, %v2071
        %v2324 = vpack.c.b16 %v2078, %v2075
        %v2325 = vpack.c.b16 %v2079, %v2076
        %v2326 = vpack.c.b16 %v2080, %v2077
        %v2327 = vpack.c.b16 %v2084, %v2081
        %v2328 = vpack.c.b16 %v2085, %v2082
        %v2329 = vpack.c.b16 %v2086, %v2083
        %v2330 = vpack.c.b16 %v2090, %v2087
        %v2331 = vpack.c.b16 %v2091, %v2088
        %v2332 = vpack.c.b16 %v2092, %v2089
        %v2333 = vpack.c.b16 %v2096, %v2093
        %v2334 = vpack.c.b16 %v2097, %v2094
        %v2335 = vpack.c.b16 %v2098, %v2095
        %v2336 = vpack.c.b16 %v2102, %v2099
        %v2337 = vpack.c.b16 %v2103, %v2100
        %v2338 = vpack.c.b16 %v2104, %v2101
        %v2339 = vpack.c.b16 %v2108, %v2105
        %v2340 = vpack.c.b16 %v2109, %v2106
        %v2341 = vpack.c.b16 %v2110, %v2107
        %v2342 = vpack.c.b16 %v2114, %v2111
        %v2343 = vpack.c.b16 %v2115, %v2112
        %v2344 = vpack.c.b16 %v2116, %v2113
        %v2345 = vpack.c.b16 %v2120, %v2117
        %v2346 = vpack.c.b16 %v2121, %v2118
        %v2347 = vpack.c.b16 %v2122, %v2119
        %v2348 = vpack.c.b16 %v2126, %v2123
        %v2349 = vpack.c.b16 %v2127, %v2124
        %v2350 = vpack.c.b16 %v2128, %v2125
        %v2351 = vpack.c.b16 %v2132, %v2129
        %v2352 = vpack.c.b16 %v2133, %v2130
        %v2353 = vpack.c.b16 %v2134, %v2131
        %v2354 = vpack.c.b16 %v2138, %v2135
        %v2355 = vpack.c.b16 %v2139, %v2136
        %v2356 = vpack.c.b16 %v2140, %v2137
        %v2357 = vpack.c.b16 %v2144, %v2141
        %v2358 = vpack.c.b16 %v2145, %v2142
        %v2359 = vpack.c.b16 %v2146, %v2143
        %v2360 = vpack.c.b16 %v2150, %v2147
        %v2361 = vpack.c.b16 %v2151, %v2148
        %v2362 = vpack.c.b16 %v2152, %v2149
        %v2363 = vpack.c.b16 %v2156, %v2153
        %v2364 = vpack.c.b16 %v2157, %v2154
        %v2365 = vpack.c.b16 %v2158, %v2155
        %v2366 = vpack.c.b16 %v2162, %v2159
        %v2367 = vpack.c.b16 %v2163, %v2160
        %v2368 = vpack.c.b16 %v2164, %v2161
        %v2369 = vpack.c.b16 %v2168, %v2165
        %v2370 = vpack.c.b16 %v2169, %v2166
        %v2371 = vpack.c.b16 %v2170, %v2167
        %v2372 = vpack.c.b16 %v2174, %v2171
        %v2373 = vpack.c.b16 %v2175, %v2172
        %v2374 = vpack.c.b16 %v2176, %v2173
        %v2375 = vpack.c.b16 %v2180, %v2177
        %v2376 = vpack.c.b16 %v2181, %v2178
        %v2377 = vpack.c.b16 %v2182, %v2179
        %v2378 = vpack.c.b16 %v2186, %v2183
        %v2379 = vpack.c.b16 %v2187, %v2184
        %v2380 = vpack.c.b16 %v2188, %v2185
        %v2381 = vpack.c.b16 %v2192, %v2189
        %v2382 = vpack.c.b16 %v2193, %v2190
        %v2383 = vpack.c.b16 %v2194, %v2191
        %v2384 = vpack.c.b16 %v2198, %v2195
        %v2385 = vpack.c.b16 %v2199, %v2196
        %v2386 = vpack.c.b16 %v2200, %v2197
        %v2387 = vpack.c.b16 %v2204, %v2201
        %v2388 = vpack.c.b16 %v2205, %v2202
        %v2389 = vpack.c.b16 %v2206, %v2203
        %v2390 = vpack.c.b16 %v2210, %v2207
        %v2391 = vpack.c.b16 %v2211, %v2208
        %v2392 = vpack.c.b16 %v2212, %v2209
        %v2393 = vpack.c.b16 %v2216, %v2213
        %v2394 = vpack.c.b16 %v2217, %v2214
        %v2395 = vpack.c.b16 %v2218, %v2215
        %v2396 = vpack.c.b16 %v2222, %v2219
        %v2397 = vpack.c.b16 %v2223, %v2220
        %v2398 = vpack.c.b16 %v2224, %v2221
        %v2399 = vpack.c.b16 %v2228, %v2225
        %v2400 = vpack.c.b16 %v2229, %v2226
        %v2401 = vpack.c.b16 %v2230, %v2227
        %v2402 = vpack.c.b16 %v2234, %v2231
        %v2403 = vpack.c.b16 %v2235, %v2232
        %v2404 = vpack.c.b16 %v2236, %v2233
        %v2405 = vpack.c.b16 %v2240, %v2237
        %v2406 = vpack.c.b16 %v2241, %v2238
        %v2407 = vpack.c.b16 %v2242, %v2239
        %v2408 = vpack.c.b16 %v2246, %v2243
        %v2409 = vpack.c.b16 %v2247, %v2244
        %v2410 = vpack.c.b16 %v2248, %v2245
        %v2411 = vpack.c.b16 %v2252, %v2249
        %v2412 = vpack.c.b16 %v2253, %v2250
        %v2413 = vpack.c.b16 %v2254, %v2251
        %v2414 = vpack.c.b16 %v2258, %v2255
        %v2415 = vpack.c.b16 %v2259, %v2256
        %v2416 = vpack.c.b16 %v2260, %v2257
        %v2417 = vpack.c.b16 %v2264, %v2261
        %v2418 = vpack.c.b16 %v2265, %v2262
        %v2419 = vpack.c.b16 %v2266, %v2263
        %v2420 = vpack.c.b16 %v2270, %v2267
        %v2421 = vpack.c.b16 %v2271, %v2268
        %v2422 = vpack.c.b16 %v2272, %v2269
        %v2423 = vpack.c.b16 %v2276, %v2273
        %v2424 = vpack.c.b16 %v2277, %v2274
        %v2425 = vpack.c.b16 %v2278, %v2275
        %v2426 = vpack.c.b16 %v2282, %v2279
        %v2427 = vpack.c.b16 %v2283, %v2280
        %v2428 = vpack.c.b16 %v2284, %v2281
        %2573 = vmatprep.subr.bf16.mxu0 %v2286
        %2574 = vmatpush1.bf16.msra.mxu0 %v2285
        %2575 = vmatprep.subr.bf16.mxu0 %v2289
        %2576 = vmatpush1.bf16.msra.mxu0 %v2288
        %2577 = vmatprep.subr.bf16.mxu0 %v2292
        %2578 = vmatpush1.bf16.msra.mxu0 %v2291
        %2579 = vmatprep.subr.bf16.mxu0 %v2295
        %2580 = vmatpush1.bf16.msra.mxu0 %v2294
        %2581 = vmatprep.subr.bf16.mxu0 %v2298
        %2582 = vmatpush1.bf16.msra.mxu0 %v2297
        %2583 = vmatprep.subr.bf16.mxu0 %v2301
        %2584 = vmatpush1.bf16.msra.mxu0 %v2300
        %2585 = vmatprep.subr.bf16.mxu0 %v2304
        %2586 = vmatpush1.bf16.msra.mxu0 %v2303
        %2587 = vmatprep.subr.bf16.mxu0 %v2307
        %2588 = vmatpush1.bf16.msra.mxu0 %v2306
        %2589 = vmatprep.subr.bf16.mxu0 %v2310
        %2590 = vmatpush1.bf16.msra.mxu0 %v2309
        %2591 = vmatprep.subr.bf16.mxu0 %v2313
        %2592 = vmatpush1.bf16.msra.mxu0 %v2312
        %2593 = vmatprep.subr.bf16.mxu0 %v2316
        %2594 = vmatpush1.bf16.msra.mxu0 %v2315
        %2595 = vmatprep.subr.bf16.mxu0 %v2319
        %2596 = vmatpush1.bf16.msra.mxu0 %v2318
        %2597 = vmatprep.subr.bf16.mxu0 %v2322
        %2598 = vmatpush1.bf16.msra.mxu0 %v2321
        %2599 = vmatprep.subr.bf16.mxu0 %v2325
        %2600 = vmatpush1.bf16.msra.mxu0 %v2324
        %2601 = vmatprep.subr.bf16.mxu0 %v2328
        %2602 = vmatpush1.bf16.msra.mxu0 %v2327
        %2603 = vmatprep.subr.bf16.mxu0 %v2331
        %2604 = vmatpush1.bf16.msra.mxu0 %v2330
        %2605 = vmatprep.mubr.bf16.mxu0 %v1501
        %2606 = vmatmul.mubr.bf16.gmra.mrb[0].mxu0 %v1500
        %v2607 = vpop.f32.mrb[0].mxu0
        %v2608 = vadd.f32 %v1793, %v2607
        %v2609 = vpop.f32.mrb[0].mxu0
        %v2610 = vadd.f32 %v1797, %v2609
        %v2611 = vpop.f32.mrb[0].mxu0
        %v2612 = vadd.f32 %v1793, %v2611
        %v2613 = vpop.f32.mrb[0].mxu0
        %v2614 = vadd.f32 %v1797, %v2613
        %2615 = vmatprep.mubr.bf16.mxu0 %v1507
        %2616 = vmatmul.mubr.bf16.gmra.mrb[0].mxu0 %v1506
        %v2617 = vpop.f32.mrb[0].mxu0
        %v2618 = vadd.f32 %v1793, %v2617
        %v2619 = vpop.f32.mrb[0].mxu0
        %v2620 = vadd.f32 %v1797, %v2619
        %v2621 = vpop.f32.mrb[0].mxu0
        %v2622 = vadd.f32 %v1793, %v2621
        %v2623 = vpop.f32.mrb[0].mxu0
        %v2624 = vadd.f32 %v1797, %v2623
        %2625 = vmatprep.mubr.bf16.mxu0 %v1513
        %2626 = vmatmul.mubr.bf16.gmra.mrb[0].mxu0 %v1512
        %v2627 = vpop.f32.mrb[0].mxu0
        %v2628 = vadd.f32 %v1793, %v2627
        %v2629 = vpop.f32.mrb[0].mxu0
        %v2630 = vadd.f32 %v1797, %v2629
        %v2631 = vpop.f32.mrb[0].mxu0
        %v2632 = vadd.f32 %v1793, %v2631
        %v2633 = vpop.f32.mrb[0].mxu0
        %v2634 = vadd.f32 %v1797, %v2633
        %2635 = vmatprep.mubr.bf16.mxu0 %v1519
        %2636 = vmatmul.mubr.bf16.gmra.mrb[0].mxu0 %v1518
        %v2637 = vpop.f32.mrb[0].mxu0
        %v2638 = vadd.f32 %v1793, %v2637
        %v2639 = vpop.f32.mrb[0].mxu0
        %v2640 = vadd.f32 %v1797, %v2639
        %v2641 = vpop.f32.mrb[0].mxu0
        %v2642 = vadd.f32 %v1793, %v2641
        %v2643 = vpop.f32.mrb[0].mxu0
        %v2644 = vadd.f32 %v1797, %v2643
        %2645 = vmatprep.mubr.bf16.mxu0 %v1525
        %2646 = vmatmul.mubr.bf16.gmra.mrb[0].mxu0 %v1524
        %v2647 = vpop.f32.mrb[0].mxu0
        %v2648 = vadd.f32 %v1793, %v2647
        %v2649 = vpop.f32.mrb[0].mxu0
        %v2650 = vadd.f32 %v1797, %v2649
        %v2651 = vpop.f32.mrb[0].mxu0
        %v2652 = vadd.f32 %v1793, %v2651
        %v2653 = vpop.f32.mrb[0].mxu0
        %v2654 = vadd.f32 %v1797, %v2653
        %2655 = vmatprep.mubr.bf16.mxu0 %v1531
        %2656 = vmatmul.mubr.bf16.gmra.mrb[0].mxu0 %v1530
        %v2657 = vpop.f32.mrb[0].mxu0
        %v2658 = vadd.f32 %v1793, %v2657
        %v2659 = vpop.f32.mrb[0].mxu0
        %v2660 = vadd.f32 %v1797, %v2659
        %v2661 = vpop.f32.mrb[0].mxu0
        %v2662 = vadd.f32 %v1793, %v2661
        %v2663 = vpop.f32.mrb[0].mxu0
        %v2664 = vadd.f32 %v1797, %v2663
        %2665 = vmatprep.mubr.bf16.mxu0 %v1537
        %2666 = vmatmul.mubr.bf16.gmra.mrb[0].mxu0 %v1536
        %v2667 = vpop.f32.mrb[0].mxu0
        %v2668 = vadd.f32 %v1793, %v2667
        %v2669 = vpop.f32.mrb[0].mxu0
        %v2670 = vadd.f32 %v1797, %v2669
        %v2671 = vpop.f32.mrb[0].mxu0
        %v2672 = vadd.f32 %v1793, %v2671
        %v2673 = vpop.f32.mrb[0].mxu0
        %v2674 = vadd.f32 %v1797, %v2673
        %2675 = vmatprep.mubr.bf16.mxu0 %v1543
        %2676 = vmatmul.mubr.bf16.gmra.mrb[0].mxu0 %v1542
        %v2677 = vpop.f32.mrb[0].mxu0
        %v2678 = vadd.f32 %v1793, %v2677
        %v2679 = vpop.f32.mrb[0].mxu0
        %v2680 = vadd.f32 %v1797, %v2679
        %v2681 = vpop.f32.mrb[0].mxu0
        %v2682 = vadd.f32 %v1793, %v2681
        %v2683 = vpop.f32.mrb[0].mxu0
        %v2684 = vadd.f32 %v1797, %v2683
        %2685 = vmatprep.mubr.bf16.mxu0 %v1549
        %2686 = vmatmul.mubr.bf16.gmra.mrb[0].mxu0 %v1548
        %v2687 = vpop.f32.mrb[0].mxu0
        %v2688 = vadd.f32 %v1793, %v2687
        %v2689 = vpop.f32.mrb[0].mxu0
        %v2690 = vadd.f32 %v1797, %v2689
        %v2691 = vpop.f32.mrb[0].mxu0
        %v2692 = vadd.f32 %v1793, %v2691
        %v2693 = vpop.f32.mrb[0].mxu0
        %v2694 = vadd.f32 %v1797, %v2693
        %2695 = vmatprep.mubr.bf16.mxu0 %v1555
        %2696 = vmatmul.mubr.bf16.gmra.mrb[0].mxu0 %v1554
        %v2697 = vpop.f32.mrb[0].mxu0
        %v2698 = vadd.f32 %v1793, %v2697
        %v2699 = vpop.f32.mrb[0].mxu0
        %v2700 = vadd.f32 %v1797, %v2699
        %v2701 = vpop.f32.mrb[0].mxu0
        %v2702 = vadd.f32 %v1793, %v2701
        %v2703 = vpop.f32.mrb[0].mxu0
        %v2704 = vadd.f32 %v1797, %v2703
        %2705 = vmatprep.mubr.bf16.mxu0 %v1561
        %2706 = vmatmul.mubr.bf16.gmra.mrb[0].mxu0 %v1560
        %v2707 = vpop.f32.mrb[0].mxu0
        %v2708 = vadd.f32 %v1793, %v2707
        %v2709 = vpop.f32.mrb[0].mxu0
        %v2710 = vadd.f32 %v1797, %v2709
        %v2711 = vpop.f32.mrb[0].mxu0
        %v2712 = vadd.f32 %v1793, %v2711
        %v2713 = vpop.f32.mrb[0].mxu0
        %v2714 = vadd.f32 %v1797, %v2713
        %2715 = vmatprep.mubr.bf16.mxu0 %v1567
        %2716 = vmatmul.mubr.bf16.gmra.mrb[0].mxu0 %v1566
        %v2717 = vpop.f32.mrb[0].mxu0
        %v2718 = vadd.f32 %v1793, %v2717
        %v2719 = vpop.f32.mrb[0].mxu0
        %v2720 = vadd.f32 %v1797, %v2719
        %v2721 = vpop.f32.mrb[0].mxu0
        %v2722 = vadd.f32 %v1793, %v2721
        %v2723 = vpop.f32.mrb[0].mxu0
        %v2724 = vadd.f32 %v1797, %v2723
        %2725 = vmatprep.mubr.bf16.mxu0 %v1573
        %2726 = vmatmul.mubr.bf16.gmra.mrb[0].mxu0 %v1572
        %v2727 = vpop.f32.mrb[0].mxu0
        %v2728 = vadd.f32 %v1793, %v2727
        %v2729 = vpop.f32.mrb[0].mxu0
        %v2730 = vadd.f32 %v1797, %v2729
        %v2731 = vpop.f32.mrb[0].mxu0
        %v2732 = vadd.f32 %v1793, %v2731
        %v2733 = vpop.f32.mrb[0].mxu0
        %v2734 = vadd.f32 %v1797, %v2733
        %2735 = vmatprep.mubr.bf16.mxu0 %v1579
        %2736 = vmatmul.mubr.bf16.gmra.mrb[0].mxu0 %v1578
        %v2737 = vpop.f32.mrb[0].mxu0
        %v2738 = vadd.f32 %v1793, %v2737
        %v2739 = vpop.f32.mrb[0].mxu0
        %v2740 = vadd.f32 %v1797, %v2739
        %v2741 = vpop.f32.mrb[0].mxu0
        %v2742 = vadd.f32 %v1793, %v2741
        %v2743 = vpop.f32.mrb[0].mxu0
        %v2744 = vadd.f32 %v1797, %v2743
        %2745 = vmatprep.mubr.bf16.mxu0 %v1585
        %2746 = vmatmul.mubr.bf16.gmra.mrb[0].mxu0 %v1584
        %v2747 = vpop.f32.mrb[0].mxu0
        %v2748 = vadd.f32 %v1793, %v2747
        %v2749 = vpop.f32.mrb[0].mxu0
        %v2750 = vadd.f32 %v1797, %v2749
        %v2751 = vpop.f32.mrb[0].mxu0
        %v2752 = vadd.f32 %v1793, %v2751
        %v2753 = vpop.f32.mrb[0].mxu0
        %v2754 = vadd.f32 %v1797, %v2753
        %2755 = vmatprep.mubr.bf16.mxu0 %v1591
        %2756 = vmatmul.mubr.bf16.gmra.mrb[0].mxu0 %v1590
        %v2757 = vpop.f32.mrb[0].mxu0
        %v2758 = vadd.f32 %v1793, %v2757
        %v2759 = vpop.f32.mrb[0].mxu0
        %v2760 = vadd.f32 %v1797, %v2759
        %v2761 = vpop.f32.mrb[0].mxu0
        %v2762 = vadd.f32 %v1793, %v2761
        %v2763 = vpop.f32.mrb[0].mxu0
        %v2764 = vadd.f32 %v1797, %v2763
        %2765 = vdwg.mxu0
        %2766 = vmatprep.subr.bf16.mxu0 %v2334
        %2767 = vmatpush1.bf16.msra.mxu0 %v2333
        %2768 = vmatprep.subr.bf16.mxu0 %v2337
        %2769 = vmatpush1.bf16.msra.mxu0 %v2336
        %2770 = vmatprep.subr.bf16.mxu0 %v2340
        %2771 = vmatpush1.bf16.msra.mxu0 %v2339
        %2772 = vmatprep.subr.bf16.mxu0 %v2343
        %2773 = vmatpush1.bf16.msra.mxu0 %v2342
        %2774 = vmatprep.subr.bf16.mxu0 %v2346
        %2775 = vmatpush1.bf16.msra.mxu0 %v2345
        %2776 = vmatprep.subr.bf16.mxu0 %v2349
        %2777 = vmatpush1.bf16.msra.mxu0 %v2348
        %2778 = vmatprep.subr.bf16.mxu0 %v2352
        %2779 = vmatpush1.bf16.msra.mxu0 %v2351
        %2780 = vmatprep.subr.bf16.mxu0 %v2355
        %2781 = vmatpush1.bf16.msra.mxu0 %v2354
        %2782 = vmatprep.subr.bf16.mxu0 %v2358
        %2783 = vmatpush1.bf16.msra.mxu0 %v2357
        %2784 = vmatprep.subr.bf16.mxu0 %v2361
        %2785 = vmatpush1.bf16.msra.mxu0 %v2360
        %2786 = vmatprep.subr.bf16.mxu0 %v2364
        %2787 = vmatpush1.bf16.msra.mxu0 %v2363
        %2788 = vmatprep.subr.bf16.mxu0 %v2367
        %2789 = vmatpush1.bf16.msra.mxu0 %v2366
        %2790 = vmatprep.subr.bf16.mxu0 %v2370
        %2791 = vmatpush1.bf16.msra.mxu0 %v2369
        %2792 = vmatprep.subr.bf16.mxu0 %v2373
        %2793 = vmatpush1.bf16.msra.mxu0 %v2372
        %2794 = vmatprep.subr.bf16.mxu0 %v2376
        %2795 = vmatpush1.bf16.msra.mxu0 %v2375
        %2796 = vmatprep.subr.bf16.mxu0 %v2379
        %2797 = vmatpush1.bf16.msra.mxu0 %v2378
        %2798 = vmatprep.mubr.bf16.mxu0 %v1503
        %2799 = vmatmul.mubr.bf16.gmra.mrb[0].mxu0 %v1502
        %v2800 = vpop.f32.mrb[0].mxu0
        %v2801 = vadd.f32 %v2608, %v2800
        %v2802 = vpop.f32.mrb[0].mxu0
        %v2803 = vadd.f32 %v2610, %v2802
        %v2804 = vpop.f32.mrb[0].mxu0
        %v2805 = vadd.f32 %v2612, %v2804
        %v2806 = vpop.f32.mrb[0].mxu0
        %v2807 = vadd.f32 %v2614, %v2806
        %2808 = vmatprep.mubr.bf16.mxu0 %v1509
        %2809 = vmatmul.mubr.bf16.gmra.mrb[0].mxu0 %v1508
        %v2810 = vpop.f32.mrb[0].mxu0
        %v2811 = vadd.f32 %v2618, %v2810
        %v2812 = vpop.f32.mrb[0].mxu0
        %v2813 = vadd.f32 %v2620, %v2812
        %v2814 = vpop.f32.mrb[0].mxu0
        %v2815 = vadd.f32 %v2622, %v2814
        %v2816 = vpop.f32.mrb[0].mxu0
        %v2817 = vadd.f32 %v2624, %v2816
        %2818 = vmatprep.mubr.bf16.mxu0 %v1515
        %2819 = vmatmul.mubr.bf16.gmra.mrb[0].mxu0 %v1514
        %v2820 = vpop.f32.mrb[0].mxu0
        %v2821 = vadd.f32 %v2628, %v2820
        %v2822 = vpop.f32.mrb[0].mxu0
        %v2823 = vadd.f32 %v2630, %v2822
        %v2824 = vpop.f32.mrb[0].mxu0
        %v2825 = vadd.f32 %v2632, %v2824
        %v2826 = vpop.f32.mrb[0].mxu0
        %v2827 = vadd.f32 %v2634, %v2826
        %2828 = vmatprep.mubr.bf16.mxu0 %v1521
        %2829 = vmatmul.mubr.bf16.gmra.mrb[0].mxu0 %v1520
        %v2830 = vpop.f32.mrb[0].mxu0
        %v2831 = vadd.f32 %v2638, %v2830
        %v2832 = vpop.f32.mrb[0].mxu0
        %v2833 = vadd.f32 %v2640, %v2832
        %v2834 = vpop.f32.mrb[0].mxu0
        %v2835 = vadd.f32 %v2642, %v2834
        %v2836 = vpop.f32.mrb[0].mxu0
        %v2837 = vadd.f32 %v2644, %v2836
        %2838 = vmatprep.mubr.bf16.mxu0 %v1527
        %2839 = vmatmul.mubr.bf16.gmra.mrb[0].mxu0 %v1526
        %v2840 = vpop.f32.mrb[0].mxu0
        %v2841 = vadd.f32 %v2648, %v2840
        %v2842 = vpop.f32.mrb[0].mxu0
        %v2843 = vadd.f32 %v2650, %v2842
        %v2844 = vpop.f32.mrb[0].mxu0
        %v2845 = vadd.f32 %v2652, %v2844
        %v2846 = vpop.f32.mrb[0].mxu0
        %v2847 = vadd.f32 %v2654, %v2846
        %2848 = vmatprep.mubr.bf16.mxu0 %v1533
        %2849 = vmatmul.mubr.bf16.gmra.mrb[0].mxu0 %v1532
        %v2850 = vpop.f32.mrb[0].mxu0
        %v2851 = vadd.f32 %v2658, %v2850
        %v2852 = vpop.f32.mrb[0].mxu0
        %v2853 = vadd.f32 %v2660, %v2852
        %v2854 = vpop.f32.mrb[0].mxu0
        %v2855 = vadd.f32 %v2662, %v2854
        %v2856 = vpop.f32.mrb[0].mxu0
        %v2857 = vadd.f32 %v2664, %v2856
        %2858 = vmatprep.mubr.bf16.mxu0 %v1539
        %2859 = vmatmul.mubr.bf16.gmra.mrb[0].mxu0 %v1538
        %v2860 = vpop.f32.mrb[0].mxu0
        %v2861 = vadd.f32 %v2668, %v2860
        %v2862 = vpop.f32.mrb[0].mxu0
        %v2863 = vadd.f32 %v2670, %v2862
        %v2864 = vpop.f32.mrb[0].mxu0
        %v2865 = vadd.f32 %v2672, %v2864
        %v2866 = vpop.f32.mrb[0].mxu0
        %v2867 = vadd.f32 %v2674, %v2866
        %2868 = vmatprep.mubr.bf16.mxu0 %v1545
        %2869 = vmatmul.mubr.bf16.gmra.mrb[0].mxu0 %v1544
        %v2870 = vpop.f32.mrb[0].mxu0
        %v2871 = vadd.f32 %v2678, %v2870
        %v2872 = vpop.f32.mrb[0].mxu0
        %v2873 = vadd.f32 %v2680, %v2872
        %v2874 = vpop.f32.mrb[0].mxu0
        %v2875 = vadd.f32 %v2682, %v2874
        %v2876 = vpop.f32.mrb[0].mxu0
        %v2877 = vadd.f32 %v2684, %v2876
        %2878 = vmatprep.mubr.bf16.mxu0 %v1551
        %2879 = vmatmul.mubr.bf16.gmra.mrb[0].mxu0 %v1550
        %v2880 = vpop.f32.mrb[0].mxu0
        %v2881 = vadd.f32 %v2688, %v2880
        %v2882 = vpop.f32.mrb[0].mxu0
        %v2883 = vadd.f32 %v2690, %v2882
        %v2884 = vpop.f32.mrb[0].mxu0
        %v2885 = vadd.f32 %v2692, %v2884
        %v2886 = vpop.f32.mrb[0].mxu0
        %v2887 = vadd.f32 %v2694, %v2886
        %2888 = vmatprep.mubr.bf16.mxu0 %v1557
        %2889 = vmatmul.mubr.bf16.gmra.mrb[0].mxu0 %v1556
        %v2890 = vpop.f32.mrb[0].mxu0
        %v2891 = vadd.f32 %v2698, %v2890
        %v2892 = vpop.f32.mrb[0].mxu0
        %v2893 = vadd.f32 %v2700, %v2892
        %v2894 = vpop.f32.mrb[0].mxu0
        %v2895 = vadd.f32 %v2702, %v2894
        %v2896 = vpop.f32.mrb[0].mxu0
        %v2897 = vadd.f32 %v2704, %v2896
        %2898 = vmatprep.mubr.bf16.mxu0 %v1563
        %2899 = vmatmul.mubr.bf16.gmra.mrb[0].mxu0 %v1562
        %v2900 = vpop.f32.mrb[0].mxu0
        %v2901 = vadd.f32 %v2708, %v2900
        %v2902 = vpop.f32.mrb[0].mxu0
        %v2903 = vadd.f32 %v2710, %v2902
        %v2904 = vpop.f32.mrb[0].mxu0
        %v2905 = vadd.f32 %v2712, %v2904
        %v2906 = vpop.f32.mrb[0].mxu0
        %v2907 = vadd.f32 %v2714, %v2906
        %2908 = vmatprep.mubr.bf16.mxu0 %v1569
        %2909 = vmatmul.mubr.bf16.gmra.mrb[0].mxu0 %v1568
        %v2910 = vpop.f32.mrb[0].mxu0
        %v2911 = vadd.f32 %v2718, %v2910
        %v2912 = vpop.f32.mrb[0].mxu0
        %v2913 = vadd.f32 %v2720, %v2912
        %v2914 = vpop.f32.mrb[0].mxu0
        %v2915 = vadd.f32 %v2722, %v2914
        %v2916 = vpop.f32.mrb[0].mxu0
        %v2917 = vadd.f32 %v2724, %v2916
        %2918 = vmatprep.mubr.bf16.mxu0 %v1575
        %2919 = vmatmul.mubr.bf16.gmra.mrb[0].mxu0 %v1574
        %v2920 = vpop.f32.mrb[0].mxu0
        %v2921 = vadd.f32 %v2728, %v2920
        %v2922 = vpop.f32.mrb[0].mxu0
        %v2923 = vadd.f32 %v2730, %v2922
        %v2924 = vpop.f32.mrb[0].mxu0
        %v2925 = vadd.f32 %v2732, %v2924
        %v2926 = vpop.f32.mrb[0].mxu0
        %v2927 = vadd.f32 %v2734, %v2926
        %2928 = vmatprep.mubr.bf16.mxu0 %v1581
        %2929 = vmatmul.mubr.bf16.gmra.mrb[0].mxu0 %v1580
        %v2930 = vpop.f32.mrb[0].mxu0
        %v2931 = vadd.f32 %v2738, %v2930
        %v2932 = vpop.f32.mrb[0].mxu0
        %v2933 = vadd.f32 %v2740, %v2932
        %v2934 = vpop.f32.mrb[0].mxu0
        %v2935 = vadd.f32 %v2742, %v2934
        %v2936 = vpop.f32.mrb[0].mxu0
        %v2937 = vadd.f32 %v2744, %v2936
        %2938 = vmatprep.mubr.bf16.mxu0 %v1587
        %2939 = vmatmul.mubr.bf16.gmra.mrb[0].mxu0 %v1586
        %v2940 = vpop.f32.mrb[0].mxu0
        %v2941 = vadd.f32 %v2748, %v2940
        %v2942 = vpop.f32.mrb[0].mxu0
        %v2943 = vadd.f32 %v2750, %v2942
        %v2944 = vpop.f32.mrb[0].mxu0
        %v2945 = vadd.f32 %v2752, %v2944
        %v2946 = vpop.f32.mrb[0].mxu0
        %v2947 = vadd.f32 %v2754, %v2946
        %2948 = vmatprep.mubr.bf16.mxu0 %v1593
        %2949 = vmatmul.mubr.bf16.gmra.mrb[0].mxu0 %v1592
        %v2950 = vpop.f32.mrb[0].mxu0
        %v2951 = vadd.f32 %v2758, %v2950
        %v2952 = vpop.f32.mrb[0].mxu0
        %v2953 = vadd.f32 %v2760, %v2952
        %v2954 = vpop.f32.mrb[0].mxu0
        %v2955 = vadd.f32 %v2762, %v2954
        %v2956 = vpop.f32.mrb[0].mxu0
        %v2957 = vadd.f32 %v2764, %v2956
        %2958 = vdwg.mxu0
        %2959 = vmatprep.subr.bf16.mxu0 %v2382
        %2960 = vmatpush1.bf16.msra.mxu0 %v2381
        %2961 = vmatprep.subr.bf16.mxu0 %v2385
        %2962 = vmatpush1.bf16.msra.mxu0 %v2384
        %2963 = vmatprep.subr.bf16.mxu0 %v2388
        %2964 = vmatpush1.bf16.msra.mxu0 %v2387
        %2965 = vmatprep.subr.bf16.mxu0 %v2391
        %2966 = vmatpush1.bf16.msra.mxu0 %v2390
        %2967 = vmatprep.subr.bf16.mxu0 %v2394
        %2968 = vmatpush1.bf16.msra.mxu0 %v2393
        %2969 = vmatprep.subr.bf16.mxu0 %v2397
        %2970 = vmatpush1.bf16.msra.mxu0 %v2396
        %2971 = vmatprep.subr.bf16.mxu0 %v2400
        %2972 = vmatpush1.bf16.msra.mxu0 %v2399
        %2973 = vmatprep.subr.bf16.mxu0 %v2403
        %2974 = vmatpush1.bf16.msra.mxu0 %v2402
        %2975 = vmatprep.subr.bf16.mxu0 %v2406
        %2976 = vmatpush1.bf16.msra.mxu0 %v2405
        %2977 = vmatprep.subr.bf16.mxu0 %v2409
        %2978 = vmatpush1.bf16.msra.mxu0 %v2408
        %2979 = vmatprep.subr.bf16.mxu0 %v2412
        %2980 = vmatpush1.bf16.msra.mxu0 %v2411
        %2981 = vmatprep.subr.bf16.mxu0 %v2415
        %2982 = vmatpush1.bf16.msra.mxu0 %v2414
        %2983 = vmatprep.subr.bf16.mxu0 %v2418
        %2984 = vmatpush1.bf16.msra.mxu0 %v2417
        %2985 = vmatprep.subr.bf16.mxu0 %v2421
        %2986 = vmatpush1.bf16.msra.mxu0 %v2420
        %2987 = vmatprep.subr.bf16.mxu0 %v2424
        %2988 = vmatpush1.bf16.msra.mxu0 %v2423
        %2989 = vmatprep.subr.bf16.mxu0 %v2427
        %2990 = vmatpush1.bf16.msra.mxu0 %v2426
        %2991 = vmatprep.mubr.bf16.mxu0 %v1505
        %2992 = vmatmul.mubr.bf16.gmra.mrb[0].mxu0 %v1504
        %v2993 = vpop.f32.mrb[0].mxu0
        %v2994 = vadd.f32 %v2801, %v2993
        %v2995 = vpop.f32.mrb[0].mxu0
        %v2996 = vadd.f32 %v2803, %v2995
        %v2997 = vpop.f32.mrb[0].mxu0
        %v2998 = vadd.f32 %v2805, %v2997
        %v2999 = vpop.f32.mrb[0].mxu0
        %v3000 = vadd.f32 %v2807, %v2999
        %3001 = vmatprep.mubr.bf16.mxu0 %v1511
        %3002 = vmatmul.mubr.bf16.gmra.mrb[0].mxu0 %v1510
        %v3003 = vpop.f32.mrb[0].mxu0
        %v3004 = vadd.f32 %v2811, %v3003
        %v3005 = vpop.f32.mrb[0].mxu0
        %v3006 = vadd.f32 %v2813, %v3005
        %v3007 = vpop.f32.mrb[0].mxu0
        %v3008 = vadd.f32 %v2815, %v3007
        %v3009 = vpop.f32.mrb[0].mxu0
        %v3010 = vadd.f32 %v2817, %v3009
        %3011 = vmatprep.mubr.bf16.mxu0 %v1517
        %3012 = vmatmul.mubr.bf16.gmra.mrb[0].mxu0 %v1516
        %v3013 = vpop.f32.mrb[0].mxu0
        %v3014 = vadd.f32 %v2821, %v3013
        %v3015 = vpop.f32.mrb[0].mxu0
        %v3016 = vadd.f32 %v2823, %v3015
        %v3017 = vpop.f32.mrb[0].mxu0
        %v3018 = vadd.f32 %v2825, %v3017
        %v3019 = vpop.f32.mrb[0].mxu0
        %v3020 = vadd.f32 %v2827, %v3019
        %3021 = vmatprep.mubr.bf16.mxu0 %v1523
        %3022 = vmatmul.mubr.bf16.gmra.mrb[0].mxu0 %v1522
        %v3023 = vpop.f32.mrb[0].mxu0
        %v3024 = vadd.f32 %v2831, %v3023
        %v3025 = vpop.f32.mrb[0].mxu0
        %v3026 = vadd.f32 %v2833, %v3025
        %v3027 = vpop.f32.mrb[0].mxu0
        %v3028 = vadd.f32 %v2835, %v3027
        %v3029 = vpop.f32.mrb[0].mxu0
        %v3030 = vadd.f32 %v2837, %v3029
        %3031 = vmatprep.mubr.bf16.mxu0 %v1529
        %3032 = vmatmul.mubr.bf16.gmra.mrb[0].mxu0 %v1528
        %v3033 = vpop.f32.mrb[0].mxu0
        %v3034 = vadd.f32 %v2841, %v3033
        %v3035 = vpop.f32.mrb[0].mxu0
        %v3036 = vadd.f32 %v2843, %v3035
        %v3037 = vpop.f32.mrb[0].mxu0
        %v3038 = vadd.f32 %v2845, %v3037
        %v3039 = vpop.f32.mrb[0].mxu0
        %v3040 = vadd.f32 %v2847, %v3039
        %3041 = vmatprep.mubr.bf16.mxu0 %v1535
        %3042 = vmatmul.mubr.bf16.gmra.mrb[0].mxu0 %v1534
        %v3043 = vpop.f32.mrb[0].mxu0
        %v3044 = vadd.f32 %v2851, %v3043
        %v3045 = vpop.f32.mrb[0].mxu0
        %v3046 = vadd.f32 %v2853, %v3045
        %v3047 = vpop.f32.mrb[0].mxu0
        %v3048 = vadd.f32 %v2855, %v3047
        %v3049 = vpop.f32.mrb[0].mxu0
        %v3050 = vadd.f32 %v2857, %v3049
        %3051 = vmatprep.mubr.bf16.mxu0 %v1541
        %3052 = vmatmul.mubr.bf16.gmra.mrb[0].mxu0 %v1540
        %v3053 = vpop.f32.mrb[0].mxu0
        %v3054 = vadd.f32 %v2861, %v3053
        %v3055 = vpop.f32.mrb[0].mxu0
        %v3056 = vadd.f32 %v2863, %v3055
        %v3057 = vpop.f32.mrb[0].mxu0
        %v3058 = vadd.f32 %v2865, %v3057
        %v3059 = vpop.f32.mrb[0].mxu0
        %v3060 = vadd.f32 %v2867, %v3059
        %3061 = vmatprep.mubr.bf16.mxu0 %v1547
        %3062 = vmatmul.mubr.bf16.gmra.mrb[0].mxu0 %v1546
        %v3063 = vpop.f32.mrb[0].mxu0
        %v3064 = vadd.f32 %v2871, %v3063
        %v3065 = vpop.f32.mrb[0].mxu0
        %v3066 = vadd.f32 %v2873, %v3065
        %v3067 = vpop.f32.mrb[0].mxu0
        %v3068 = vadd.f32 %v2875, %v3067
        %v3069 = vpop.f32.mrb[0].mxu0
        %v3070 = vadd.f32 %v2877, %v3069
        %3071 = vmatprep.mubr.bf16.mxu0 %v1553
        %3072 = vmatmul.mubr.bf16.gmra.mrb[0].mxu0 %v1552
        %v3073 = vpop.f32.mrb[0].mxu0
        %v3074 = vadd.f32 %v2881, %v3073
        %v3075 = vpop.f32.mrb[0].mxu0
        %v3076 = vadd.f32 %v2883, %v3075
        %v3077 = vpop.f32.mrb[0].mxu0
        %v3078 = vadd.f32 %v2885, %v3077
        %v3079 = vpop.f32.mrb[0].mxu0
        %v3080 = vadd.f32 %v2887, %v3079
        %3081 = vmatprep.mubr.bf16.mxu0 %v1559
        %3082 = vmatmul.mubr.bf16.gmra.mrb[0].mxu0 %v1558
        %v3083 = vpop.f32.mrb[0].mxu0
        %v3084 = vadd.f32 %v2891, %v3083
        %v3085 = vpop.f32.mrb[0].mxu0
        %v3086 = vadd.f32 %v2893, %v3085
        %v3087 = vpop.f32.mrb[0].mxu0
        %v3088 = vadd.f32 %v2895, %v3087
        %v3089 = vpop.f32.mrb[0].mxu0
        %v3090 = vadd.f32 %v2897, %v3089
        %3091 = vmatprep.mubr.bf16.mxu0 %v1565
        %3092 = vmatmul.mubr.bf16.gmra.mrb[0].mxu0 %v1564
        %v3093 = vpop.f32.mrb[0].mxu0
        %v3094 = vadd.f32 %v2901, %v3093
        %v3095 = vpop.f32.mrb[0].mxu0
        %v3096 = vadd.f32 %v2903, %v3095
        %v3097 = vpop.f32.mrb[0].mxu0
        %v3098 = vadd.f32 %v2905, %v3097
        %v3099 = vpop.f32.mrb[0].mxu0
        %v3100 = vadd.f32 %v2907, %v3099
        %3101 = vmatprep.mubr.bf16.mxu0 %v1571
        %3102 = vmatmul.mubr.bf16.gmra.mrb[0].mxu0 %v1570
        %v3103 = vpop.f32.mrb[0].mxu0
        %v3104 = vadd.f32 %v2911, %v3103
        %v3105 = vpop.f32.mrb[0].mxu0
        %v3106 = vadd.f32 %v2913, %v3105
        %v3107 = vpop.f32.mrb[0].mxu0
        %v3108 = vadd.f32 %v2915, %v3107
        %v3109 = vpop.f32.mrb[0].mxu0
        %v3110 = vadd.f32 %v2917, %v3109
        %3111 = vmatprep.mubr.bf16.mxu0 %v1577
        %3112 = vmatmul.mubr.bf16.gmra.mrb[0].mxu0 %v1576
        %v3113 = vpop.f32.mrb[0].mxu0
        %v3114 = vadd.f32 %v2921, %v3113
        %v3115 = vpop.f32.mrb[0].mxu0
        %v3116 = vadd.f32 %v2923, %v3115
        %v3117 = vpop.f32.mrb[0].mxu0
        %v3118 = vadd.f32 %v2925, %v3117
        %v3119 = vpop.f32.mrb[0].mxu0
        %v3120 = vadd.f32 %v2927, %v3119
        %3121 = vmatprep.mubr.bf16.mxu0 %v1583
        %3122 = vmatmul.mubr.bf16.gmra.mrb[0].mxu0 %v1582
        %v3123 = vpop.f32.mrb[0].mxu0
        %v3124 = vadd.f32 %v2931, %v3123
        %v3125 = vpop.f32.mrb[0].mxu0
        %v3126 = vadd.f32 %v2933, %v3125
        %v3127 = vpop.f32.mrb[0].mxu0
        %v3128 = vadd.f32 %v2935, %v3127
        %v3129 = vpop.f32.mrb[0].mxu0
        %v3130 = vadd.f32 %v2937, %v3129
        %3131 = vmatprep.mubr.bf16.mxu0 %v1589
        %3132 = vmatmul.mubr.bf16.gmra.mrb[0].mxu0 %v1588
        %v3133 = vpop.f32.mrb[0].mxu0
        %v3134 = vadd.f32 %v2941, %v3133
        %v3135 = vpop.f32.mrb[0].mxu0
        %v3136 = vadd.f32 %v2943, %v3135
        %v3137 = vpop.f32.mrb[0].mxu0
        %v3138 = vadd.f32 %v2945, %v3137
        %v3139 = vpop.f32.mrb[0].mxu0
        %v3140 = vadd.f32 %v2947, %v3139
        %3141 = vmatprep.mubr.bf16.mxu0 %v1595
        %3142 = vmatmul.mubr.bf16.gmra.mrb[0].mxu0 %v1594
        %v3143 = vpop.f32.mrb[0].mxu0
        %v3144 = vadd.f32 %v2951, %v3143
        %v3145 = vpop.f32.mrb[0].mxu0
        %v3146 = vadd.f32 %v2953, %v3145
        %v3147 = vpop.f32.mrb[0].mxu0
        %v3148 = vadd.f32 %v2955, %v3147
        %v3149 = vpop.f32.mrb[0].mxu0
        %v3150 = vadd.f32 %v2957, %v3149
        %3151 = vdwg.mxu0
        %3152 = vmatprep.subr.bf16.mxu0 0
        %3153 = vmatpush1.bf16.msra.mxu0 %v2287
        %3154 = vmatprep.subr.bf16.mxu0 0
        %3155 = vmatpush1.bf16.msra.mxu0 %v2290
        %3156 = vmatprep.subr.bf16.mxu0 0
        %3157 = vmatpush1.bf16.msra.mxu0 %v2293
        %3158 = vmatprep.subr.bf16.mxu0 0
        %3159 = vmatpush1.bf16.msra.mxu0 %v2296
        %3160 = vmatprep.subr.bf16.mxu0 0
        %3161 = vmatpush1.bf16.msra.mxu0 %v2299
        %3162 = vmatprep.subr.bf16.mxu0 0
        %3163 = vmatpush1.bf16.msra.mxu0 %v2302
        %3164 = vmatprep.subr.bf16.mxu0 0
        %3165 = vmatpush1.bf16.msra.mxu0 %v2305
        %3166 = vmatprep.subr.bf16.mxu0 0
        %3167 = vmatpush1.bf16.msra.mxu0 %v2308
        %3168 = vmatprep.subr.bf16.mxu0 0
        %3169 = vmatpush1.bf16.msra.mxu0 %v2311
        %3170 = vmatprep.subr.bf16.mxu0 0
        %3171 = vmatpush1.bf16.msra.mxu0 %v2314
        %3172 = vmatprep.subr.bf16.mxu0 0
        %3173 = vmatpush1.bf16.msra.mxu0 %v2317
        %3174 = vmatprep.subr.bf16.mxu0 0
        %3175 = vmatpush1.bf16.msra.mxu0 %v2320
        %3176 = vmatprep.subr.bf16.mxu0 0
        %3177 = vmatpush1.bf16.msra.mxu0 %v2323
        %3178 = vmatprep.subr.bf16.mxu0 0
        %3179 = vmatpush1.bf16.msra.mxu0 %v2326
        %3180 = vmatprep.subr.bf16.mxu0 0
        %3181 = vmatpush1.bf16.msra.mxu0 %v2329
        %3182 = vmatprep.subr.bf16.mxu0 0
        %3183 = vmatpush1.bf16.msra.mxu0 %v2332
        %3184 = vmatprep.mubr.bf16.mxu0 %v1501
        %3185 = vmatmul.mubr.bf16.gmra.mrb[0].mxu0 %v1500
        %v3186 = vpop.f32.mrb[0].mxu0
        %v3187 = vadd.f32 %v1801, %v3186
        %v3188 = vpop.f32.mrb[0].mxu0
        %v3189 = vpop.f32.mrb[0].mxu0
        %v3190 = vadd.f32 %v1801, %v3189
        %v3191 = vpop.f32.mrb[0].mxu0
        %3192 = vmatprep.mubr.bf16.mxu0 %v1507
        %3193 = vmatmul.mubr.bf16.gmra.mrb[0].mxu0 %v1506
        %v3194 = vpop.f32.mrb[0].mxu0
        %v3195 = vadd.f32 %v1801, %v3194
        %v3196 = vpop.f32.mrb[0].mxu0
        %v3197 = vpop.f32.mrb[0].mxu0
        %v3198 = vadd.f32 %v1801, %v3197
        %v3199 = vpop.f32.mrb[0].mxu0
        %3200 = vmatprep.mubr.bf16.mxu0 %v1513
        %3201 = vmatmul.mubr.bf16.gmra.mrb[0].mxu0 %v1512
        %v3202 = vpop.f32.mrb[0].mxu0
        %v3203 = vadd.f32 %v1801, %v3202
        %v3204 = vpop.f32.mrb[0].mxu0
        %v3205 = vpop.f32.mrb[0].mxu0
        %v3206 = vadd.f32 %v1801, %v3205
        %v3207 = vpop.f32.mrb[0].mxu0
        %3208 = vmatprep.mubr.bf16.mxu0 %v1519
        %3209 = vmatmul.mubr.bf16.gmra.mrb[0].mxu0 %v1518
        %v3210 = vpop.f32.mrb[0].mxu0
        %v3211 = vadd.f32 %v1801, %v3210
        %v3212 = vpop.f32.mrb[0].mxu0
        %v3213 = vpop.f32.mrb[0].mxu0
        %v3214 = vadd.f32 %v1801, %v3213
        %v3215 = vpop.f32.mrb[0].mxu0
        %3216 = vmatprep.mubr.bf16.mxu0 %v1525
        %3217 = vmatmul.mubr.bf16.gmra.mrb[0].mxu0 %v1524
        %v3218 = vpop.f32.mrb[0].mxu0
        %v3219 = vadd.f32 %v1801, %v3218
        %v3220 = vpop.f32.mrb[0].mxu0
        %v3221 = vpop.f32.mrb[0].mxu0
        %v3222 = vadd.f32 %v1801, %v3221
        %v3223 = vpop.f32.mrb[0].mxu0
        %3224 = vmatprep.mubr.bf16.mxu0 %v1531
        %3225 = vmatmul.mubr.bf16.gmra.mrb[0].mxu0 %v1530
        %v3226 = vpop.f32.mrb[0].mxu0
        %v3227 = vadd.f32 %v1801, %v3226
        %v3228 = vpop.f32.mrb[0].mxu0
        %v3229 = vpop.f32.mrb[0].mxu0
        %v3230 = vadd.f32 %v1801, %v3229
        %v3231 = vpop.f32.mrb[0].mxu0
        %3232 = vmatprep.mubr.bf16.mxu0 %v1537
        %3233 = vmatmul.mubr.bf16.gmra.mrb[0].mxu0 %v1536
        %v3234 = vpop.f32.mrb[0].mxu0
        %v3235 = vadd.f32 %v1801, %v3234
        %v3236 = vpop.f32.mrb[0].mxu0
        %v3237 = vpop.f32.mrb[0].mxu0
        %v3238 = vadd.f32 %v1801, %v3237
        %v3239 = vpop.f32.mrb[0].mxu0
        %3240 = vmatprep.mubr.bf16.mxu0 %v1543
        %3241 = vmatmul.mubr.bf16.gmra.mrb[0].mxu0 %v1542
        %v3242 = vpop.f32.mrb[0].mxu0
        %v3243 = vadd.f32 %v1801, %v3242
        %v3244 = vpop.f32.mrb[0].mxu0
        %v3245 = vpop.f32.mrb[0].mxu0
        %v3246 = vadd.f32 %v1801, %v3245
        %v3247 = vpop.f32.mrb[0].mxu0
        %3248 = vmatprep.mubr.bf16.mxu0 %v1549
        %3249 = vmatmul.mubr.bf16.gmra.mrb[0].mxu0 %v1548
        %v3250 = vpop.f32.mrb[0].mxu0
        %v3251 = vadd.f32 %v1801, %v3250
        %v3252 = vpop.f32.mrb[0].mxu0
        %v3253 = vpop.f32.mrb[0].mxu0
        %v3254 = vadd.f32 %v1801, %v3253
        %v3255 = vpop.f32.mrb[0].mxu0
        %3256 = vmatprep.mubr.bf16.mxu0 %v1555
        %3257 = vmatmul.mubr.bf16.gmra.mrb[0].mxu0 %v1554
        %v3258 = vpop.f32.mrb[0].mxu0
        %v3259 = vadd.f32 %v1801, %v3258
        %v3260 = vpop.f32.mrb[0].mxu0
        %v3261 = vpop.f32.mrb[0].mxu0
        %v3262 = vadd.f32 %v1801, %v3261
        %v3263 = vpop.f32.mrb[0].mxu0
        %3264 = vmatprep.mubr.bf16.mxu0 %v1561
        %3265 = vmatmul.mubr.bf16.gmra.mrb[0].mxu0 %v1560
        %v3266 = vpop.f32.mrb[0].mxu0
        %v3267 = vadd.f32 %v1801, %v3266
        %v3268 = vpop.f32.mrb[0].mxu0
        %v3269 = vpop.f32.mrb[0].mxu0
        %v3270 = vadd.f32 %v1801, %v3269
        %v3271 = vpop.f32.mrb[0].mxu0
        %3272 = vmatprep.mubr.bf16.mxu0 %v1567
        %3273 = vmatmul.mubr.bf16.gmra.mrb[0].mxu0 %v1566
        %v3274 = vpop.f32.mrb[0].mxu0
        %v3275 = vadd.f32 %v1801, %v3274
        %v3276 = vpop.f32.mrb[0].mxu0
        %v3277 = vpop.f32.mrb[0].mxu0
        %v3278 = vadd.f32 %v1801, %v3277
        %v3279 = vpop.f32.mrb[0].mxu0
        %3280 = vmatprep.mubr.bf16.mxu0 %v1573
        %3281 = vmatmul.mubr.bf16.gmra.mrb[0].mxu0 %v1572
        %v3282 = vpop.f32.mrb[0].mxu0
        %v3283 = vadd.f32 %v1801, %v3282
        %v3284 = vpop.f32.mrb[0].mxu0
        %v3285 = vpop.f32.mrb[0].mxu0
        %v3286 = vadd.f32 %v1801, %v3285
        %v3287 = vpop.f32.mrb[0].mxu0
        %3288 = vmatprep.mubr.bf16.mxu0 %v1579
        %3289 = vmatmul.mubr.bf16.gmra.mrb[0].mxu0 %v1578
        %v3290 = vpop.f32.mrb[0].mxu0
        %v3291 = vadd.f32 %v1801, %v3290
        %v3292 = vpop.f32.mrb[0].mxu0
        %v3293 = vpop.f32.mrb[0].mxu0
        %v3294 = vadd.f32 %v1801, %v3293
        %v3295 = vpop.f32.mrb[0].mxu0
        %3296 = vmatprep.mubr.bf16.mxu0 %v1585
        %3297 = vmatmul.mubr.bf16.gmra.mrb[0].mxu0 %v1584
        %v3298 = vpop.f32.mrb[0].mxu0
        %v3299 = vadd.f32 %v1801, %v3298
        %v3300 = vpop.f32.mrb[0].mxu0
        %v3301 = vpop.f32.mrb[0].mxu0
        %v3302 = vadd.f32 %v1801, %v3301
        %v3303 = vpop.f32.mrb[0].mxu0
        %3304 = vmatprep.mubr.bf16.mxu0 %v1591
        %3305 = vmatmul.mubr.bf16.gmra.mrb[0].mxu0 %v1590
        %v3306 = vpop.f32.mrb[0].mxu0
        %v3307 = vadd.f32 %v1801, %v3306
        %v3308 = vpop.f32.mrb[0].mxu0
        %v3309 = vpop.f32.mrb[0].mxu0
        %v3310 = vadd.f32 %v1801, %v3309
        %v3311 = vpop.f32.mrb[0].mxu0
        %3312 = vdwg.mxu0
        %3313 = vmatprep.subr.bf16.mxu0 0
        %3314 = vmatpush1.bf16.msra.mxu0 %v2335
        %3315 = vmatprep.subr.bf16.mxu0 0
        %3316 = vmatpush1.bf16.msra.mxu0 %v2338
        %3317 = vmatprep.subr.bf16.mxu0 0
        %3318 = vmatpush1.bf16.msra.mxu0 %v2341
        %3319 = vmatprep.subr.bf16.mxu0 0
        %3320 = vmatpush1.bf16.msra.mxu0 %v2344
        %3321 = vmatprep.subr.bf16.mxu0 0
        %3322 = vmatpush1.bf16.msra.mxu0 %v2347
        %3323 = vmatprep.subr.bf16.mxu0 0
        %3324 = vmatpush1.bf16.msra.mxu0 %v2350
        %3325 = vmatprep.subr.bf16.mxu0 0
        %3326 = vmatpush1.bf16.msra.mxu0 %v2353
        %3327 = vmatprep.subr.bf16.mxu0 0
        %3328 = vmatpush1.bf16.msra.mxu0 %v2356
        %3329 = vmatprep.subr.bf16.mxu0 0
        %3330 = vmatpush1.bf16.msra.mxu0 %v2359
        %3331 = vmatprep.subr.bf16.mxu0 0
        %3332 = vmatpush1.bf16.msra.mxu0 %v2362
        %3333 = vmatprep.subr.bf16.mxu0 0
        %3334 = vmatpush1.bf16.msra.mxu0 %v2365
        %3335 = vmatprep.subr.bf16.mxu0 0
        %3336 = vmatpush1.bf16.msra.mxu0 %v2368
        %3337 = vmatprep.subr.bf16.mxu0 0
        %3338 = vmatpush1.bf16.msra.mxu0 %v2371
        %3339 = vmatprep.subr.bf16.mxu0 0
        %3340 = vmatpush1.bf16.msra.mxu0 %v2374
        %3341 = vmatprep.subr.bf16.mxu0 0
        %3342 = vmatpush1.bf16.msra.mxu0 %v2377
        %3343 = vmatprep.subr.bf16.mxu0 0
        %3344 = vmatpush1.bf16.msra.mxu0 %v2380
        %3345 = vmatprep.mubr.bf16.mxu0 %v1503
        %3346 = vmatmul.mubr.bf16.gmra.mrb[0].mxu0 %v1502
        %v3347 = vpop.f32.mrb[0].mxu0
        %v3348 = vadd.f32 %v3187, %v3347
        %v3349 = vpop.f32.mrb[0].mxu0
        %v3350 = vpop.f32.mrb[0].mxu0
        %v3351 = vadd.f32 %v3190, %v3350
        %v3352 = vpop.f32.mrb[0].mxu0
        %3353 = vmatprep.mubr.bf16.mxu0 %v1509
        %3354 = vmatmul.mubr.bf16.gmra.mrb[0].mxu0 %v1508
        %v3355 = vpop.f32.mrb[0].mxu0
        %v3356 = vadd.f32 %v3195, %v3355
        %v3357 = vpop.f32.mrb[0].mxu0
        %v3358 = vpop.f32.mrb[0].mxu0
        %v3359 = vadd.f32 %v3198, %v3358
        %v3360 = vpop.f32.mrb[0].mxu0
        %3361 = vmatprep.mubr.bf16.mxu0 %v1515
        %3362 = vmatmul.mubr.bf16.gmra.mrb[0].mxu0 %v1514
        %v3363 = vpop.f32.mrb[0].mxu0
        %v3364 = vadd.f32 %v3203, %v3363
        %v3365 = vpop.f32.mrb[0].mxu0
        %v3366 = vpop.f32.mrb[0].mxu0
        %v3367 = vadd.f32 %v3206, %v3366
        %v3368 = vpop.f32.mrb[0].mxu0
        %3369 = vmatprep.mubr.bf16.mxu0 %v1521
        %3370 = vmatmul.mubr.bf16.gmra.mrb[0].mxu0 %v1520
        %v3371 = vpop.f32.mrb[0].mxu0
        %v3372 = vadd.f32 %v3211, %v3371
        %v3373 = vpop.f32.mrb[0].mxu0
        %v3374 = vpop.f32.mrb[0].mxu0
        %v3375 = vadd.f32 %v3214, %v3374
        %v3376 = vpop.f32.mrb[0].mxu0
        %3377 = vmatprep.mubr.bf16.mxu0 %v1527
        %3378 = vmatmul.mubr.bf16.gmra.mrb[0].mxu0 %v1526
        %v3379 = vpop.f32.mrb[0].mxu0
        %v3380 = vadd.f32 %v3219, %v3379
        %v3381 = vpop.f32.mrb[0].mxu0
        %v3382 = vpop.f32.mrb[0].mxu0
        %v3383 = vadd.f32 %v3222, %v3382
        %v3384 = vpop.f32.mrb[0].mxu0
        %3385 = vmatprep.mubr.bf16.mxu0 %v1533
        %3386 = vmatmul.mubr.bf16.gmra.mrb[0].mxu0 %v1532
        %v3387 = vpop.f32.mrb[0].mxu0
        %v3388 = vadd.f32 %v3227, %v3387
        %v3389 = vpop.f32.mrb[0].mxu0
        %v3390 = vpop.f32.mrb[0].mxu0
        %v3391 = vadd.f32 %v3230, %v3390
        %v3392 = vpop.f32.mrb[0].mxu0
        %3393 = vmatprep.mubr.bf16.mxu0 %v1539
        %3394 = vmatmul.mubr.bf16.gmra.mrb[0].mxu0 %v1538
        %v3395 = vpop.f32.mrb[0].mxu0
        %v3396 = vadd.f32 %v3235, %v3395
        %v3397 = vpop.f32.mrb[0].mxu0
        %v3398 = vpop.f32.mrb[0].mxu0
        %v3399 = vadd.f32 %v3238, %v3398
        %v3400 = vpop.f32.mrb[0].mxu0
        %3401 = vmatprep.mubr.bf16.mxu0 %v1545
        %3402 = vmatmul.mubr.bf16.gmra.mrb[0].mxu0 %v1544
        %v3403 = vpop.f32.mrb[0].mxu0
        %v3404 = vadd.f32 %v3243, %v3403
        %v3405 = vpop.f32.mrb[0].mxu0
        %v3406 = vpop.f32.mrb[0].mxu0
        %v3407 = vadd.f32 %v3246, %v3406
        %v3408 = vpop.f32.mrb[0].mxu0
        %3409 = vmatprep.mubr.bf16.mxu0 %v1551
        %3410 = vmatmul.mubr.bf16.gmra.mrb[0].mxu0 %v1550
        %v3411 = vpop.f32.mrb[0].mxu0
        %v3412 = vadd.f32 %v3251, %v3411
        %v3413 = vpop.f32.mrb[0].mxu0
        %v3414 = vpop.f32.mrb[0].mxu0
        %v3415 = vadd.f32 %v3254, %v3414
        %v3416 = vpop.f32.mrb[0].mxu0
        %3417 = vmatprep.mubr.bf16.mxu0 %v1557
        %3418 = vmatmul.mubr.bf16.gmra.mrb[0].mxu0 %v1556
        %v3419 = vpop.f32.mrb[0].mxu0
        %v3420 = vadd.f32 %v3259, %v3419
        %v3421 = vpop.f32.mrb[0].mxu0
        %v3422 = vpop.f32.mrb[0].mxu0
        %v3423 = vadd.f32 %v3262, %v3422
        %v3424 = vpop.f32.mrb[0].mxu0
        %3425 = vmatprep.mubr.bf16.mxu0 %v1563
        %3426 = vmatmul.mubr.bf16.gmra.mrb[0].mxu0 %v1562
        %v3427 = vpop.f32.mrb[0].mxu0
        %v3428 = vadd.f32 %v3267, %v3427
        %v3429 = vpop.f32.mrb[0].mxu0
        %v3430 = vpop.f32.mrb[0].mxu0
        %v3431 = vadd.f32 %v3270, %v3430
        %v3432 = vpop.f32.mrb[0].mxu0
        %3433 = vmatprep.mubr.bf16.mxu0 %v1569
        %3434 = vmatmul.mubr.bf16.gmra.mrb[0].mxu0 %v1568
        %v3435 = vpop.f32.mrb[0].mxu0
        %v3436 = vadd.f32 %v3275, %v3435
        %v3437 = vpop.f32.mrb[0].mxu0
        %v3438 = vpop.f32.mrb[0].mxu0
        %v3439 = vadd.f32 %v3278, %v3438
        %v3440 = vpop.f32.mrb[0].mxu0
        %3441 = vmatprep.mubr.bf16.mxu0 %v1575
        %3442 = vmatmul.mubr.bf16.gmra.mrb[0].mxu0 %v1574
        %v3443 = vpop.f32.mrb[0].mxu0
        %v3444 = vadd.f32 %v3283, %v3443
        %v3445 = vpop.f32.mrb[0].mxu0
        %v3446 = vpop.f32.mrb[0].mxu0
        %v3447 = vadd.f32 %v3286, %v3446
        %v3448 = vpop.f32.mrb[0].mxu0
        %3449 = vmatprep.mubr.bf16.mxu0 %v1581
        %3450 = vmatmul.mubr.bf16.gmra.mrb[0].mxu0 %v1580
        %v3451 = vpop.f32.mrb[0].mxu0
        %v3452 = vadd.f32 %v3291, %v3451
        %v3453 = vpop.f32.mrb[0].mxu0
        %v3454 = vpop.f32.mrb[0].mxu0
        %v3455 = vadd.f32 %v3294, %v3454
        %v3456 = vpop.f32.mrb[0].mxu0
        %3457 = vmatprep.mubr.bf16.mxu0 %v1587
        %3458 = vmatmul.mubr.bf16.gmra.mrb[0].mxu0 %v1586
        %v3459 = vpop.f32.mrb[0].mxu0
        %v3460 = vadd.f32 %v3299, %v3459
        %v3461 = vpop.f32.mrb[0].mxu0
        %v3462 = vpop.f32.mrb[0].mxu0
        %v3463 = vadd.f32 %v3302, %v3462
        %v3464 = vpop.f32.mrb[0].mxu0
        %3465 = vmatprep.mubr.bf16.mxu0 %v1593
        %3466 = vmatmul.mubr.bf16.gmra.mrb[0].mxu0 %v1592
        %v3467 = vpop.f32.mrb[0].mxu0
        %v3468 = vadd.f32 %v3307, %v3467
        %v3469 = vpop.f32.mrb[0].mxu0
        %v3470 = vpop.f32.mrb[0].mxu0
        %v3471 = vadd.f32 %v3310, %v3470
        %v3472 = vpop.f32.mrb[0].mxu0
        %3473 = vdwg.mxu0
        %3474 = vmatprep.subr.bf16.mxu0 0
        %3475 = vmatpush1.bf16.msra.mxu0 %v2383
        %3476 = vmatprep.subr.bf16.mxu0 0
        %3477 = vmatpush1.bf16.msra.mxu0 %v2386
        %3478 = vmatprep.subr.bf16.mxu0 0
        %3479 = vmatpush1.bf16.msra.mxu0 %v2389
        %3480 = vmatprep.subr.bf16.mxu0 0
        %3481 = vmatpush1.bf16.msra.mxu0 %v2392
        %3482 = vmatprep.subr.bf16.mxu0 0
        %3483 = vmatpush1.bf16.msra.mxu0 %v2395
        %3484 = vmatprep.subr.bf16.mxu0 0
        %3485 = vmatpush1.bf16.msra.mxu0 %v2398
        %3486 = vmatprep.subr.bf16.mxu0 0
        %3487 = vmatpush1.bf16.msra.mxu0 %v2401
        %3488 = vmatprep.subr.bf16.mxu0 0
        %3489 = vmatpush1.bf16.msra.mxu0 %v2404
        %3490 = vmatprep.subr.bf16.mxu0 0
        %3491 = vmatpush1.bf16.msra.mxu0 %v2407
        %3492 = vmatprep.subr.bf16.mxu0 0
        %3493 = vmatpush1.bf16.msra.mxu0 %v2410
        %3494 = vmatprep.subr.bf16.mxu0 0
        %3495 = vmatpush1.bf16.msra.mxu0 %v2413
        %3496 = vmatprep.subr.bf16.mxu0 0
        %3497 = vmatpush1.bf16.msra.mxu0 %v2416
        %3498 = vmatprep.subr.bf16.mxu0 0
        %3499 = vmatpush1.bf16.msra.mxu0 %v2419
        %3500 = vmatprep.subr.bf16.mxu0 0
        %3501 = vmatpush1.bf16.msra.mxu0 %v2422
        %3502 = vmatprep.subr.bf16.mxu0 0
        %3503 = vmatpush1.bf16.msra.mxu0 %v2425
        %3504 = vmatprep.subr.bf16.mxu0 0
        %3505 = vmatpush1.bf16.msra.mxu0 %v2428
        %3506 = vmatprep.mubr.bf16.mxu0 %v1505
        %3507 = vmatmul.mubr.bf16.gmra.mrb[0].mxu0 %v1504
        %v3508 = vpop.f32.mrb[0].mxu0
        %v3509 = vadd.f32 %v3348, %v3508
        %v3510 = vpop.f32.mrb[0].mxu0
        %v3511 = vpop.f32.mrb[0].mxu0
        %v3512 = vadd.f32 %v3351, %v3511
        %v3513 = vpop.f32.mrb[0].mxu0
        %3514 = vmatprep.mubr.bf16.mxu0 %v1511
        %3515 = vmatmul.mubr.bf16.gmra.mrb[0].mxu0 %v1510
        %v3516 = vpop.f32.mrb[0].mxu0
        %v3517 = vadd.f32 %v3356, %v3516
        %v3518 = vpop.f32.mrb[0].mxu0
        %v3519 = vpop.f32.mrb[0].mxu0
        %v3520 = vadd.f32 %v3359, %v3519
        %v3521 = vpop.f32.mrb[0].mxu0
        %3522 = vmatprep.mubr.bf16.mxu0 %v1517
        %3523 = vmatmul.mubr.bf16.gmra.mrb[0].mxu0 %v1516
        %v3524 = vpop.f32.mrb[0].mxu0
        %v3525 = vadd.f32 %v3364, %v3524
        %v3526 = vpop.f32.mrb[0].mxu0
        %v3527 = vpop.f32.mrb[0].mxu0
        %v3528 = vadd.f32 %v3367, %v3527
        %v3529 = vpop.f32.mrb[0].mxu0
        %3530 = vmatprep.mubr.bf16.mxu0 %v1523
        %3531 = vmatmul.mubr.bf16.gmra.mrb[0].mxu0 %v1522
        %v3532 = vpop.f32.mrb[0].mxu0
        %v3533 = vadd.f32 %v3372, %v3532
        %v3534 = vpop.f32.mrb[0].mxu0
        %v3535 = vpop.f32.mrb[0].mxu0
        %v3536 = vadd.f32 %v3375, %v3535
        %v3537 = vpop.f32.mrb[0].mxu0
        %3538 = vmatprep.mubr.bf16.mxu0 %v1529
        %3539 = vmatmul.mubr.bf16.gmra.mrb[0].mxu0 %v1528
        %v3540 = vpop.f32.mrb[0].mxu0
        %v3541 = vadd.f32 %v3380, %v3540
        %v3542 = vpop.f32.mrb[0].mxu0
        %v3543 = vpop.f32.mrb[0].mxu0
        %v3544 = vadd.f32 %v3383, %v3543
        %v3545 = vpop.f32.mrb[0].mxu0
        %3546 = vmatprep.mubr.bf16.mxu0 %v1535
        %3547 = vmatmul.mubr.bf16.gmra.mrb[0].mxu0 %v1534
        %v3548 = vpop.f32.mrb[0].mxu0
        %v3549 = vadd.f32 %v3388, %v3548
        %v3550 = vpop.f32.mrb[0].mxu0
        %v3551 = vpop.f32.mrb[0].mxu0
        %v3552 = vadd.f32 %v3391, %v3551
        %v3553 = vpop.f32.mrb[0].mxu0
        %3554 = vmatprep.mubr.bf16.mxu0 %v1541
        %3555 = vmatmul.mubr.bf16.gmra.mrb[0].mxu0 %v1540
        %v3556 = vpop.f32.mrb[0].mxu0
        %v3557 = vadd.f32 %v3396, %v3556
        %v3558 = vpop.f32.mrb[0].mxu0
        %v3559 = vpop.f32.mrb[0].mxu0
        %v3560 = vadd.f32 %v3399, %v3559
        %v3561 = vpop.f32.mrb[0].mxu0
        %3562 = vmatprep.mubr.bf16.mxu0 %v1547
        %3563 = vmatmul.mubr.bf16.gmra.mrb[0].mxu0 %v1546
        %v3564 = vpop.f32.mrb[0].mxu0
        %v3565 = vadd.f32 %v3404, %v3564
        %v3566 = vpop.f32.mrb[0].mxu0
        %v3567 = vpop.f32.mrb[0].mxu0
        %v3568 = vadd.f32 %v3407, %v3567
        %v3569 = vpop.f32.mrb[0].mxu0
        %3570 = vmatprep.mubr.bf16.mxu0 %v1553
        %3571 = vmatmul.mubr.bf16.gmra.mrb[0].mxu0 %v1552
        %v3572 = vpop.f32.mrb[0].mxu0
        %v3573 = vadd.f32 %v3412, %v3572
        %v3574 = vpop.f32.mrb[0].mxu0
        %v3575 = vpop.f32.mrb[0].mxu0
        %v3576 = vadd.f32 %v3415, %v3575
        %v3577 = vpop.f32.mrb[0].mxu0
        %3578 = vmatprep.mubr.bf16.mxu0 %v1559
        %3579 = vmatmul.mubr.bf16.gmra.mrb[0].mxu0 %v1558
        %v3580 = vpop.f32.mrb[0].mxu0
        %v3581 = vadd.f32 %v3420, %v3580
        %v3582 = vpop.f32.mrb[0].mxu0
        %v3583 = vpop.f32.mrb[0].mxu0
        %v3584 = vadd.f32 %v3423, %v3583
        %v3585 = vpop.f32.mrb[0].mxu0
        %3586 = vmatprep.mubr.bf16.mxu0 %v1565
        %3587 = vmatmul.mubr.bf16.gmra.mrb[0].mxu0 %v1564
        %v3588 = vpop.f32.mrb[0].mxu0
        %v3589 = vadd.f32 %v3428, %v3588
        %v3590 = vpop.f32.mrb[0].mxu0
        %v3591 = vpop.f32.mrb[0].mxu0
        %v3592 = vadd.f32 %v3431, %v3591
        %v3593 = vpop.f32.mrb[0].mxu0
        %3594 = vmatprep.mubr.bf16.mxu0 %v1571
        %3595 = vmatmul.mubr.bf16.gmra.mrb[0].mxu0 %v1570
        %v3596 = vpop.f32.mrb[0].mxu0
        %v3597 = vadd.f32 %v3436, %v3596
        %v3598 = vpop.f32.mrb[0].mxu0
        %v3599 = vpop.f32.mrb[0].mxu0
        %v3600 = vadd.f32 %v3439, %v3599
        %v3601 = vpop.f32.mrb[0].mxu0
        %3602 = vmatprep.mubr.bf16.mxu0 %v1577
        %3603 = vmatmul.mubr.bf16.gmra.mrb[0].mxu0 %v1576
        %v3604 = vpop.f32.mrb[0].mxu0
        %v3605 = vadd.f32 %v3444, %v3604
        %v3606 = vpop.f32.mrb[0].mxu0
        %v3607 = vpop.f32.mrb[0].mxu0
        %v3608 = vadd.f32 %v3447, %v3607
        %v3609 = vpop.f32.mrb[0].mxu0
        %3610 = vmatprep.mubr.bf16.mxu0 %v1583
        %3611 = vmatmul.mubr.bf16.gmra.mrb[0].mxu0 %v1582
        %v3612 = vpop.f32.mrb[0].mxu0
        %v3613 = vadd.f32 %v3452, %v3612
        %v3614 = vpop.f32.mrb[0].mxu0
        %v3615 = vpop.f32.mrb[0].mxu0
        %v3616 = vadd.f32 %v3455, %v3615
        %v3617 = vpop.f32.mrb[0].mxu0
        %3618 = vmatprep.mubr.bf16.mxu0 %v1589
        %3619 = vmatmul.mubr.bf16.gmra.mrb[0].mxu0 %v1588
        %v3620 = vpop.f32.mrb[0].mxu0
        %v3621 = vadd.f32 %v3460, %v3620
        %v3622 = vpop.f32.mrb[0].mxu0
        %v3623 = vpop.f32.mrb[0].mxu0
        %v3624 = vadd.f32 %v3463, %v3623
        %v3625 = vpop.f32.mrb[0].mxu0
        %3626 = vmatprep.mubr.bf16.mxu0 %v1595
        %3627 = vmatmul.mubr.bf16.gmra.mrb[0].mxu0 %v1594
        %v3628 = vpop.f32.mrb[0].mxu0
        %v3629 = vadd.f32 %v3468, %v3628
        %v3630 = vpop.f32.mrb[0].mxu0
        %v3631 = vpop.f32.mrb[0].mxu0
        %v3632 = vadd.f32 %v3471, %v3631
        %v3633 = vpop.f32.mrb[0].mxu0
        %3634 = vdwg.mxu0
        %v3635 = vmax.f32 %v2994, 0.0
        %v3636 = vmax.f32 %v2996, 0.0
        %v3637 = vmax.f32 %v3509, 0.0
        %v3638 = vmax.f32 %v2998, 0.0
        %v3639 = vmax.f32 %v3000, 0.0
        %v3640 = vmax.f32 %v3512, 0.0
        %v3641 = vmax.f32 %v3004, 0.0
        %v3642 = vmax.f32 %v3006, 0.0
        %v3643 = vmax.f32 %v3517, 0.0
        %v3644 = vmax.f32 %v3008, 0.0
        %v3645 = vmax.f32 %v3010, 0.0
        %v3646 = vmax.f32 %v3520, 0.0
        %v3647 = vmax.f32 %v3014, 0.0
        %v3648 = vmax.f32 %v3016, 0.0
        %v3649 = vmax.f32 %v3525, 0.0
        %v3650 = vmax.f32 %v3018, 0.0
        %v3651 = vmax.f32 %v3020, 0.0
        %v3652 = vmax.f32 %v3528, 0.0
        %v3653 = vmax.f32 %v3024, 0.0
        %v3654 = vmax.f32 %v3026, 0.0
        %v3655 = vmax.f32 %v3533, 0.0
        %v3656 = vmax.f32 %v3028, 0.0
        %v3657 = vmax.f32 %v3030, 0.0
        %v3658 = vmax.f32 %v3536, 0.0
        %v3659 = vmax.f32 %v3034, 0.0
        %v3660 = vmax.f32 %v3036, 0.0
        %v3661 = vmax.f32 %v3541, 0.0
        %v3662 = vmax.f32 %v3038, 0.0
        %v3663 = vmax.f32 %v3040, 0.0
        %v3664 = vmax.f32 %v3544, 0.0
        %v3665 = vmax.f32 %v3044, 0.0
        %v3666 = vmax.f32 %v3046, 0.0
        %v3667 = vmax.f32 %v3549, 0.0
        %v3668 = vmax.f32 %v3048, 0.0
        %v3669 = vmax.f32 %v3050, 0.0
        %v3670 = vmax.f32 %v3552, 0.0
        %v3671 = vmax.f32 %v3054, 0.0
        %v3672 = vmax.f32 %v3056, 0.0
        %v3673 = vmax.f32 %v3557, 0.0
        %v3674 = vmax.f32 %v3058, 0.0
        %v3675 = vmax.f32 %v3060, 0.0
        %v3676 = vmax.f32 %v3560, 0.0
        %v3677 = vmax.f32 %v3064, 0.0
        %v3678 = vmax.f32 %v3066, 0.0
        %v3679 = vmax.f32 %v3565, 0.0
        %v3680 = vmax.f32 %v3068, 0.0
        %v3681 = vmax.f32 %v3070, 0.0
        %v3682 = vmax.f32 %v3568, 0.0
        %v3683 = vmax.f32 %v3074, 0.0
        %v3684 = vmax.f32 %v3076, 0.0
        %v3685 = vmax.f32 %v3573, 0.0
        %v3686 = vmax.f32 %v3078, 0.0
        %v3687 = vmax.f32 %v3080, 0.0
        %v3688 = vmax.f32 %v3576, 0.0
        %v3689 = vmax.f32 %v3084, 0.0
        %v3690 = vmax.f32 %v3086, 0.0
        %v3691 = vmax.f32 %v3581, 0.0
        %v3692 = vmax.f32 %v3088, 0.0
        %v3693 = vmax.f32 %v3090, 0.0
        %v3694 = vmax.f32 %v3584, 0.0
        %v3695 = vmax.f32 %v3094, 0.0
        %v3696 = vmax.f32 %v3096, 0.0
        %v3697 = vmax.f32 %v3589, 0.0
        %v3698 = vmax.f32 %v3098, 0.0
        %v3699 = vmax.f32 %v3100, 0.0
        %v3700 = vmax.f32 %v3592, 0.0
        %v3701 = vmax.f32 %v3104, 0.0
        %v3702 = vmax.f32 %v3106, 0.0
        %v3703 = vmax.f32 %v3597, 0.0
        %v3704 = vmax.f32 %v3108, 0.0
        %v3705 = vmax.f32 %v3110, 0.0
        %v3706 = vmax.f32 %v3600, 0.0
        %v3707 = vmax.f32 %v3114, 0.0
        %v3708 = vmax.f32 %v3116, 0.0
        %v3709 = vmax.f32 %v3605, 0.0
        %v3710 = vmax.f32 %v3118, 0.0
        %v3711 = vmax.f32 %v3120, 0.0
        %v3712 = vmax.f32 %v3608, 0.0
        %v3713 = vmax.f32 %v3124, 0.0
        %v3714 = vmax.f32 %v3126, 0.0
        %v3715 = vmax.f32 %v3613, 0.0
        %v3716 = vmax.f32 %v3128, 0.0
        %v3717 = vmax.f32 %v3130, 0.0
        %v3718 = vmax.f32 %v3616, 0.0
        %v3719 = vmax.f32 %v3134, 0.0
        %v3720 = vmax.f32 %v3136, 0.0
        %v3721 = vmax.f32 %v3621, 0.0
        %v3722 = vmax.f32 %v3138, 0.0
        %v3723 = vmax.f32 %v3140, 0.0
        %v3724 = vmax.f32 %v3624, 0.0
        %v3725 = vmax.f32 %v3144, 0.0
        %v3726 = vmax.f32 %v3146, 0.0
        %v3727 = vmax.f32 %v3629, 0.0
        %v3728 = vmax.f32 %v3148, 0.0
        %v3729 = vmax.f32 %v3150, 0.0
        %v3730 = vmax.f32 %v3632, 0.0
        %v3731 = vpack.c.bf16 %v3638, %v3635
        %v3732 = vpack.c.bf16 %v3639, %v3636
        %v3733 = vpack.c.bf16 %v3640, %v3637
        %v3734 = vpack.c.bf16 %v3644, %v3641
        %v3735 = vpack.c.bf16 %v3645, %v3642
        %v3736 = vpack.c.bf16 %v3646, %v3643
        %v3737 = vpack.c.bf16 %v3650, %v3647
        %v3738 = vpack.c.bf16 %v3651, %v3648
        %v3739 = vpack.c.bf16 %v3652, %v3649
        %v3740 = vpack.c.bf16 %v3656, %v3653
        %v3741 = vpack.c.bf16 %v3657, %v3654
        %v3742 = vpack.c.bf16 %v3658, %v3655
        %v3743 = vpack.c.bf16 %v3662, %v3659
        %v3744 = vpack.c.bf16 %v3663, %v3660
        %v3745 = vpack.c.bf16 %v3664, %v3661
        %v3746 = vpack.c.bf16 %v3668, %v3665
        %v3747 = vpack.c.bf16 %v3669, %v3666
        %v3748 = vpack.c.bf16 %v3670, %v3667
        %v3749 = vpack.c.bf16 %v3674, %v3671
        %v3750 = vpack.c.bf16 %v3675, %v3672
        %v3751 = vpack.c.bf16 %v3676, %v3673
        %v3752 = vpack.c.bf16 %v3680, %v3677
        %v3753 = vpack.c.bf16 %v3681, %v3678
        %v3754 = vpack.c.bf16 %v3682, %v3679
        %v3755 = vpack.c.bf16 %v3686, %v3683
        %v3756 = vpack.c.bf16 %v3687, %v3684
        %v3757 = vpack.c.bf16 %v3688, %v3685
        %v3758 = vpack.c.bf16 %v3692, %v3689
        %v3759 = vpack.c.bf16 %v3693, %v3690
        %v3760 = vpack.c.bf16 %v3694, %v3691
        %v3761 = vpack.c.bf16 %v3698, %v3695
        %v3762 = vpack.c.bf16 %v3699, %v3696
        %v3763 = vpack.c.bf16 %v3700, %v3697
        %v3764 = vpack.c.bf16 %v3704, %v3701
        %v3765 = vpack.c.bf16 %v3705, %v3702
        %v3766 = vpack.c.bf16 %v3706, %v3703
        %v3767 = vpack.c.bf16 %v3710, %v3707
        %v3768 = vpack.c.bf16 %v3711, %v3708
        %v3769 = vpack.c.bf16 %v3712, %v3709
        %v3770 = vpack.c.bf16 %v3716, %v3713
        %v3771 = vpack.c.bf16 %v3717, %v3714
        %v3772 = vpack.c.bf16 %v3718, %v3715
        %v3773 = vpack.c.bf16 %v3722, %v3719
        %v3774 = vpack.c.bf16 %v3723, %v3720
        %v3775 = vpack.c.bf16 %v3724, %v3721
        %v3776 = vpack.c.bf16 %v3728, %v3725
        %v3777 = vpack.c.bf16 %v3729, %v3726
        %v3778 = vpack.c.bf16 %v3730, %v3727
        %v3779 = vld [vmem:[%s5] sm:$0xf]
        %v3780 = vld [vmem:[%s5 + $0x4] sm:$0xf]
        %v3781 = vld [vmem:[%s5 + $0x8] sm:$0xf]
        %v3782 = vld [vmem:[%s5 + $0xc] sm:$0xf]
        %v3783 = vld [vmem:[%s5 + $0x10] sm:$0xf]
        %v3784 = vld [vmem:[%s5 + $0x14] sm:$0xf]
        %v3785 = vld [vmem:[%s5 + $0x18] sm:$0xf]
        %v3786 = vld [vmem:[%s5 + $0x1c] sm:$0xf]
        %v3787 = vld [vmem:[%s5 + $0x20] sm:$0xf]
        %v3788 = vld [vmem:[%s5 + $0x24] sm:$0xf]
        %v3789 = vld [vmem:[%s5 + $0x28] sm:$0xf]
        %v3790 = vld [vmem:[%s5 + $0x2c] sm:$0xf]
        %v3791 = vld [vmem:[%s5 + $0x30] sm:$0xf]
        %v3792 = vld [vmem:[%s5 + $0x34] sm:$0xf]
        %v3793 = vld [vmem:[%s5 + $0x38] sm:$0xf]
        %v3794 = vld [vmem:[%s5 + $0x3c] sm:$0xf]
        %v3795 = vld [vmem:[%s5 + $0x40] sm:$0xf]
        %v3796 = vld [vmem:[%s5 + $0x44] sm:$0xf]
        %v3797 = vld [vmem:[%s5 + $0x48] sm:$0xf]
        %v3798 = vld [vmem:[%s5 + $0x4c] sm:$0xf]
        %v3799 = vld [vmem:[%s5 + $0x50] sm:$0xf]
        %v3800 = vld [vmem:[%s5 + $0x54] sm:$0xf]
        %v3801 = vld [vmem:[%s5 + $0x58] sm:$0xf]
        %v3802 = vld [vmem:[%s5 + $0x5c] sm:$0xf]
        %v3803 = vld [vmem:[%s5 + $0x60] sm:$0xf]
        %v3804 = vld [vmem:[%s5 + $0x64] sm:$0xf]
        %v3805 = vld [vmem:[%s5 + $0x68] sm:$0xf]
        %v3806 = vld [vmem:[%s5 + $0x6c] sm:$0xf]
        %v3807 = vld [vmem:[%s5 + $0x70] sm:$0xf]
        %v3808 = vld [vmem:[%s5 + $0x74] sm:$0xf]
        %v3809 = vld [vmem:[%s5 + $0x78] sm:$0xf]
        %v3810 = vld [vmem:[%s5 + $0x7c] sm:$0xf]
        %v3811 = vld [vmem:[%s5 + $0x80] sm:$0xf]
        %v3812 = vld [vmem:[%s5 + $0x84] sm:$0xf]
        %v3813 = vld [vmem:[%s5 + $0x88] sm:$0xf]
        %v3814 = vld [vmem:[%s5 + $0x8c] sm:$0xf]
        %v3815 = vld [vmem:[%s5 + $0x90] sm:$0xf]
        %v3816 = vld [vmem:[%s5 + $0x94] sm:$0xf]
        %v3817 = vld [vmem:[%s5 + $0x98] sm:$0xf]
        %v3818 = vld [vmem:[%s5 + $0x9c] sm:$0xf]
        %v3819 = vld [vmem:[%s5 + $0xa0] sm:$0xf]
        %v3820 = vld [vmem:[%s5 + $0xa4] sm:$0xf]
        %v3821 = vld [vmem:[%s5 + $0xa8] sm:$0xf]
        %v3822 = vld [vmem:[%s5 + $0xac] sm:$0xf]
        %v3823 = vld [vmem:[%s5 + $0xb0] sm:$0xf]
        %v3824 = vld [vmem:[%s5 + $0xb4] sm:$0xf]
        %v3825 = vld [vmem:[%s5 + $0xb8] sm:$0xf]
        %v3826 = vld [vmem:[%s5 + $0xbc] sm:$0xf]
        %v3827 = vld [vmem:[%s6] sm:$0x1]
        %v3829 = vlaneseq
        %v3830 = vshrl.u32 %v3829, 7
        %v3831 = vsub.s32 0, %v3830
        %v3832 = vrot.slane %v3827, %v3831
        %v3882 = vunpack.c.l.b16 %v3779
        %v3883 = vunpack.c.l.b16 %v3780
        %v3884 = vunpack.c.l.b16 %v3781
        %v3885 = vunpack.c.l.b16 %v3782
        %v3886 = vunpack.c.l.b16 %v3783
        %v3887 = vunpack.c.l.b16 %v3784
        %v3888 = vunpack.c.l.b16 %v3785
        %v3889 = vunpack.c.l.b16 %v3786
        %v3890 = vunpack.c.l.b16 %v3787
        %v3891 = vunpack.c.l.b16 %v3788
        %v3892 = vunpack.c.l.b16 %v3789
        %v3893 = vunpack.c.l.b16 %v3790
        %v3894 = vunpack.c.l.b16 %v3791
        %v3895 = vunpack.c.l.b16 %v3792
        %v3896 = vunpack.c.l.b16 %v3793
        %v3897 = vunpack.c.l.b16 %v3794
        %v3898 = vunpack.c.l.b16 %v3795
        %v3899 = vunpack.c.l.b16 %v3796
        %v3900 = vunpack.c.l.b16 %v3797
        %v3901 = vunpack.c.l.b16 %v3798
        %v3902 = vunpack.c.l.b16 %v3799
        %v3903 = vunpack.c.l.b16 %v3800
        %v3904 = vunpack.c.l.b16 %v3801
        %v3905 = vunpack.c.l.b16 %v3802
        %v3906 = vunpack.c.l.b16 %v3803
        %v3907 = vunpack.c.l.b16 %v3804
        %v3908 = vunpack.c.l.b16 %v3805
        %v3909 = vunpack.c.l.b16 %v3806
        %v3910 = vunpack.c.l.b16 %v3807
        %v3911 = vunpack.c.l.b16 %v3808
        %v3912 = vunpack.c.l.b16 %v3809
        %v3913 = vunpack.c.l.b16 %v3810
        %v3914 = vunpack.c.l.b16 %v3811
        %v3915 = vunpack.c.l.b16 %v3812
        %v3916 = vunpack.c.l.b16 %v3813
        %v3917 = vunpack.c.l.b16 %v3814
        %v3918 = vunpack.c.l.b16 %v3815
        %v3919 = vunpack.c.l.b16 %v3816
        %v3920 = vunpack.c.l.b16 %v3817
        %v3921 = vunpack.c.l.b16 %v3818
        %v3922 = vunpack.c.l.b16 %v3819
        %v3923 = vunpack.c.l.b16 %v3820
        %v3924 = vunpack.c.l.b16 %v3821
        %v3925 = vunpack.c.l.b16 %v3822
        %v3926 = vunpack.c.l.b16 %v3823
        %v3927 = vunpack.c.l.b16 %v3824
        %v3928 = vunpack.c.l.b16 %v3825
        %v3929 = vunpack.c.l.b16 %v3826
        %v3930 = vpack.c.b16 %v3883, %v3882
        %v3931 = vpack.c.b16 %v3885, %v3884
        %v3932 = vpack.c.b16 %v3887, %v3886
        %v3933 = vpack.c.b16 %v3889, %v3888
        %v3934 = vpack.c.b16 %v3891, %v3890
        %v3935 = vpack.c.b16 %v3893, %v3892
        %v3936 = vpack.c.b16 %v3895, %v3894
        %v3937 = vpack.c.b16 %v3897, %v3896
        %v3938 = vpack.c.b16 %v3899, %v3898
        %v3939 = vpack.c.b16 %v3901, %v3900
        %v3940 = vpack.c.b16 %v3903, %v3902
        %v3941 = vpack.c.b16 %v3905, %v3904
        %v3942 = vpack.c.b16 %v3907, %v3906
        %v3943 = vpack.c.b16 %v3909, %v3908
        %v3944 = vpack.c.b16 %v3911, %v3910
        %v3945 = vpack.c.b16 %v3913, %v3912
        %v3946 = vpack.c.b16 %v3915, %v3914
        %v3947 = vpack.c.b16 %v3917, %v3916
        %v3948 = vpack.c.b16 %v3919, %v3918
        %v3949 = vpack.c.b16 %v3921, %v3920
        %v3950 = vpack.c.b16 %v3923, %v3922
        %v3951 = vpack.c.b16 %v3925, %v3924
        %v3952 = vpack.c.b16 %v3927, %v3926
        %v3953 = vpack.c.b16 %v3929, %v3928
        %3978 = vmatprep.subr.bf16.mxu0 0
        %3979 = vmatpush1.bf16.msra.mxu0 %v3930
        %3980 = vmatprep.subr.bf16.mxu0 0
        %3981 = vmatpush1.bf16.msra.mxu0 %v3931
        %3982 = vmatprep.subr.bf16.mxu0 0
        %3983 = vmatpush1.bf16.msra.mxu0 %v3932
        %3984 = vmatprep.subr.bf16.mxu0 0
        %3985 = vmatpush1.bf16.msra.mxu0 %v3933
        %3986 = vmatprep.subr.bf16.mxu0 0
        %3987 = vmatpush1.bf16.msra.mxu0 %v3934
        %3988 = vmatprep.subr.bf16.mxu0 0
        %3989 = vmatpush1.bf16.msra.mxu0 %v3935
        %3990 = vmatprep.subr.bf16.mxu0 0
        %3991 = vmatpush1.bf16.msra.mxu0 %v3936
        %3992 = vmatprep.subr.bf16.mxu0 0
        %3993 = vmatpush1.bf16.msra.mxu0 %v3937
        %3994 = vmatprep.subr.bf16.mxu0 0
        %3995 = vmatpush1.bf16.msra.mxu0 %v3938
        %3996 = vmatprep.subr.bf16.mxu0 0
        %3997 = vmatpush1.bf16.msra.mxu0 %v3939
        %3998 = vmatprep.subr.bf16.mxu0 0
        %3999 = vmatpush1.bf16.msra.mxu0 %v3940
        %4000 = vmatprep.subr.bf16.mxu0 0
        %4001 = vmatpush1.bf16.msra.mxu0 %v3941
        %4002 = vmatprep.subr.bf16.mxu0 0
        %4003 = vmatpush1.bf16.msra.mxu0 %v3942
        %4004 = vmatprep.subr.bf16.mxu0 0
        %4005 = vmatpush1.bf16.msra.mxu0 %v3943
        %4006 = vmatprep.subr.bf16.mxu0 0
        %4007 = vmatpush1.bf16.msra.mxu0 %v3944
        %4008 = vmatprep.subr.bf16.mxu0 0
        %4009 = vmatpush1.bf16.msra.mxu0 %v3945
        %4010 = vmatprep.mubr.bf16.mxu0 %v3732
        %4011 = vmatmul.mubr.bf16.gmra.mrb[0].mxu0 %v3731
        %v4012 = vpop.f32.mrb[0].mxu0
        %v4013 = vadd.f32 %v3832, %v4012
        %v4014 = vpop.f32.mrb[0].mxu0
        %v4015 = vpop.f32.mrb[0].mxu0
        %v4016 = vadd.f32 %v3832, %v4015
        %v4017 = vpop.f32.mrb[0].mxu0
        %4018 = vmatprep.mubr.bf16.mxu0 %v3735
        %4019 = vmatmul.mubr.bf16.gmra.mrb[0].mxu0 %v3734
        %v4020 = vpop.f32.mrb[0].mxu0
        %v4021 = vadd.f32 %v3832, %v4020
        %v4022 = vpop.f32.mrb[0].mxu0
        %v4023 = vpop.f32.mrb[0].mxu0
        %v4024 = vadd.f32 %v3832, %v4023
        %v4025 = vpop.f32.mrb[0].mxu0
        %4026 = vmatprep.mubr.bf16.mxu0 %v3738
        %4027 = vmatmul.mubr.bf16.gmra.mrb[0].mxu0 %v3737
        %v4028 = vpop.f32.mrb[0].mxu0
        %v4029 = vadd.f32 %v3832, %v4028
        %v4030 = vpop.f32.mrb[0].mxu0
        %v4031 = vpop.f32.mrb[0].mxu0
        %v4032 = vadd.f32 %v3832, %v4031
        %v4033 = vpop.f32.mrb[0].mxu0
        %4034 = vmatprep.mubr.bf16.mxu0 %v3741
        %4035 = vmatmul.mubr.bf16.gmra.mrb[0].mxu0 %v3740
        %v4036 = vpop.f32.mrb[0].mxu0
        %v4037 = vadd.f32 %v3832, %v4036
        %v4038 = vpop.f32.mrb[0].mxu0
        %v4039 = vpop.f32.mrb[0].mxu0
        %v4040 = vadd.f32 %v3832, %v4039
        %v4041 = vpop.f32.mrb[0].mxu0
        %4042 = vmatprep.mubr.bf16.mxu0 %v3744
        %4043 = vmatmul.mubr.bf16.gmra.mrb[0].mxu0 %v3743
        %v4044 = vpop.f32.mrb[0].mxu0
        %v4045 = vadd.f32 %v3832, %v4044
        %v4046 = vpop.f32.mrb[0].mxu0
        %v4047 = vpop.f32.mrb[0].mxu0
        %v4048 = vadd.f32 %v3832, %v4047
        %v4049 = vpop.f32.mrb[0].mxu0
        %4050 = vmatprep.mubr.bf16.mxu0 %v3747
        %4051 = vmatmul.mubr.bf16.gmra.mrb[0].mxu0 %v3746
        %v4052 = vpop.f32.mrb[0].mxu0
        %v4053 = vadd.f32 %v3832, %v4052
        %v4054 = vpop.f32.mrb[0].mxu0
        %v4055 = vpop.f32.mrb[0].mxu0
        %v4056 = vadd.f32 %v3832, %v4055
        %v4057 = vpop.f32.mrb[0].mxu0
        %4058 = vmatprep.mubr.bf16.mxu0 %v3750
        %4059 = vmatmul.mubr.bf16.gmra.mrb[0].mxu0 %v3749
        %v4060 = vpop.f32.mrb[0].mxu0
        %v4061 = vadd.f32 %v3832, %v4060
        %v4062 = vpop.f32.mrb[0].mxu0
        %v4063 = vpop.f32.mrb[0].mxu0
        %v4064 = vadd.f32 %v3832, %v4063
        %v4065 = vpop.f32.mrb[0].mxu0
        %4066 = vmatprep.mubr.bf16.mxu0 %v3753
        %4067 = vmatmul.mubr.bf16.gmra.mrb[0].mxu0 %v3752
        %v4068 = vpop.f32.mrb[0].mxu0
        %v4069 = vadd.f32 %v3832, %v4068
        %v4070 = vpop.f32.mrb[0].mxu0
        %v4071 = vpop.f32.mrb[0].mxu0
        %v4072 = vadd.f32 %v3832, %v4071
        %v4073 = vpop.f32.mrb[0].mxu0
        %4074 = vmatprep.mubr.bf16.mxu0 %v3756
        %4075 = vmatmul.mubr.bf16.gmra.mrb[0].mxu0 %v3755
        %v4076 = vpop.f32.mrb[0].mxu0
        %v4077 = vadd.f32 %v3832, %v4076
        %v4078 = vpop.f32.mrb[0].mxu0
        %v4079 = vpop.f32.mrb[0].mxu0
        %v4080 = vadd.f32 %v3832, %v4079
        %v4081 = vpop.f32.mrb[0].mxu0
        %4082 = vmatprep.mubr.bf16.mxu0 %v3759
        %4083 = vmatmul.mubr.bf16.gmra.mrb[0].mxu0 %v3758
        %v4084 = vpop.f32.mrb[0].mxu0
        %v4085 = vadd.f32 %v3832, %v4084
        %v4086 = vpop.f32.mrb[0].mxu0
        %v4087 = vpop.f32.mrb[0].mxu0
        %v4088 = vadd.f32 %v3832, %v4087
        %v4089 = vpop.f32.mrb[0].mxu0
        %4090 = vmatprep.mubr.bf16.mxu0 %v3762
        %4091 = vmatmul.mubr.bf16.gmra.mrb[0].mxu0 %v3761
        %v4092 = vpop.f32.mrb[0].mxu0
        %v4093 = vadd.f32 %v3832, %v4092
        %v4094 = vpop.f32.mrb[0].mxu0
        %v4095 = vpop.f32.mrb[0].mxu0
        %v4096 = vadd.f32 %v3832, %v4095
        %v4097 = vpop.f32.mrb[0].mxu0
        %4098 = vmatprep.mubr.bf16.mxu0 %v3765
        %4099 = vmatmul.mubr.bf16.gmra.mrb[0].mxu0 %v3764
        %v4100 = vpop.f32.mrb[0].mxu0
        %v4101 = vadd.f32 %v3832, %v4100
        %v4102 = vpop.f32.mrb[0].mxu0
        %v4103 = vpop.f32.mrb[0].mxu0
        %v4104 = vadd.f32 %v3832, %v4103
        %v4105 = vpop.f32.mrb[0].mxu0
        %4106 = vmatprep.mubr.bf16.mxu0 %v3768
        %4107 = vmatmul.mubr.bf16.gmra.mrb[0].mxu0 %v3767
        %v4108 = vpop.f32.mrb[0].mxu0
        %v4109 = vadd.f32 %v3832, %v4108
        %v4110 = vpop.f32.mrb[0].mxu0
        %v4111 = vpop.f32.mrb[0].mxu0
        %v4112 = vadd.f32 %v3832, %v4111
        %v4113 = vpop.f32.mrb[0].mxu0
        %4114 = vmatprep.mubr.bf16.mxu0 %v3771
        %4115 = vmatmul.mubr.bf16.gmra.mrb[0].mxu0 %v3770
        %v4116 = vpop.f32.mrb[0].mxu0
        %v4117 = vadd.f32 %v3832, %v4116
        %v4118 = vpop.f32.mrb[0].mxu0
        %v4119 = vpop.f32.mrb[0].mxu0
        %v4120 = vadd.f32 %v3832, %v4119
        %v4121 = vpop.f32.mrb[0].mxu0
        %4122 = vmatprep.mubr.bf16.mxu0 %v3774
        %4123 = vmatmul.mubr.bf16.gmra.mrb[0].mxu0 %v3773
        %v4124 = vpop.f32.mrb[0].mxu0
        %v4125 = vadd.f32 %v3832, %v4124
        %v4126 = vpop.f32.mrb[0].mxu0
        %v4127 = vpop.f32.mrb[0].mxu0
        %v4128 = vadd.f32 %v3832, %v4127
        %v4129 = vpop.f32.mrb[0].mxu0
        %4130 = vmatprep.mubr.bf16.mxu0 %v3777
        %4131 = vmatmul.mubr.bf16.gmra.mrb[0].mxu0 %v3776
        %v4132 = vpop.f32.mrb[0].mxu0
        %v4133 = vadd.f32 %v3832, %v4132
        %v4134 = vpop.f32.mrb[0].mxu0
        %v4135 = vpop.f32.mrb[0].mxu0
        %v4136 = vadd.f32 %v3832, %v4135
        %v4137 = vpop.f32.mrb[0].mxu0
        %4138 = vdwg.mxu0
        %4139 = vmatprep.subr.bf16.mxu0 0
        %4140 = vmatpush1.bf16.msra.mxu0 %v3946
        %4141 = vmatprep.subr.bf16.mxu0 0
        %4142 = vmatpush1.bf16.msra.mxu0 %v3947
        %4143 = vmatprep.subr.bf16.mxu0 0
        %4144 = vmatpush1.bf16.msra.mxu0 %v3948
        %4145 = vmatprep.subr.bf16.mxu0 0
        %4146 = vmatpush1.bf16.msra.mxu0 %v3949
        %4147 = vmatprep.subr.bf16.mxu0 0
        %4148 = vmatpush1.bf16.msra.mxu0 %v3950
        %4149 = vmatprep.subr.bf16.mxu0 0
        %4150 = vmatpush1.bf16.msra.mxu0 %v3951
        %4151 = vmatprep.subr.bf16.mxu0 0
        %4152 = vmatpush1.bf16.msra.mxu0 %v3952
        %4153 = vmatprep.subr.bf16.mxu0 0
        %4154 = vmatpush1.bf16.msra.mxu0 %v3953
        %4155 = vmatprep.subr.bf16.mxu0 0
        %4156 = vmatpush1.bf16.msra.mxu0 0
        %4157 = vmatprep.subr.bf16.mxu0 0
        %4158 = vmatpush1.bf16.msra.mxu0 0
        %4159 = vmatprep.subr.bf16.mxu0 0
        %4160 = vmatpush1.bf16.msra.mxu0 0
        %4161 = vmatprep.subr.bf16.mxu0 0
        %4162 = vmatpush1.bf16.msra.mxu0 0
        %4163 = vmatprep.subr.bf16.mxu0 0
        %4164 = vmatpush1.bf16.msra.mxu0 0
        %4165 = vmatprep.subr.bf16.mxu0 0
        %4166 = vmatpush1.bf16.msra.mxu0 0
        %4167 = vmatprep.subr.bf16.mxu0 0
        %4168 = vmatpush1.bf16.msra.mxu0 0
        %4169 = vmatprep.subr.bf16.mxu0 0
        %4170 = vmatpush1.bf16.msra.mxu0 0
        %4171 = vmatprep.mubr.bf16.mxu0 0
        %4172 = vmatmul.mubr.bf16.gmra.mrb[0].mxu0 %v3733
        %v4173 = vpop.f32.mrb[0].mxu0
        %v4174 = vadd.f32 %v4013, %v4173
        %v4175 = vpop.f32.mrb[0].mxu0
        %v4176 = vpop.f32.mrb[0].mxu0
        %v4177 = vadd.f32 %v4016, %v4176
        %v4178 = vpop.f32.mrb[0].mxu0
        %4179 = vmatprep.mubr.bf16.mxu0 0
        %4180 = vmatmul.mubr.bf16.gmra.mrb[0].mxu0 %v3736
        %v4181 = vpop.f32.mrb[0].mxu0
        %v4182 = vadd.f32 %v4021, %v4181
        %v4183 = vpop.f32.mrb[0].mxu0
        %v4184 = vpop.f32.mrb[0].mxu0
        %v4185 = vadd.f32 %v4024, %v4184
        %v4186 = vpop.f32.mrb[0].mxu0
        %4187 = vmatprep.mubr.bf16.mxu0 0
        %4188 = vmatmul.mubr.bf16.gmra.mrb[0].mxu0 %v3739
        %v4189 = vpop.f32.mrb[0].mxu0
        %v4190 = vadd.f32 %v4029, %v4189
        %v4191 = vpop.f32.mrb[0].mxu0
        %v4192 = vpop.f32.mrb[0].mxu0
        %v4193 = vadd.f32 %v4032, %v4192
        %v4194 = vpop.f32.mrb[0].mxu0
        %4195 = vmatprep.mubr.bf16.mxu0 0
        %4196 = vmatmul.mubr.bf16.gmra.mrb[0].mxu0 %v3742
        %v4197 = vpop.f32.mrb[0].mxu0
        %v4198 = vadd.f32 %v4037, %v4197
        %v4199 = vpop.f32.mrb[0].mxu0
        %v4200 = vpop.f32.mrb[0].mxu0
        %v4201 = vadd.f32 %v4040, %v4200
        %v4202 = vpop.f32.mrb[0].mxu0
        %4203 = vmatprep.mubr.bf16.mxu0 0
        %4204 = vmatmul.mubr.bf16.gmra.mrb[0].mxu0 %v3745
        %v4205 = vpop.f32.mrb[0].mxu0
        %v4206 = vadd.f32 %v4045, %v4205
        %v4207 = vpop.f32.mrb[0].mxu0
        %v4208 = vpop.f32.mrb[0].mxu0
        %v4209 = vadd.f32 %v4048, %v4208
        %v4210 = vpop.f32.mrb[0].mxu0
        %4211 = vmatprep.mubr.bf16.mxu0 0
        %4212 = vmatmul.mubr.bf16.gmra.mrb[0].mxu0 %v3748
        %v4213 = vpop.f32.mrb[0].mxu0
        %v4214 = vadd.f32 %v4053, %v4213
        %v4215 = vpop.f32.mrb[0].mxu0
        %v4216 = vpop.f32.mrb[0].mxu0
        %v4217 = vadd.f32 %v4056, %v4216
        %v4218 = vpop.f32.mrb[0].mxu0
        %4219 = vmatprep.mubr.bf16.mxu0 0
        %4220 = vmatmul.mubr.bf16.gmra.mrb[0].mxu0 %v3751
        %v4221 = vpop.f32.mrb[0].mxu0
        %v4222 = vadd.f32 %v4061, %v4221
        %v4223 = vpop.f32.mrb[0].mxu0
        %v4224 = vpop.f32.mrb[0].mxu0
        %v4225 = vadd.f32 %v4064, %v4224
        %v4226 = vpop.f32.mrb[0].mxu0
        %4227 = vmatprep.mubr.bf16.mxu0 0
        %4228 = vmatmul.mubr.bf16.gmra.mrb[0].mxu0 %v3754
        %v4229 = vpop.f32.mrb[0].mxu0
        %v4230 = vadd.f32 %v4069, %v4229
        %v4231 = vpop.f32.mrb[0].mxu0
        %v4232 = vpop.f32.mrb[0].mxu0
        %v4233 = vadd.f32 %v4072, %v4232
        %v4234 = vpop.f32.mrb[0].mxu0
        %4235 = vmatprep.mubr.bf16.mxu0 0
        %4236 = vmatmul.mubr.bf16.gmra.mrb[0].mxu0 %v3757
        %v4237 = vpop.f32.mrb[0].mxu0
        %v4238 = vadd.f32 %v4077, %v4237
        %v4239 = vpop.f32.mrb[0].mxu0
        %v4240 = vpop.f32.mrb[0].mxu0
        %v4241 = vadd.f32 %v4080, %v4240
        %v4242 = vpop.f32.mrb[0].mxu0
        %4243 = vmatprep.mubr.bf16.mxu0 0
        %4244 = vmatmul.mubr.bf16.gmra.mrb[0].mxu0 %v3760
        %v4245 = vpop.f32.mrb[0].mxu0
        %v4246 = vadd.f32 %v4085, %v4245
        %v4247 = vpop.f32.mrb[0].mxu0
        %v4248 = vpop.f32.mrb[0].mxu0
        %v4249 = vadd.f32 %v4088, %v4248
        %v4250 = vpop.f32.mrb[0].mxu0
        %4251 = vmatprep.mubr.bf16.mxu0 0
        %4252 = vmatmul.mubr.bf16.gmra.mrb[0].mxu0 %v3763
        %v4253 = vpop.f32.mrb[0].mxu0
        %v4254 = vadd.f32 %v4093, %v4253
        %v4255 = vpop.f32.mrb[0].mxu0
        %v4256 = vpop.f32.mrb[0].mxu0
        %v4257 = vadd.f32 %v4096, %v4256
        %v4258 = vpop.f32.mrb[0].mxu0
        %4259 = vmatprep.mubr.bf16.mxu0 0
        %4260 = vmatmul.mubr.bf16.gmra.mrb[0].mxu0 %v3766
        %v4261 = vpop.f32.mrb[0].mxu0
        %v4262 = vadd.f32 %v4101, %v4261
        %v4263 = vpop.f32.mrb[0].mxu0
        %v4264 = vpop.f32.mrb[0].mxu0
        %v4265 = vadd.f32 %v4104, %v4264
        %v4266 = vpop.f32.mrb[0].mxu0
        %4267 = vmatprep.mubr.bf16.mxu0 0
        %4268 = vmatmul.mubr.bf16.gmra.mrb[0].mxu0 %v3769
        %v4269 = vpop.f32.mrb[0].mxu0
        %v4270 = vadd.f32 %v4109, %v4269
        %v4271 = vpop.f32.mrb[0].mxu0
        %v4272 = vpop.f32.mrb[0].mxu0
        %v4273 = vadd.f32 %v4112, %v4272
        %v4274 = vpop.f32.mrb[0].mxu0
        %4275 = vmatprep.mubr.bf16.mxu0 0
        %4276 = vmatmul.mubr.bf16.gmra.mrb[0].mxu0 %v3772
        %v4277 = vpop.f32.mrb[0].mxu0
        %v4278 = vadd.f32 %v4117, %v4277
        %v4279 = vpop.f32.mrb[0].mxu0
        %v4280 = vpop.f32.mrb[0].mxu0
        %v4281 = vadd.f32 %v4120, %v4280
        %v4282 = vpop.f32.mrb[0].mxu0
        %4283 = vmatprep.mubr.bf16.mxu0 0
        %4284 = vmatmul.mubr.bf16.gmra.mrb[0].mxu0 %v3775
        %v4285 = vpop.f32.mrb[0].mxu0
        %v4286 = vadd.f32 %v4125, %v4285
        %v4287 = vpop.f32.mrb[0].mxu0
        %v4288 = vpop.f32.mrb[0].mxu0
        %v4289 = vadd.f32 %v4128, %v4288
        %v4290 = vpop.f32.mrb[0].mxu0
        %4291 = vmatprep.mubr.bf16.mxu0 0
        %4292 = vmatmul.mubr.bf16.gmra.mrb[0].mxu0 %v3778
        %v4293 = vpop.f32.mrb[0].mxu0
        %v4294 = vadd.f32 %v4133, %v4293
        %v4295 = vpop.f32.mrb[0].mxu0
        %v4296 = vpop.f32.mrb[0].mxu0
        %v4297 = vadd.f32 %v4136, %v4296
        %v4298 = vpop.f32.mrb[0].mxu0
        %4299 = vdwg.mxu0
        %v4300 = vmax.f32 %v4174, 0.0
        %v4301 = vmax.f32 %v4177, 0.0
        %v4302 = vmax.f32 %v4182, 0.0
        %v4303 = vmax.f32 %v4185, 0.0
        %v4304 = vmax.f32 %v4190, 0.0
        %v4305 = vmax.f32 %v4193, 0.0
        %v4306 = vmax.f32 %v4198, 0.0
        %v4307 = vmax.f32 %v4201, 0.0
        %v4308 = vmax.f32 %v4206, 0.0
        %v4309 = vmax.f32 %v4209, 0.0
        %v4310 = vmax.f32 %v4214, 0.0
        %v4311 = vmax.f32 %v4217, 0.0
        %v4312 = vmax.f32 %v4222, 0.0
        %v4313 = vmax.f32 %v4225, 0.0
        %v4314 = vmax.f32 %v4230, 0.0
        %v4315 = vmax.f32 %v4233, 0.0
        %v4316 = vmax.f32 %v4238, 0.0
        %v4317 = vmax.f32 %v4241, 0.0
        %v4318 = vmax.f32 %v4246, 0.0
        %v4319 = vmax.f32 %v4249, 0.0
        %v4320 = vmax.f32 %v4254, 0.0
        %v4321 = vmax.f32 %v4257, 0.0
        %v4322 = vmax.f32 %v4262, 0.0
        %v4323 = vmax.f32 %v4265, 0.0
        %v4324 = vmax.f32 %v4270, 0.0
        %v4325 = vmax.f32 %v4273, 0.0
        %v4326 = vmax.f32 %v4278, 0.0
        %v4327 = vmax.f32 %v4281, 0.0
        %v4328 = vmax.f32 %v4286, 0.0
        %v4329 = vmax.f32 %v4289, 0.0
        %v4330 = vmax.f32 %v4294, 0.0
        %v4331 = vmax.f32 %v4297, 0.0
        %v4332 = vpack.c.bf16 %v4301, %v4300
        %v4333 = vpack.c.bf16 %v4303, %v4302
        %v4334 = vpack.c.bf16 %v4305, %v4304
        %v4335 = vpack.c.bf16 %v4307, %v4306
        %v4336 = vpack.c.bf16 %v4309, %v4308
        %v4337 = vpack.c.bf16 %v4311, %v4310
        %v4338 = vpack.c.bf16 %v4313, %v4312
        %v4339 = vpack.c.bf16 %v4315, %v4314
        %v4340 = vpack.c.bf16 %v4317, %v4316
        %v4341 = vpack.c.bf16 %v4319, %v4318
        %v4342 = vpack.c.bf16 %v4321, %v4320
        %v4343 = vpack.c.bf16 %v4323, %v4322
        %v4344 = vpack.c.bf16 %v4325, %v4324
        %v4345 = vpack.c.bf16 %v4327, %v4326
        %v4346 = vpack.c.bf16 %v4329, %v4328
        %v4347 = vpack.c.bf16 %v4331, %v4330
        %v4348 = vld [vmem:[%s7] sm:$0xf]
        %v4349 = vld [vmem:[%s7 + $0x4] sm:$0xf]
        %v4350 = vld [vmem:[%s7 + $0x8] sm:$0xf]
        %v4351 = vld [vmem:[%s7 + $0xc] sm:$0xf]
        %v4352 = vld [vmem:[%s7 + $0x10] sm:$0xf]
        %v4353 = vld [vmem:[%s7 + $0x14] sm:$0xf]
        %v4354 = vld [vmem:[%s7 + $0x18] sm:$0xf]
        %v4355 = vld [vmem:[%s7 + $0x1c] sm:$0xf]
        %v4356 = vld [vmem:[%s7 + $0x20] sm:$0xf]
        %v4357 = vld [vmem:[%s7 + $0x24] sm:$0xf]
        %v4358 = vld [vmem:[%s7 + $0x28] sm:$0xf]
        %v4359 = vld [vmem:[%s7 + $0x2c] sm:$0xf]
        %v4360 = vld [vmem:[%s7 + $0x30] sm:$0xf]
        %v4361 = vld [vmem:[%s7 + $0x34] sm:$0xf]
        %v4362 = vld [vmem:[%s7 + $0x38] sm:$0xf]
        %v4363 = vld [vmem:[%s7 + $0x3c] sm:$0xf]
        %v4364 = vld [vmem:[%s8] sm:$0x1]
        %v4366 = vlaneseq
        %v4367 = vshrl.u32 %v4366, 7
        %v4368 = vsub.s32 0, %v4367
        %v4369 = vrot.slane %v4364, %v4368
        %v4387 = vunpack.c.l.b16 %v4348
        %v4388 = vunpack.c.l.b16 %v4349
        %v4389 = vunpack.c.l.b16 %v4350
        %v4390 = vunpack.c.l.b16 %v4351
        %v4391 = vunpack.c.l.b16 %v4352
        %v4392 = vunpack.c.l.b16 %v4353
        %v4393 = vunpack.c.l.b16 %v4354
        %v4394 = vunpack.c.l.b16 %v4355
        %v4395 = vunpack.c.l.b16 %v4356
        %v4396 = vunpack.c.l.b16 %v4357
        %v4397 = vunpack.c.l.b16 %v4358
        %v4398 = vunpack.c.l.b16 %v4359
        %v4399 = vunpack.c.l.b16 %v4360
        %v4400 = vunpack.c.l.b16 %v4361
        %v4401 = vunpack.c.l.b16 %v4362
        %v4402 = vunpack.c.l.b16 %v4363
        %v4403 = vpack.c.b16 %v4388, %v4387
        %v4404 = vpack.c.b16 %v4390, %v4389
        %v4405 = vpack.c.b16 %v4392, %v4391
        %v4406 = vpack.c.b16 %v4394, %v4393
        %v4407 = vpack.c.b16 %v4396, %v4395
        %v4408 = vpack.c.b16 %v4398, %v4397
        %v4409 = vpack.c.b16 %v4400, %v4399
        %v4410 = vpack.c.b16 %v4402, %v4401
        %4419 = vmatprep.subr.bf16.mxu0 0
        %4420 = vmatpush1.bf16.msra.mxu0 %v4403
        %4421 = vmatprep.subr.bf16.mxu0 0
        %4422 = vmatpush1.bf16.msra.mxu0 %v4404
        %4423 = vmatprep.subr.bf16.mxu0 0
        %4424 = vmatpush1.bf16.msra.mxu0 %v4405
        %4425 = vmatprep.subr.bf16.mxu0 0
        %4426 = vmatpush1.bf16.msra.mxu0 %v4406
        %4427 = vmatprep.subr.bf16.mxu0 0
        %4428 = vmatpush1.bf16.msra.mxu0 %v4407
        %4429 = vmatprep.subr.bf16.mxu0 0
        %4430 = vmatpush1.bf16.msra.mxu0 %v4408
        %4431 = vmatprep.subr.bf16.mxu0 0
        %4432 = vmatpush1.bf16.msra.mxu0 %v4409
        %4433 = vmatprep.subr.bf16.mxu0 0
        %4434 = vmatpush1.bf16.msra.mxu0 %v4410
        %4435 = vmatprep.subr.bf16.mxu0 0
        %4436 = vmatpush1.bf16.msra.mxu0 0
        %4437 = vmatprep.subr.bf16.mxu0 0
        %4438 = vmatpush1.bf16.msra.mxu0 0
        %4439 = vmatprep.subr.bf16.mxu0 0
        %4440 = vmatpush1.bf16.msra.mxu0 0
        %4441 = vmatprep.subr.bf16.mxu0 0
        %4442 = vmatpush1.bf16.msra.mxu0 0
        %4443 = vmatprep.subr.bf16.mxu0 0
        %4444 = vmatpush1.bf16.msra.mxu0 0
        %4445 = vmatprep.subr.bf16.mxu0 0
        %4446 = vmatpush1.bf16.msra.mxu0 0
        %4447 = vmatprep.subr.bf16.mxu0 0
        %4448 = vmatpush1.bf16.msra.mxu0 0
        %4449 = vmatprep.subr.bf16.mxu0 0
        %4450 = vmatpush1.bf16.msra.mxu0 0
        %4451 = vmatprep.mubr.bf16.mxu0 0
        %4452 = vmatmul.mubr.bf16.gmra.mrb[0].mxu0 %v4332
        %v4453 = vpop.f32.mrb[0].mxu0
        %v4454 = vadd.f32 %v4369, %v4453
        %v4455 = vpop.f32.mrb[0].mxu0
        %v4456 = vpop.f32.mrb[0].mxu0
        %v4457 = vadd.f32 %v4369, %v4456
        %v4458 = vpop.f32.mrb[0].mxu0
        %4459 = vmatprep.mubr.bf16.mxu0 0
        %4460 = vmatmul.mubr.bf16.gmra.mrb[0].mxu0 %v4333
        %v4461 = vpop.f32.mrb[0].mxu0
        %v4462 = vadd.f32 %v4369, %v4461
        %v4463 = vpop.f32.mrb[0].mxu0
        %v4464 = vpop.f32.mrb[0].mxu0
        %v4465 = vadd.f32 %v4369, %v4464
        %v4466 = vpop.f32.mrb[0].mxu0
        %4467 = vmatprep.mubr.bf16.mxu0 0
        %4468 = vmatmul.mubr.bf16.gmra.mrb[0].mxu0 %v4334
        %v4469 = vpop.f32.mrb[0].mxu0
        %v4470 = vadd.f32 %v4369, %v4469
        %v4471 = vpop.f32.mrb[0].mxu0
        %v4472 = vpop.f32.mrb[0].mxu0
        %v4473 = vadd.f32 %v4369, %v4472
        %v4474 = vpop.f32.mrb[0].mxu0
        %4475 = vmatprep.mubr.bf16.mxu0 0
        %4476 = vmatmul.mubr.bf16.gmra.mrb[0].mxu0 %v4335
        %v4477 = vpop.f32.mrb[0].mxu0
        %v4478 = vadd.f32 %v4369, %v4477
        %v4479 = vpop.f32.mrb[0].mxu0
        %v4480 = vpop.f32.mrb[0].mxu0
        %v4481 = vadd.f32 %v4369, %v4480
        %v4482 = vpop.f32.mrb[0].mxu0
        %4483 = vmatprep.mubr.bf16.mxu0 0
        %4484 = vmatmul.mubr.bf16.gmra.mrb[0].mxu0 %v4336
        %v4485 = vpop.f32.mrb[0].mxu0
        %v4486 = vadd.f32 %v4369, %v4485
        %v4487 = vpop.f32.mrb[0].mxu0
        %v4488 = vpop.f32.mrb[0].mxu0
        %v4489 = vadd.f32 %v4369, %v4488
        %v4490 = vpop.f32.mrb[0].mxu0
        %4491 = vmatprep.mubr.bf16.mxu0 0
        %4492 = vmatmul.mubr.bf16.gmra.mrb[0].mxu0 %v4337
        %v4493 = vpop.f32.mrb[0].mxu0
        %v4494 = vadd.f32 %v4369, %v4493
        %v4495 = vpop.f32.mrb[0].mxu0
        %v4496 = vpop.f32.mrb[0].mxu0
        %v4497 = vadd.f32 %v4369, %v4496
        %v4498 = vpop.f32.mrb[0].mxu0
        %4499 = vmatprep.mubr.bf16.mxu0 0
        %4500 = vmatmul.mubr.bf16.gmra.mrb[0].mxu0 %v4338
        %v4501 = vpop.f32.mrb[0].mxu0
        %v4502 = vadd.f32 %v4369, %v4501
        %v4503 = vpop.f32.mrb[0].mxu0
        %v4504 = vpop.f32.mrb[0].mxu0
        %v4505 = vadd.f32 %v4369, %v4504
        %v4506 = vpop.f32.mrb[0].mxu0
        %4507 = vmatprep.mubr.bf16.mxu0 0
        %4508 = vmatmul.mubr.bf16.gmra.mrb[0].mxu0 %v4339
        %v4509 = vpop.f32.mrb[0].mxu0
        %v4510 = vadd.f32 %v4369, %v4509
        %v4511 = vpop.f32.mrb[0].mxu0
        %v4512 = vpop.f32.mrb[0].mxu0
        %v4513 = vadd.f32 %v4369, %v4512
        %v4514 = vpop.f32.mrb[0].mxu0
        %4515 = vmatprep.mubr.bf16.mxu0 0
        %4516 = vmatmul.mubr.bf16.gmra.mrb[0].mxu0 %v4340
        %v4517 = vpop.f32.mrb[0].mxu0
        %v4518 = vadd.f32 %v4369, %v4517
        %v4519 = vpop.f32.mrb[0].mxu0
        %v4520 = vpop.f32.mrb[0].mxu0
        %v4521 = vadd.f32 %v4369, %v4520
        %v4522 = vpop.f32.mrb[0].mxu0
        %4523 = vmatprep.mubr.bf16.mxu0 0
        %4524 = vmatmul.mubr.bf16.gmra.mrb[0].mxu0 %v4341
        %v4525 = vpop.f32.mrb[0].mxu0
        %v4526 = vadd.f32 %v4369, %v4525
        %v4527 = vpop.f32.mrb[0].mxu0
        %v4528 = vpop.f32.mrb[0].mxu0
        %v4529 = vadd.f32 %v4369, %v4528
        %v4530 = vpop.f32.mrb[0].mxu0
        %4531 = vmatprep.mubr.bf16.mxu0 0
        %4532 = vmatmul.mubr.bf16.gmra.mrb[0].mxu0 %v4342
        %v4533 = vpop.f32.mrb[0].mxu0
        %v4534 = vadd.f32 %v4369, %v4533
        %v4535 = vpop.f32.mrb[0].mxu0
        %v4536 = vpop.f32.mrb[0].mxu0
        %v4537 = vadd.f32 %v4369, %v4536
        %v4538 = vpop.f32.mrb[0].mxu0
        %4539 = vmatprep.mubr.bf16.mxu0 0
        %4540 = vmatmul.mubr.bf16.gmra.mrb[0].mxu0 %v4343
        %v4541 = vpop.f32.mrb[0].mxu0
        %v4542 = vadd.f32 %v4369, %v4541
        %v4543 = vpop.f32.mrb[0].mxu0
        %v4544 = vpop.f32.mrb[0].mxu0
        %v4545 = vadd.f32 %v4369, %v4544
        %v4546 = vpop.f32.mrb[0].mxu0
        %4547 = vmatprep.mubr.bf16.mxu0 0
        %4548 = vmatmul.mubr.bf16.gmra.mrb[0].mxu0 %v4344
        %v4549 = vpop.f32.mrb[0].mxu0
        %v4550 = vadd.f32 %v4369, %v4549
        %v4551 = vpop.f32.mrb[0].mxu0
        %v4552 = vpop.f32.mrb[0].mxu0
        %v4553 = vadd.f32 %v4369, %v4552
        %v4554 = vpop.f32.mrb[0].mxu0
        %4555 = vmatprep.mubr.bf16.mxu0 0
        %4556 = vmatmul.mubr.bf16.gmra.mrb[0].mxu0 %v4345
        %v4557 = vpop.f32.mrb[0].mxu0
        %v4558 = vadd.f32 %v4369, %v4557
        %v4559 = vpop.f32.mrb[0].mxu0
        %v4560 = vpop.f32.mrb[0].mxu0
        %v4561 = vadd.f32 %v4369, %v4560
        %v4562 = vpop.f32.mrb[0].mxu0
        %4563 = vmatprep.mubr.bf16.mxu0 0
        %4564 = vmatmul.mubr.bf16.gmra.mrb[0].mxu0 %v4346
        %v4565 = vpop.f32.mrb[0].mxu0
        %v4566 = vadd.f32 %v4369, %v4565
        %v4567 = vpop.f32.mrb[0].mxu0
        %v4568 = vpop.f32.mrb[0].mxu0
        %v4569 = vadd.f32 %v4369, %v4568
        %v4570 = vpop.f32.mrb[0].mxu0
        %4571 = vmatprep.mubr.bf16.mxu0 0
        %4572 = vmatmul.mubr.bf16.gmra.mrb[0].mxu0 %v4347
        %v4573 = vpop.f32.mrb[0].mxu0
        %v4574 = vadd.f32 %v4369, %v4573
        %v4575 = vpop.f32.mrb[0].mxu0
        %v4576 = vpop.f32.mrb[0].mxu0
        %v4577 = vadd.f32 %v4369, %v4576
        %v4578 = vpop.f32.mrb[0].mxu0
        %4579 = vdwg.mxu0
        %v4580 = vpack.c.bf16 %v4457, %v4454
        %v4581 = vpack.c.bf16 %v4465, %v4462
        %v4582 = vpack.c.bf16 %v4473, %v4470
        %v4583 = vpack.c.bf16 %v4481, %v4478
        %v4584 = vpack.c.bf16 %v4489, %v4486
        %v4585 = vpack.c.bf16 %v4497, %v4494
        %v4586 = vpack.c.bf16 %v4505, %v4502
        %v4587 = vpack.c.bf16 %v4513, %v4510
        %v4588 = vpack.c.bf16 %v4521, %v4518
        %v4589 = vpack.c.bf16 %v4529, %v4526
        %v4590 = vpack.c.bf16 %v4537, %v4534
        %v4591 = vpack.c.bf16 %v4545, %v4542
        %v4592 = vpack.c.bf16 %v4553, %v4550
        %v4593 = vpack.c.bf16 %v4561, %v4558
        %v4594 = vpack.c.bf16 %v4569, %v4566
        %v4595 = vpack.c.bf16 %v4577, %v4574
        %v4612 = vunpack.c.l.b16 %v4580
        %v4613 = vunpack.c.h.b16 %v4580
        %v4614 = vunpack.c.l.b16 %v4581
        %v4615 = vunpack.c.h.b16 %v4581
        %v4616 = vunpack.c.l.b16 %v4582
        %v4617 = vunpack.c.h.b16 %v4582
        %v4618 = vunpack.c.l.b16 %v4583
        %v4619 = vunpack.c.h.b16 %v4583
        %v4620 = vunpack.c.l.b16 %v4584
        %v4621 = vunpack.c.h.b16 %v4584
        %v4622 = vunpack.c.l.b16 %v4585
        %v4623 = vunpack.c.h.b16 %v4585
        %v4624 = vunpack.c.l.b16 %v4586
        %v4625 = vunpack.c.h.b16 %v4586
        %v4626 = vunpack.c.l.b16 %v4587
        %v4627 = vunpack.c.h.b16 %v4587
        %v4628 = vunpack.c.l.b16 %v4588
        %v4629 = vunpack.c.h.b16 %v4588
        %v4630 = vunpack.c.l.b16 %v4589
        %v4631 = vunpack.c.h.b16 %v4589
        %v4632 = vunpack.c.l.b16 %v4590
        %v4633 = vunpack.c.h.b16 %v4590
        %v4634 = vunpack.c.l.b16 %v4591
        %v4635 = vunpack.c.h.b16 %v4591
        %v4636 = vunpack.c.l.b16 %v4592
        %v4637 = vunpack.c.h.b16 %v4592
        %v4638 = vunpack.c.l.b16 %v4593
        %v4639 = vunpack.c.h.b16 %v4593
        %v4640 = vunpack.c.l.b16 %v4594
        %v4641 = vunpack.c.h.b16 %v4594
        %v4642 = vunpack.c.l.b16 %v4595
        %v4643 = vunpack.c.h.b16 %v4595
        %v4644 = vpack.c.b16 %v4612, %v4612
        %v4645 = vpack.c.b16 %v4613, %v4613
        %v4646 = vpack.c.b16 %v4614, %v4614
        %v4647 = vpack.c.b16 %v4615, %v4615
        %v4648 = vpack.c.b16 %v4616, %v4616
        %v4649 = vpack.c.b16 %v4617, %v4617
        %v4650 = vpack.c.b16 %v4618, %v4618
        %v4651 = vpack.c.b16 %v4619, %v4619
        %v4652 = vpack.c.b16 %v4620, %v4620
        %v4653 = vpack.c.b16 %v4621, %v4621
        %v4654 = vpack.c.b16 %v4622, %v4622
        %v4655 = vpack.c.b16 %v4623, %v4623
        %v4656 = vpack.c.b16 %v4624, %v4624
        %v4657 = vpack.c.b16 %v4625, %v4625
        %v4658 = vpack.c.b16 %v4626, %v4626
        %v4659 = vpack.c.b16 %v4627, %v4627
        %v4660 = vpack.c.b16 %v4628, %v4628
        %v4661 = vpack.c.b16 %v4629, %v4629
        %v4662 = vpack.c.b16 %v4630, %v4630
        %v4663 = vpack.c.b16 %v4631, %v4631
        %v4664 = vpack.c.b16 %v4632, %v4632
        %v4665 = vpack.c.b16 %v4633, %v4633
        %v4666 = vpack.c.b16 %v4634, %v4634
        %v4667 = vpack.c.b16 %v4635, %v4635
        %v4668 = vpack.c.b16 %v4636, %v4636
        %v4669 = vpack.c.b16 %v4637, %v4637
        %v4670 = vpack.c.b16 %v4638, %v4638
        %v4671 = vpack.c.b16 %v4639, %v4639
        %v4672 = vpack.c.b16 %v4640, %v4640
        %v4673 = vpack.c.b16 %v4641, %v4641
        %v4674 = vpack.c.b16 %v4642, %v4642
        %v4675 = vpack.c.b16 %v4643, %v4643
        %4708 = vst [vmem:[%s349] sm:$0xf] %v4644
        %4709 = vst [vmem:[%s349 + $0x4] sm:$0xf] %v4645
        %4710 = vst [vmem:[%s349 + $0x8] sm:$0xf] %v4646
        %4711 = vst [vmem:[%s349 + $0xc] sm:$0xf] %v4647
        %4712 = vst [vmem:[%s349 + $0x10] sm:$0xf] %v4648
        %4713 = vst [vmem:[%s349 + $0x14] sm:$0xf] %v4649
        %4714 = vst [vmem:[%s349 + $0x18] sm:$0xf] %v4650
        %4715 = vst [vmem:[%s349 + $0x1c] sm:$0xf] %v4651
        %4716 = vst [vmem:[%s349 + $0x20] sm:$0xf] %v4652
        %4717 = vst [vmem:[%s349 + $0x24] sm:$0xf] %v4653
        %4718 = vst [vmem:[%s349 + $0x28] sm:$0xf] %v4654
        %4719 = vst [vmem:[%s349 + $0x2c] sm:$0xf] %v4655
        %4720 = vst [vmem:[%s349 + $0x30] sm:$0xf] %v4656
        %4721 = vst [vmem:[%s349 + $0x34] sm:$0xf] %v4657
        %4722 = vst [vmem:[%s349 + $0x38] sm:$0xf] %v4658
        %4723 = vst [vmem:[%s349 + $0x3c] sm:$0xf] %v4659
        %4724 = vst [vmem:[%s349 + $0x40] sm:$0xf] %v4660
        %4725 = vst [vmem:[%s349 + $0x44] sm:$0xf] %v4661
        %4726 = vst [vmem:[%s349 + $0x48] sm:$0xf] %v4662
        %4727 = vst [vmem:[%s349 + $0x4c] sm:$0xf] %v4663
        %4728 = vst [vmem:[%s349 + $0x50] sm:$0xf] %v4664
        %4729 = vst [vmem:[%s349 + $0x54] sm:$0xf] %v4665
        %4730 = vst [vmem:[%s349 + $0x58] sm:$0xf] %v4666
        %4731 = vst [vmem:[%s349 + $0x5c] sm:$0xf] %v4667
        %4732 = vst [vmem:[%s349 + $0x60] sm:$0xf] %v4668
        %4733 = vst [vmem:[%s349 + $0x64] sm:$0xf] %v4669
        %4734 = vst [vmem:[%s349 + $0x68] sm:$0xf] %v4670
        %4735 = vst [vmem:[%s349 + $0x6c] sm:$0xf] %v4671
        %4736 = vst [vmem:[%s349 + $0x70] sm:$0xf] %v4672
        %4737 = vst [vmem:[%s349 + $0x74] sm:$0xf] %v4673
        %4738 = vst [vmem:[%s349 + $0x78] sm:$0xf] %v4674
        %4739 = vst [vmem:[%s349 + $0x7c] sm:$0xf] %v4675
        %s4740 = smul.u32 32, %s21
        %p4741 = scmp.lt.s32.totalorder %s4740, 63
        %s4742 = scalar_select %p4741, %s4740, 63
        %s4743 = smul.addr %s4742, 4
        %s4744 = scalar_lea.vmem %s9, %s4743
        // Predicated region
        $region61: #{net_forward.1} parent=55 // pred_check
          %p4745 = pneg %p233
        $region62: #{net_forward.1} parent=55 // pred_check_branch
          %4747 = sbr.rel (%p4745) target = $region64
        $region63: #{net_forward.1} parent=55 // pred_region
          %s4748 = smul.u32 32, %s21
        $region64: #{net_forward.1} parent=55 // pred_fallthru
          _
      $region56: #{net_forward.1} parent=5 // pred_fallthru
        _
      %p4749 = scmp.le.s32.totalorder 2, %s16
      // Predicated region
      $region65: #{net_forward.1} parent=5 // pred_check
        %p4750 = pneg %p4749
      $region66: #{net_forward.1} parent=5 // pred_check_branch
        %4752 = sbr.rel (%p4750) target = $region68
      $region67: #{net_forward.1} parent=5 // pred_region
        %s4753 = ssub.s32 %s16, 2
        // Predicated region
        $region69: #{net_forward.1} parent=67 // pred_check
          %p4754 = pneg %p239
        $region70: #{net_forward.1} parent=67 // pred_check_branch
          %4756 = sbr.rel (%p4754) target = $region72
        $region71: #{net_forward.1} parent=67 // pred_region
          %s4757 = smul.u32 32, %s22
          %p4758 = scmp.lt.s32.totalorder %s4757, 63
          %s4759 = scalar_select %p4758, %s4757, 63
          %s4760 = smul.addr %s4759, 4
          %s4761 = scalar_lea.vmem %s9, %s4760
        $region72: #{net_forward.1} parent=67 // pred_fallthru
          _
      $region68: #{net_forward.1} parent=5 // pred_fallthru
        _
    $region6: #{net_forward.1} parent=1 // loop_footer
      %s20 = sadd.s32 1, %s16
    $region7: #{net_forward.1} parent=1 // loop_footer_branch
      %15 = sbr.rel target = $region3
    $region8: #{net_forward.1} parent=1 // loop_exit
      _
    %4762 = vsyncpa [#allocation3], 1
    %s4763 = scalar_lea.sflag [#allocation3], 1
    %4764 = vsyncpa %s4763, 1

</llo_original>
